<compile_context>
chip_gen: v6e
topology: v6e:2x2x1
jax: 0.10.0
libtpu: 0.0.40
codegen_flags: <defaults>
</compile_context>

<pallas_src>
import functools

import jax
import jax.numpy as jnp
from jax.experimental import pallas as pl
from jax.experimental.pallas import tpu as pltpu


def se_basic_block_kernel(x_ref, masks_ref, w1_ref, w2_ref, wsc_ref, vec_ref,
                          fc1w_ref, fc2w_ref, pool_ref, sel_ref, o_ref, *, W):
    BLp = x_ref.shape[-1]                          # nb * Lp (lane axis: batch-folded spatial)
    nb = sel_ref.shape[0]
    cr = fc1w_ref.shape[0]

    x = x_ref[0]                                   # (Cin_pad, nb*Lp) f32
    xb = x.astype(jnp.bfloat16)
    masks = masks_ref[...]                         # (8, nb*Lp) f32 border masks (non-center taps)
    selv = sel_ref[...]                            # (nb, nb*Lp) f32 sample-ownership indicator

    # packed per-channel columns: [s1, t1, s2, t2, ssc, tsc, fc2b, fc1b]
    s1, t1 = vec_ref[:, 0:1], vec_ref[:, 1:2]
    s2, t2 = vec_ref[:, 2:3], vec_ref[:, 3:4]
    ssc, tsc = vec_ref[:, 4:5], vec_ref[:, 5:6]
    fc2b = vec_ref[:, 6:7]
    fc1b = vec_ref[0:cr, 7:8]

    taps = [(sh, sw) for sh in (-1, 0, 1) for sw in (-1, 0, 1)]

    def conv3x3(v32, vb, w_ref):
        """3x3 'same' conv as 9 accumulated MXU dots over roll+masked taps.
        v32/vb: (cin, nb*Lp) f32 / bf16.  w_ref: (9, C, cin) bf16.  Returns (C, nb*Lp) f32."""
        acc = None
        mrow = 0
        for t, (sh, sw) in enumerate(taps):
            if sh == 0 and sw == 0:
                tap = vb
            else:
                off = sh * W + sw
                rolled = pltpu.roll(v32, shift=(-off) % BLp, axis=1)
                tap = (rolled * masks[mrow:mrow + 1, :]).astype(jnp.bfloat16)
                mrow += 1
            part = jnp.dot(w_ref[t], tap, preferred_element_type=jnp.float32)
            acc = part if acc is None else acc + part
        return acc

    # ---- conv1 (3x3, pad 1) -> folded bias+BN -> ReLU ----
    out1 = jnp.maximum(conv3x3(x, xb, w1_ref) * s1 + t1, 0.0)

    # ---- conv2 (3x3, pad 1) -> folded bias+BN ----
    out2 = conv3x3(out1, out1.astype(jnp.bfloat16), w2_ref) * s2 + t2

    # ---- SE: per-sample spatial mean (one MXU dot) -> FC -> SiLU -> FC -> sigmoid -> gate ----
    y = jnp.dot(out2, pool_ref[...], preferred_element_type=jnp.float32)      # (C, nb)
    h = jnp.dot(fc1w_ref[...], y, preferred_element_type=jnp.float32) + fc1b  # (Cr, nb)
    h = h * jax.nn.sigmoid(h)                                                 # SiLU
    g = jax.nn.sigmoid(jnp.dot(fc2w_ref[...], h,
                               preferred_element_type=jnp.float32) + fc2b)    # (C, nb)
    gate = g[:, 0:1] * selv[0:1, :]                # broadcast each sample's gate onto its lanes
    for b in range(1, nb):
        gate = gate + g[:, b:b + 1] * selv[b:b + 1, :]
    out2 = out2 * gate

    # ---- shortcut: 1x1 conv + folded bias+BN ----
    sc = jnp.dot(wsc_ref[...], xb, preferred_element_type=jnp.float32) * ssc + tsc

    o_ref[...] = jnp.maximum(out2 + sc, 0.0)[None].astype(o_ref.dtype)


def se_basic_block(x, p):
    """x: (N, H, W, Cin) float32 -> (N, H, W, C) float32 (eval-mode BN folded)."""
    N, H, W, Cin = x.shape
    C = p["w2"].shape[-1]
    Cr = p["fc1w"].shape[-1]
    L = H * W
    Lp = ((L + 127) // 128) * 128                  # lane-pad spatial extent (dense vst)
    cin_pad = ((Cin + 7) // 8) * 8                 # sublane-align input channels

    # fold `nb` samples onto the lane axis per grid step; cap the slab width, require nb | N.
    nb = max(1, min(N, 2048 // Lp))
    while N % nb:
        nb -= 1
    G = N // nb
    BLp = nb * Lp

    # ---- weights: bf16 MXU operands, per-tap layout (9, C, cin) ----
    w1 = jnp.pad(p["w1"], ((0, 0), (0, 0), (0, cin_pad - Cin), (0, 0)))
    w1_t = w1.reshape(9, cin_pad, C).transpose(0, 2, 1).astype(jnp.bfloat16)   # (9, C, Cin_pad)
    w2_t = p["w2"].reshape(9, C, C).transpose(0, 2, 1).astype(jnp.bfloat16)    # (9, C, C)
    wsc_t = jnp.pad(p["wsc"], ((0, cin_pad - Cin), (0, 0))).T.astype(jnp.bfloat16)

    # ---- packed per-channel columns (conv bias folded into the BN shift) ----
    def colvec(v, n):
        return v.reshape(n, 1).astype(jnp.float32)
    vec = jnp.concatenate([
        colvec(p["s1"], C), colvec(p["b1"] * p["s1"] + p["t1"], C),
        colvec(p["s2"], C), colvec(p["b2"] * p["s2"] + p["t2"], C),
        colvec(p["ssc"], C), colvec(p["bsc"] * p["ssc"] + p["tsc"], C),
        colvec(p["fc2b"], C),
        jnp.pad(colvec(p["fc1b"], Cr), ((0, C - Cr), (0, 0))),
    ], axis=1)                                                                 # (C, 8)
    fc1w_t = p["fc1w"].T.astype(jnp.float32)                                   # (Cr, C)
    fc2w_t = p["fc2w"].T.astype(jnp.float32)                                   # (C, Cr)

    # ---- precomputed border masks / pooling / gate-broadcast matrices ----
    pix = jnp.arange(BLp)
    within = pix % Lp
    valid = within < L
    hh, ww = within // W, within % W
    rows = []
    for sh in (-1, 0, 1):
        for sw in (-1, 0, 1):
            if sh == 0 and sw == 0:
                continue
            m = valid
            if sh < 0:
                m = m & (hh >= -sh)
            if sh > 0:
                m = m & (hh < H - sh)
            if sw < 0:
                m = m & (ww >= -sw)
            if sw > 0:
                m = m & (ww < W - sw)
            rows.append(m)
    masks = jnp.stack(rows, 0).astype(jnp.float32)                             # (8, BLp)
    owner = pix // Lp
    sel = (owner[None, :] == jnp.arange(nb)[:, None]).astype(jnp.float32)      # (nb, BLp)
    pool = (sel * valid[None, :].astype(jnp.float32)).T / float(L)             # (BLp, nb)

    # ---- activations: lane-dense (Cin, nb*Lp) slabs, spatial(+batch) on the lane axis ----
    x_t = x.transpose(0, 3, 1, 2).reshape(N, Cin, L)
    x_t = jnp.pad(x_t, ((0, 0), (0, cin_pad - Cin), (0, Lp - L)))
    x_t = x_t.reshape(G, nb, cin_pad, Lp).transpose(0, 2, 1, 3).reshape(G, cin_pad, BLp)

    params = [masks, w1_t, w2_t, wsc_t, vec, fc1w_t, fc2w_t, pool, sel]

    def full_spec(a):
        nd = a.ndim
        return pl.BlockSpec(a.shape, lambda g, _nd=nd: (0,) * _nd)

    grid_spec = pltpu.PrefetchScalarGridSpec(
        num_scalar_prefetch=0,
        grid=(G,),
        in_specs=[pl.BlockSpec((1, cin_pad, BLp), lambda g: (g, 0, 0))]
                 + [full_spec(a) for a in params],
        out_specs=pl.BlockSpec((1, C, BLp), lambda g: (g, 0, 0)),
    )

    # explicit VMEM budget (48 MiB cap keeps v7x's 64 MiB physical VMEM safe) + cost hint.
    weight_bytes = sum(int(a.size) * a.dtype.itemsize for a in params)
    step_bytes = cin_pad * BLp * 4 + C * BLp * 4 + 10 * C * BLp * 4
    vmem_limit = int(min(48 * 2**20, max(32 * 2**20, 4 * (weight_bytes + step_bytes))))
    conv_flops = 2 * BLp * C * (9 * cin_pad + 9 * C + cin_pad)
    se_flops = 2 * nb * (C * BLp + Cr * C + C * Cr + C * BLp)
    cost = pl.CostEstimate(
        flops=int(G * (conv_flops + se_flops)),
        transcendentals=int(G * nb * (Cr + 2 * C)),
        bytes_accessed=int(x_t.size * 4 + G * C * BLp * 4 + weight_bytes),
    )

    out_t = pl.pallas_call(
        functools.partial(se_basic_block_kernel, W=W),
        out_shape=jax.ShapeDtypeStruct((G, C, BLp), jnp.float32),
        grid_spec=grid_spec,
        compiler_params=pltpu.CompilerParams(
            dimension_semantics=("parallel",),
            vmem_limit_bytes=vmem_limit),
        cost_estimate=cost,
    )(x_t, *params)

    # back to NHWC for the caller (pure XLA layout plumbing)
    out_t = out_t.reshape(G, C, nb, Lp).transpose(0, 2, 1, 3).reshape(N, C, Lp)[:, :, :L]
    return out_t.reshape(N, C, H, W).transpose(0, 2, 3, 1)


def init_params(key, cin, c, reduction_ratio=4):
    eps = 1e-5
    cr = c // reduction_ratio
    ks = list(jax.random.split(key, 22))
    nk = iter(ks)

    def nrm(shape, scale=0.1):
        return scale * jax.random.normal(next(nk), shape, jnp.float32)

    def bn(ch):
        gamma = 1.0 + 0.1 * jax.random.normal(next(nk), (1, ch), jnp.float32)
        beta = 0.1 * jax.random.normal(next(nk), (1, ch), jnp.float32)
        mean = 0.1 * jax.random.normal(next(nk), (1, ch), jnp.float32)
        var = 0.5 + jax.random.uniform(next(nk), (1, ch), jnp.float32)
        scale = gamma / jnp.sqrt(var + eps)
        shift = beta - mean * scale
        return scale, shift

    p = {}
    p["w1"] = nrm((3, 3, cin, c))          # conv1, HWIO
    p["b1"] = nrm((1, c))
    p["s1"], p["t1"] = bn(c)               # bn1 folded (eval mode)
    p["w2"] = nrm((3, 3, c, c))            # conv2, HWIO
    p["b2"] = nrm((1, c))
    p["s2"], p["t2"] = bn(c)               # bn2 folded
    p["fc1w"] = nrm((c, cr))               # Linear(dim, dim//r), stored as (in, out)
    p["fc1b"] = nrm((1, cr))
    p["fc2w"] = nrm((cr, c))               # Linear(dim//r, dim), stored as (in, out)
    p["fc2b"] = nrm((1, c))
    p["wsc"] = nrm((cin, c))               # shortcut 1x1 conv
    p["bsc"] = nrm((1, c))
    p["ssc"], p["tsc"] = bn(c)             # shortcut bn folded
    return p


def ref_forward(x, p):
    """Pure-JAX f32 reference of the same forward pass (NHWC)."""
    def conv(v, w, b, pad):
        return jax.lax.conv_general_dilated(
            v, w, window_strides=(1, 1), padding=pad,
            dimension_numbers=("NHWC", "HWIO", "NHWC")) + b

    out = conv(x, p["w1"], p["b1"], "SAME")
    out = out * p["s1"] + p["t1"]
    out = jnp.maximum(out, 0.0)
    out = conv(out, p["w2"], p["b2"], "SAME")
    out = out * p["s2"] + p["t2"]
    y = out.mean(axis=(1, 2))                              # (N, C)
    h = y @ p["fc1w"] + p["fc1b"]
    h = h * jax.nn.sigmoid(h)
    g = jax.nn.sigmoid(h @ p["fc2w"] + p["fc2b"])
    out = out * g[:, None, None, :]
    cin, c = p["wsc"].shape
    sc = conv(x, p["wsc"].reshape(1, 1, cin, c), p["bsc"], "VALID")
    sc = sc * p["ssc"] + p["tsc"]
    return jnp.maximum(out + sc, 0.0)


if __name__ == "__main__":
    N, H, W = 2, 16, 16
    CIN, C = 4, 8                          # input_channels != num_channels -> conv shortcut path
    key = jax.random.PRNGKey(0)
    kx, kp = jax.random.split(key)
    x = jax.random.normal(kx, (N, H, W, CIN), jnp.float32)
    params = init_params(kp, CIN, C, reduction_ratio=4)

    out = jax.block_until_ready(se_basic_block(x, params))
    ref = ref_forward(x, params)

    assert out.shape == (N, H, W, C)
    err = float(jnp.max(jnp.abs(out - ref)))
    scale = float(jnp.max(jnp.abs(ref)))
    # bf16 MXU operands vs f32 XLA reference -> allow bf16-level tolerance.
    assert err <= 0.05 + 0.02 * scale, f"max abs err {err} (ref scale {scale})"
    print("KERNEL_OK")
</pallas_src>

<mosaic_0001>
module attributes {stable_mosaic.version = 11 : i64} {
  func.func @se_basic_block_kernel(%arg0: i32, %arg1: memref<1x8x512xf32, #tpu.memory_space<vmem>>, %arg2: memref<8x512xf32, #tpu.memory_space<vmem>>, %arg3: memref<9x8x8xbf16, #tpu.memory_space<vmem>>, %arg4: memref<9x8x8xbf16, #tpu.memory_space<vmem>>, %arg5: memref<8x8xbf16, #tpu.memory_space<vmem>>, %arg6: memref<8x8xf32, #tpu.memory_space<vmem>>, %arg7: memref<2x8xf32, #tpu.memory_space<vmem>>, %arg8: memref<8x2xf32, #tpu.memory_space<vmem>>, %arg9: memref<512x2xf32, #tpu.memory_space<vmem>>, %arg10: memref<2x512xf32, #tpu.memory_space<vmem>>, %arg11: memref<1x8x512xf32, #tpu.memory_space<vmem>>) attributes {dimension_semantics = [#tpu.dimension_semantics<parallel>], iteration_bounds = array<i64: 1>, scalar_prefetch = 0 : i64, scratch_operands = 0 : i64, tpu.core_type = #tpu.core_type<tc>, window_params = [{transform_indices = @transform_0, window_bounds = array<i64: 1, 8, 512>}, {pipeline_mode = #tpu.pipeline_mode<synchronous>, transform_indices = @transform_1, window_bounds = array<i64: 8, 512>}, {pipeline_mode = #tpu.pipeline_mode<synchronous>, transform_indices = @transform_2, window_bounds = array<i64: 9, 8, 8>}, {pipeline_mode = #tpu.pipeline_mode<synchronous>, transform_indices = @transform_3, window_bounds = array<i64: 9, 8, 8>}, {pipeline_mode = #tpu.pipeline_mode<synchronous>, transform_indices = @transform_4, window_bounds = array<i64: 8, 8>}, {pipeline_mode = #tpu.pipeline_mode<synchronous>, transform_indices = @transform_5, window_bounds = array<i64: 8, 8>}, {pipeline_mode = #tpu.pipeline_mode<synchronous>, transform_indices = @transform_6, window_bounds = array<i64: 2, 8>}, {pipeline_mode = #tpu.pipeline_mode<synchronous>, transform_indices = @transform_7, window_bounds = array<i64: 8, 2>}, {pipeline_mode = #tpu.pipeline_mode<synchronous>, transform_indices = @transform_8, window_bounds = array<i64: 512, 2>}, {pipeline_mode = #tpu.pipeline_mode<synchronous>, transform_indices = @transform_9, window_bounds = array<i64: 2, 512>}, {transform_indices = @transform_10, window_bounds = array<i64: 1, 8, 512>}]} {
    %c0 = arith.constant 0 : index
    %c0_0 = arith.constant 0 : index
    %c0_1 = arith.constant 0 : index
    %0 = vector.load %arg1[%c0, %c0_0, %c0_1] : memref<1x8x512xf32, #tpu.memory_space<vmem>>, vector<1x8x512xf32>
    %1 = vector.shape_cast %0 : vector<1x8x512xf32> to vector<8x512xf32>
    %2 = arith.truncf %1 : vector<8x512xf32> to vector<8x512xbf16>
    %c0_2 = arith.constant 0 : index
    %c0_3 = arith.constant 0 : index
    %3 = vector.load %arg2[%c0_2, %c0_3] : memref<8x512xf32, #tpu.memory_space<vmem>>, vector<8x512xf32>
    %c0_4 = arith.constant 0 : index
    %c0_5 = arith.constant 0 : index
    %4 = vector.load %arg10[%c0_4, %c0_5] : memref<2x512xf32, #tpu.memory_space<vmem>>, vector<2x512xf32>
    %c0_6 = arith.constant 0 : index
    %c0_7 = arith.constant 0 : index
    %5 = vector.load %arg6[%c0_6, %c0_7] : memref<8x8xf32, #tpu.memory_space<vmem>>, vector<8x1xf32>
    %c0_8 = arith.constant 0 : index
    %c1 = arith.constant 1 : index
    %6 = vector.load %arg6[%c0_8, %c1] : memref<8x8xf32, #tpu.memory_space<vmem>>, vector<8x1xf32>
    %c0_9 = arith.constant 0 : index
    %c2 = arith.constant 2 : index
    %7 = vector.load %arg6[%c0_9, %c2] : memref<8x8xf32, #tpu.memory_space<vmem>>, vector<8x1xf32>
    %c0_10 = arith.constant 0 : index
    %c3 = arith.constant 3 : index
    %8 = vector.load %arg6[%c0_10, %c3] : memref<8x8xf32, #tpu.memory_space<vmem>>, vector<8x1xf32>
    %c0_11 = arith.constant 0 : index
    %c4 = arith.constant 4 : index
    %9 = vector.load %arg6[%c0_11, %c4] : memref<8x8xf32, #tpu.memory_space<vmem>>, vector<8x1xf32>
    %c0_12 = arith.constant 0 : index
    %c5 = arith.constant 5 : index
    %10 = vector.load %arg6[%c0_12, %c5] : memref<8x8xf32, #tpu.memory_space<vmem>>, vector<8x1xf32>
    %c0_13 = arith.constant 0 : index
    %c6 = arith.constant 6 : index
    %11 = vector.load %arg6[%c0_13, %c6] : memref<8x8xf32, #tpu.memory_space<vmem>>, vector<8x1xf32>
    %c0_14 = arith.constant 0 : index
    %c7 = arith.constant 7 : index
    %12 = vector.load %arg6[%c0_14, %c7] : memref<8x8xf32, #tpu.memory_space<vmem>>, vector<2x1xf32>
    %c17_i32 = arith.constant 17 : i32
    %13 = tpu.dynamic_rotate %1 by %c17_i32 dim 1 : vector<8x512xf32>, i32 -> vector<8x512xf32>
    %14 = vector.extract_strided_slice %3 {offsets = [0, 0], sizes = [1, 512], strides = [1, 1]} : vector<8x512xf32> to vector<1x512xf32>
    %15 = vector.broadcast %14 : vector<1x512xf32> to vector<8x512xf32>
    %16 = arith.mulf %13, %15 : vector<8x512xf32>
    %17 = arith.truncf %16 : vector<8x512xf32> to vector<8x512xbf16>
    %c0_15 = arith.constant 0 : index
    %c0_16 = arith.constant 0 : index
    %c0_17 = arith.constant 0 : index
    %18 = vector.load %arg3[%c0_15, %c0_16, %c0_17] : memref<9x8x8xbf16, #tpu.memory_space<vmem>>, vector<1x8x8xbf16>
    %19 = vector.shape_cast %18 : vector<1x8x8xbf16> to vector<8x8xbf16>
    %cst = arith.constant dense<0.000000e+00> : vector<8x512xf32>
    %20 = tpu.matmul %19, %17, %cst {dimension_numbers = #tpu.dot_dimension_numbers<[1], [0], [0], [1], [0, 0, 1, 1], [], []>} : vector<8x8xbf16>, vector<8x512xbf16>, vector<8x512xf32> -> vector<8x512xf32>
    %c16_i32 = arith.constant 16 : i32
    %21 = tpu.dynamic_rotate %1 by %c16_i32 dim 1 : vector<8x512xf32>, i32 -> vector<8x512xf32>
    %22 = vector.extract_strided_slice %3 {offsets = [1, 0], sizes = [1, 512], strides = [1, 1]} : vector<8x512xf32> to vector<1x512xf32>
    %23 = vector.broadcast %22 : vector<1x512xf32> to vector<8x512xf32>
    %24 = arith.mulf %21, %23 : vector<8x512xf32>
    %25 = arith.truncf %24 : vector<8x512xf32> to vector<8x512xbf16>
    %c1_18 = arith.constant 1 : index
    %c0_19 = arith.constant 0 : index
    %c0_20 = arith.constant 0 : index
    %26 = vector.load %arg3[%c1_18, %c0_19, %c0_20] : memref<9x8x8xbf16, #tpu.memory_space<vmem>>, vector<1x8x8xbf16>
    %27 = vector.shape_cast %26 : vector<1x8x8xbf16> to vector<8x8xbf16>
    %cst_21 = arith.constant dense<0.000000e+00> : vector<8x512xf32>
    %28 = tpu.matmul %27, %25, %cst_21 {dimension_numbers = #tpu.dot_dimension_numbers<[1], [0], [0], [1], [0, 0, 1, 1], [], []>} : vector<8x8xbf16>, vector<8x512xbf16>, vector<8x512xf32> -> vector<8x512xf32>
    %29 = arith.addf %20, %28 : vector<8x512xf32>
    %c15_i32 = arith.constant 15 : i32
    %30 = tpu.dynamic_rotate %1 by %c15_i32 dim 1 : vector<8x512xf32>, i32 -> vector<8x512xf32>
    %31 = vector.extract_strided_slice %3 {offsets = [2, 0], sizes = [1, 512], strides = [1, 1]} : vector<8x512xf32> to vector<1x512xf32>
    %32 = vector.broadcast %31 : vector<1x512xf32> to vector<8x512xf32>
    %33 = arith.mulf %30, %32 : vector<8x512xf32>
    %34 = arith.truncf %33 : vector<8x512xf32> to vector<8x512xbf16>
    %c2_22 = arith.constant 2 : index
    %c0_23 = arith.constant 0 : index
    %c0_24 = arith.constant 0 : index
    %35 = vector.load %arg3[%c2_22, %c0_23, %c0_24] : memref<9x8x8xbf16, #tpu.memory_space<vmem>>, vector<1x8x8xbf16>
    %36 = vector.shape_cast %35 : vector<1x8x8xbf16> to vector<8x8xbf16>
    %cst_25 = arith.constant dense<0.000000e+00> : vector<8x512xf32>
    %37 = tpu.matmul %36, %34, %cst_25 {dimension_numbers = #tpu.dot_dimension_numbers<[1], [0], [0], [1], [0, 0, 1, 1], [], []>} : vector<8x8xbf16>, vector<8x512xbf16>, vector<8x512xf32> -> vector<8x512xf32>
    %38 = arith.addf %29, %37 : vector<8x512xf32>
    %c1_i32 = arith.constant 1 : i32
    %39 = tpu.dynamic_rotate %1 by %c1_i32 dim 1 : vector<8x512xf32>, i32 -> vector<8x512xf32>
    %40 = vector.extract_strided_slice %3 {offsets = [3, 0], sizes = [1, 512], strides = [1, 1]} : vector<8x512xf32> to vector<1x512xf32>
    %41 = vector.broadcast %40 : vector<1x512xf32> to vector<8x512xf32>
    %42 = arith.mulf %39, %41 : vector<8x512xf32>
    %43 = arith.truncf %42 : vector<8x512xf32> to vector<8x512xbf16>
    %c3_26 = arith.constant 3 : index
    %c0_27 = arith.constant 0 : index
    %c0_28 = arith.constant 0 : index
    %44 = vector.load %arg3[%c3_26, %c0_27, %c0_28] : memref<9x8x8xbf16, #tpu.memory_space<vmem>>, vector<1x8x8xbf16>
    %45 = vector.shape_cast %44 : vector<1x8x8xbf16> to vector<8x8xbf16>
    %cst_29 = arith.constant dense<0.000000e+00> : vector<8x512xf32>
    %46 = tpu.matmul %45, %43, %cst_29 {dimension_numbers = #tpu.dot_dimension_numbers<[1], [0], [0], [1], [0, 0, 1, 1], [], []>} : vector<8x8xbf16>, vector<8x512xbf16>, vector<8x512xf32> -> vector<8x512xf32>
    %47 = arith.addf %38, %46 : vector<8x512xf32>
    %c4_30 = arith.constant 4 : index
    %c0_31 = arith.constant 0 : index
    %c0_32 = arith.constant 0 : index
    %48 = vector.load %arg3[%c4_30, %c0_31, %c0_32] : memref<9x8x8xbf16, #tpu.memory_space<vmem>>, vector<1x8x8xbf16>
    %49 = vector.shape_cast %48 : vector<1x8x8xbf16> to vector<8x8xbf16>
    %cst_33 = arith.constant dense<0.000000e+00> : vector<8x512xf32>
    %50 = tpu.matmul %49, %2, %cst_33 {dimension_numbers = #tpu.dot_dimension_numbers<[1], [0], [0], [1], [0, 0, 1, 1], [], []>} : vector<8x8xbf16>, vector<8x512xbf16>, vector<8x512xf32> -> vector<8x512xf32>
    %51 = arith.addf %47, %50 : vector<8x512xf32>
    %c511_i32 = arith.constant 511 : i32
    %52 = tpu.dynamic_rotate %1 by %c511_i32 dim 1 : vector<8x512xf32>, i32 -> vector<8x512xf32>
    %53 = vector.extract_strided_slice %3 {offsets = [4, 0], sizes = [1, 512], strides = [1, 1]} : vector<8x512xf32> to vector<1x512xf32>
    %54 = vector.broadcast %53 : vector<1x512xf32> to vector<8x512xf32>
    %55 = arith.mulf %52, %54 : vector<8x512xf32>
    %56 = arith.truncf %55 : vector<8x512xf32> to vector<8x512xbf16>
    %c5_34 = arith.constant 5 : index
    %c0_35 = arith.constant 0 : index
    %c0_36 = arith.constant 0 : index
    %57 = vector.load %arg3[%c5_34, %c0_35, %c0_36] : memref<9x8x8xbf16, #tpu.memory_space<vmem>>, vector<1x8x8xbf16>
    %58 = vector.shape_cast %57 : vector<1x8x8xbf16> to vector<8x8xbf16>
    %cst_37 = arith.constant dense<0.000000e+00> : vector<8x512xf32>
    %59 = tpu.matmul %58, %56, %cst_37 {dimension_numbers = #tpu.dot_dimension_numbers<[1], [0], [0], [1], [0, 0, 1, 1], [], []>} : vector<8x8xbf16>, vector<8x512xbf16>, vector<8x512xf32> -> vector<8x512xf32>
    %60 = arith.addf %51, %59 : vector<8x512xf32>
    %c497_i32 = arith.constant 497 : i32
    %61 = tpu.dynamic_rotate %1 by %c497_i32 dim 1 : vector<8x512xf32>, i32 -> vector<8x512xf32>
    %62 = vector.extract_strided_slice %3 {offsets = [5, 0], sizes = [1, 512], strides = [1, 1]} : vector<8x512xf32> to vector<1x512xf32>
    %63 = vector.broadcast %62 : vector<1x512xf32> to vector<8x512xf32>
    %64 = arith.mulf %61, %63 : vector<8x512xf32>
    %65 = arith.truncf %64 : vector<8x512xf32> to vector<8x512xbf16>
    %c6_38 = arith.constant 6 : index
    %c0_39 = arith.constant 0 : index
    %c0_40 = arith.constant 0 : index
    %66 = vector.load %arg3[%c6_38, %c0_39, %c0_40] : memref<9x8x8xbf16, #tpu.memory_space<vmem>>, vector<1x8x8xbf16>
    %67 = vector.shape_cast %66 : vector<1x8x8xbf16> to vector<8x8xbf16>
    %cst_41 = arith.constant dense<0.000000e+00> : vector<8x512xf32>
    %68 = tpu.matmul %67, %65, %cst_41 {dimension_numbers = #tpu.dot_dimension_numbers<[1], [0], [0], [1], [0, 0, 1, 1], [], []>} : vector<8x8xbf16>, vector<8x512xbf16>, vector<8x512xf32> -> vector<8x512xf32>
    %69 = arith.addf %60, %68 : vector<8x512xf32>
    %c496_i32 = arith.constant 496 : i32
    %70 = tpu.dynamic_rotate %1 by %c496_i32 dim 1 : vector<8x512xf32>, i32 -> vector<8x512xf32>
    %71 = vector.extract_strided_slice %3 {offsets = [6, 0], sizes = [1, 512], strides = [1, 1]} : vector<8x512xf32> to vector<1x512xf32>
    %72 = vector.broadcast %71 : vector<1x512xf32> to vector<8x512xf32>
    %73 = arith.mulf %70, %72 : vector<8x512xf32>
    %74 = arith.truncf %73 : vector<8x512xf32> to vector<8x512xbf16>
    %c7_42 = arith.constant 7 : index
    %c0_43 = arith.constant 0 : index
    %c0_44 = arith.constant 0 : index
    %75 = vector.load %arg3[%c7_42, %c0_43, %c0_44] : memref<9x8x8xbf16, #tpu.memory_space<vmem>>, vector<1x8x8xbf16>
    %76 = vector.shape_cast %75 : vector<1x8x8xbf16> to vector<8x8xbf16>
    %cst_45 = arith.constant dense<0.000000e+00> : vector<8x512xf32>
    %77 = tpu.matmul %76, %74, %cst_45 {dimension_numbers = #tpu.dot_dimension_numbers<[1], [0], [0], [1], [0, 0, 1, 1], [], []>} : vector<8x8xbf16>, vector<8x512xbf16>, vector<8x512xf32> -> vector<8x512xf32>
    %78 = arith.addf %69, %77 : vector<8x512xf32>
    %c495_i32 = arith.constant 495 : i32
    %79 = tpu.dynamic_rotate %1 by %c495_i32 dim 1 : vector<8x512xf32>, i32 -> vector<8x512xf32>
    %80 = vector.extract_strided_slice %3 {offsets = [7, 0], sizes = [1, 512], strides = [1, 1]} : vector<8x512xf32> to vector<1x512xf32>
    %81 = vector.broadcast %80 : vector<1x512xf32> to vector<8x512xf32>
    %82 = arith.mulf %79, %81 : vector<8x512xf32>
    %83 = arith.truncf %82 : vector<8x512xf32> to vector<8x512xbf16>
    %c8 = arith.constant 8 : index
    %c0_46 = arith.constant 0 : index
    %c0_47 = arith.constant 0 : index
    %84 = vector.load %arg3[%c8, %c0_46, %c0_47] : memref<9x8x8xbf16, #tpu.memory_space<vmem>>, vector<1x8x8xbf16>
    %85 = vector.shape_cast %84 : vector<1x8x8xbf16> to vector<8x8xbf16>
    %cst_48 = arith.constant dense<0.000000e+00> : vector<8x512xf32>
    %86 = tpu.matmul %85, %83, %cst_48 {dimension_numbers = #tpu.dot_dimension_numbers<[1], [0], [0], [1], [0, 0, 1, 1], [], []>} : vector<8x8xbf16>, vector<8x512xbf16>, vector<8x512xf32> -> vector<8x512xf32>
    %87 = arith.addf %78, %86 : vector<8x512xf32>
    %88 = vector.broadcast %5 : vector<8x1xf32> to vector<8x512xf32>
    %89 = arith.mulf %87, %88 : vector<8x512xf32>
    %90 = vector.broadcast %6 : vector<8x1xf32> to vector<8x512xf32>
    %91 = arith.addf %89, %90 : vector<8x512xf32>
    %cst_49 = arith.constant 0.000000e+00 : f32
    %92 = vector.broadcast %cst_49 : f32 to vector<8x512xf32>
    %93 = arith.maximumf %91, %92 : vector<8x512xf32>
    %94 = arith.truncf %93 : vector<8x512xf32> to vector<8x512xbf16>
    %c17_i32_50 = arith.constant 17 : i32
    %95 = tpu.dynamic_rotate %93 by %c17_i32_50 dim 1 : vector<8x512xf32>, i32 -> vector<8x512xf32>
    %96 = vector.extract_strided_slice %3 {offsets = [0, 0], sizes = [1, 512], strides = [1, 1]} : vector<8x512xf32> to vector<1x512xf32>
    %97 = vector.broadcast %96 : vector<1x512xf32> to vector<8x512xf32>
    %98 = arith.mulf %95, %97 : vector<8x512xf32>
    %99 = arith.truncf %98 : vector<8x512xf32> to vector<8x512xbf16>
    %c0_51 = arith.constant 0 : index
    %c0_52 = arith.constant 0 : index
    %c0_53 = arith.constant 0 : index
    %100 = vector.load %arg4[%c0_51, %c0_52, %c0_53] : memref<9x8x8xbf16, #tpu.memory_space<vmem>>, vector<1x8x8xbf16>
    %101 = vector.shape_cast %100 : vector<1x8x8xbf16> to vector<8x8xbf16>
    %cst_54 = arith.constant dense<0.000000e+00> : vector<8x512xf32>
    %102 = tpu.matmul %101, %99, %cst_54 {dimension_numbers = #tpu.dot_dimension_numbers<[1], [0], [0], [1], [0, 0, 1, 1], [], []>} : vector<8x8xbf16>, vector<8x512xbf16>, vector<8x512xf32> -> vector<8x512xf32>
    %c16_i32_55 = arith.constant 16 : i32
    %103 = tpu.dynamic_rotate %93 by %c16_i32_55 dim 1 : vector<8x512xf32>, i32 -> vector<8x512xf32>
    %104 = vector.extract_strided_slice %3 {offsets = [1, 0], sizes = [1, 512], strides = [1, 1]} : vector<8x512xf32> to vector<1x512xf32>
    %105 = vector.broadcast %104 : vector<1x512xf32> to vector<8x512xf32>
    %106 = arith.mulf %103, %105 : vector<8x512xf32>
    %107 = arith.truncf %106 : vector<8x512xf32> to vector<8x512xbf16>
    %c1_56 = arith.constant 1 : index
    %c0_57 = arith.constant 0 : index
    %c0_58 = arith.constant 0 : index
    %108 = vector.load %arg4[%c1_56, %c0_57, %c0_58] : memref<9x8x8xbf16, #tpu.memory_space<vmem>>, vector<1x8x8xbf16>
    %109 = vector.shape_cast %108 : vector<1x8x8xbf16> to vector<8x8xbf16>
    %cst_59 = arith.constant dense<0.000000e+00> : vector<8x512xf32>
    %110 = tpu.matmul %109, %107, %cst_59 {dimension_numbers = #tpu.dot_dimension_numbers<[1], [0], [0], [1], [0, 0, 1, 1], [], []>} : vector<8x8xbf16>, vector<8x512xbf16>, vector<8x512xf32> -> vector<8x512xf32>
    %111 = arith.addf %102, %110 : vector<8x512xf32>
    %c15_i32_60 = arith.constant 15 : i32
    %112 = tpu.dynamic_rotate %93 by %c15_i32_60 dim 1 : vector<8x512xf32>, i32 -> vector<8x512xf32>
    %113 = vector.extract_strided_slice %3 {offsets = [2, 0], sizes = [1, 512], strides = [1, 1]} : vector<8x512xf32> to vector<1x512xf32>
    %114 = vector.broadcast %113 : vector<1x512xf32> to vector<8x512xf32>
    %115 = arith.mulf %112, %114 : vector<8x512xf32>
    %116 = arith.truncf %115 : vector<8x512xf32> to vector<8x512xbf16>
    %c2_61 = arith.constant 2 : index
    %c0_62 = arith.constant 0 : index
    %c0_63 = arith.constant 0 : index
    %117 = vector.load %arg4[%c2_61, %c0_62, %c0_63] : memref<9x8x8xbf16, #tpu.memory_space<vmem>>, vector<1x8x8xbf16>
    %118 = vector.shape_cast %117 : vector<1x8x8xbf16> to vector<8x8xbf16>
    %cst_64 = arith.constant dense<0.000000e+00> : vector<8x512xf32>
    %119 = tpu.matmul %118, %116, %cst_64 {dimension_numbers = #tpu.dot_dimension_numbers<[1], [0], [0], [1], [0, 0, 1, 1], [], []>} : vector<8x8xbf16>, vector<8x512xbf16>, vector<8x512xf32> -> vector<8x512xf32>
    %120 = arith.addf %111, %119 : vector<8x512xf32>
    %c1_i32_65 = arith.constant 1 : i32
    %121 = tpu.dynamic_rotate %93 by %c1_i32_65 dim 1 : vector<8x512xf32>, i32 -> vector<8x512xf32>
    %122 = vector.extract_strided_slice %3 {offsets = [3, 0], sizes = [1, 512], strides = [1, 1]} : vector<8x512xf32> to vector<1x512xf32>
    %123 = vector.broadcast %122 : vector<1x512xf32> to vector<8x512xf32>
    %124 = arith.mulf %121, %123 : vector<8x512xf32>
    %125 = arith.truncf %124 : vector<8x512xf32> to vector<8x512xbf16>
    %c3_66 = arith.constant 3 : index
    %c0_67 = arith.constant 0 : index
    %c0_68 = arith.constant 0 : index
    %126 = vector.load %arg4[%c3_66, %c0_67, %c0_68] : memref<9x8x8xbf16, #tpu.memory_space<vmem>>, vector<1x8x8xbf16>
    %127 = vector.shape_cast %126 : vector<1x8x8xbf16> to vector<8x8xbf16>
    %cst_69 = arith.constant dense<0.000000e+00> : vector<8x512xf32>
    %128 = tpu.matmul %127, %125, %cst_69 {dimension_numbers = #tpu.dot_dimension_numbers<[1], [0], [0], [1], [0, 0, 1, 1], [], []>} : vector<8x8xbf16>, vector<8x512xbf16>, vector<8x512xf32> -> vector<8x512xf32>
    %129 = arith.addf %120, %128 : vector<8x512xf32>
    %c4_70 = arith.constant 4 : index
    %c0_71 = arith.constant 0 : index
    %c0_72 = arith.constant 0 : index
    %130 = vector.load %arg4[%c4_70, %c0_71, %c0_72] : memref<9x8x8xbf16, #tpu.memory_space<vmem>>, vector<1x8x8xbf16>
    %131 = vector.shape_cast %130 : vector<1x8x8xbf16> to vector<8x8xbf16>
    %cst_73 = arith.constant dense<0.000000e+00> : vector<8x512xf32>
    %132 = tpu.matmul %131, %94, %cst_73 {dimension_numbers = #tpu.dot_dimension_numbers<[1], [0], [0], [1], [0, 0, 1, 1], [], []>} : vector<8x8xbf16>, vector<8x512xbf16>, vector<8x512xf32> -> vector<8x512xf32>
    %133 = arith.addf %129, %132 : vector<8x512xf32>
    %c511_i32_74 = arith.constant 511 : i32
    %134 = tpu.dynamic_rotate %93 by %c511_i32_74 dim 1 : vector<8x512xf32>, i32 -> vector<8x512xf32>
    %135 = vector.extract_strided_slice %3 {offsets = [4, 0], sizes = [1, 512], strides = [1, 1]} : vector<8x512xf32> to vector<1x512xf32>
    %136 = vector.broadcast %135 : vector<1x512xf32> to vector<8x512xf32>
    %137 = arith.mulf %134, %136 : vector<8x512xf32>
    %138 = arith.truncf %137 : vector<8x512xf32> to vector<8x512xbf16>
    %c5_75 = arith.constant 5 : index
    %c0_76 = arith.constant 0 : index
    %c0_77 = arith.constant 0 : index
    %139 = vector.load %arg4[%c5_75, %c0_76, %c0_77] : memref<9x8x8xbf16, #tpu.memory_space<vmem>>, vector<1x8x8xbf16>
    %140 = vector.shape_cast %139 : vector<1x8x8xbf16> to vector<8x8xbf16>
    %cst_78 = arith.constant dense<0.000000e+00> : vector<8x512xf32>
    %141 = tpu.matmul %140, %138, %cst_78 {dimension_numbers = #tpu.dot_dimension_numbers<[1], [0], [0], [1], [0, 0, 1, 1], [], []>} : vector<8x8xbf16>, vector<8x512xbf16>, vector<8x512xf32> -> vector<8x512xf32>
    %142 = arith.addf %133, %141 : vector<8x512xf32>
    %c497_i32_79 = arith.constant 497 : i32
    %143 = tpu.dynamic_rotate %93 by %c497_i32_79 dim 1 : vector<8x512xf32>, i32 -> vector<8x512xf32>
    %144 = vector.extract_strided_slice %3 {offsets = [5, 0], sizes = [1, 512], strides = [1, 1]} : vector<8x512xf32> to vector<1x512xf32>
    %145 = vector.broadcast %144 : vector<1x512xf32> to vector<8x512xf32>
    %146 = arith.mulf %143, %145 : vector<8x512xf32>
    %147 = arith.truncf %146 : vector<8x512xf32> to vector<8x512xbf16>
    %c6_80 = arith.constant 6 : index
    %c0_81 = arith.constant 0 : index
    %c0_82 = arith.constant 0 : index
    %148 = vector.load %arg4[%c6_80, %c0_81, %c0_82] : memref<9x8x8xbf16, #tpu.memory_space<vmem>>, vector<1x8x8xbf16>
    %149 = vector.shape_cast %148 : vector<1x8x8xbf16> to vector<8x8xbf16>
    %cst_83 = arith.constant dense<0.000000e+00> : vector<8x512xf32>
    %150 = tpu.matmul %149, %147, %cst_83 {dimension_numbers = #tpu.dot_dimension_numbers<[1], [0], [0], [1], [0, 0, 1, 1], [], []>} : vector<8x8xbf16>, vector<8x512xbf16>, vector<8x512xf32> -> vector<8x512xf32>
    %151 = arith.addf %142, %150 : vector<8x512xf32>
    %c496_i32_84 = arith.constant 496 : i32
    %152 = tpu.dynamic_rotate %93 by %c496_i32_84 dim 1 : vector<8x512xf32>, i32 -> vector<8x512xf32>
    %153 = vector.extract_strided_slice %3 {offsets = [6, 0], sizes = [1, 512], strides = [1, 1]} : vector<8x512xf32> to vector<1x512xf32>
    %154 = vector.broadcast %153 : vector<1x512xf32> to vector<8x512xf32>
    %155 = arith.mulf %152, %154 : vector<8x512xf32>
    %156 = arith.truncf %155 : vector<8x512xf32> to vector<8x512xbf16>
    %c7_85 = arith.constant 7 : index
    %c0_86 = arith.constant 0 : index
    %c0_87 = arith.constant 0 : index
    %157 = vector.load %arg4[%c7_85, %c0_86, %c0_87] : memref<9x8x8xbf16, #tpu.memory_space<vmem>>, vector<1x8x8xbf16>
    %158 = vector.shape_cast %157 : vector<1x8x8xbf16> to vector<8x8xbf16>
    %cst_88 = arith.constant dense<0.000000e+00> : vector<8x512xf32>
    %159 = tpu.matmul %158, %156, %cst_88 {dimension_numbers = #tpu.dot_dimension_numbers<[1], [0], [0], [1], [0, 0, 1, 1], [], []>} : vector<8x8xbf16>, vector<8x512xbf16>, vector<8x512xf32> -> vector<8x512xf32>
    %160 = arith.addf %151, %159 : vector<8x512xf32>
    %c495_i32_89 = arith.constant 495 : i32
    %161 = tpu.dynamic_rotate %93 by %c495_i32_89 dim 1 : vector<8x512xf32>, i32 -> vector<8x512xf32>
    %162 = vector.extract_strided_slice %3 {offsets = [7, 0], sizes = [1, 512], strides = [1, 1]} : vector<8x512xf32> to vector<1x512xf32>
    %163 = vector.broadcast %162 : vector<1x512xf32> to vector<8x512xf32>
    %164 = arith.mulf %161, %163 : vector<8x512xf32>
    %165 = arith.truncf %164 : vector<8x512xf32> to vector<8x512xbf16>
    %c8_90 = arith.constant 8 : index
    %c0_91 = arith.constant 0 : index
    %c0_92 = arith.constant 0 : index
    %166 = vector.load %arg4[%c8_90, %c0_91, %c0_92] : memref<9x8x8xbf16, #tpu.memory_space<vmem>>, vector<1x8x8xbf16>
    %167 = vector.shape_cast %166 : vector<1x8x8xbf16> to vector<8x8xbf16>
    %cst_93 = arith.constant dense<0.000000e+00> : vector<8x512xf32>
    %168 = tpu.matmul %167, %165, %cst_93 {dimension_numbers = #tpu.dot_dimension_numbers<[1], [0], [0], [1], [0, 0, 1, 1], [], []>} : vector<8x8xbf16>, vector<8x512xbf16>, vector<8x512xf32> -> vector<8x512xf32>
    %169 = arith.addf %160, %168 : vector<8x512xf32>
    %170 = vector.broadcast %7 : vector<8x1xf32> to vector<8x512xf32>
    %171 = arith.mulf %169, %170 : vector<8x512xf32>
    %172 = vector.broadcast %8 : vector<8x1xf32> to vector<8x512xf32>
    %173 = arith.addf %171, %172 : vector<8x512xf32>
    %c0_94 = arith.constant 0 : index
    %c0_95 = arith.constant 0 : index
    %174 = vector.load %arg9[%c0_94, %c0_95] : memref<512x2xf32, #tpu.memory_space<vmem>>, vector<512x2xf32>
    %cst_96 = arith.constant dense<0.000000e+00> : vector<8x2xf32>
    %175 = tpu.matmul %173, %174, %cst_96 {dimension_numbers = #tpu.dot_dimension_numbers<[1], [0], [0], [1], [0, 0, 1, 1], [], []>} : vector<8x512xf32>, vector<512x2xf32>, vector<8x2xf32> -> vector<8x2xf32>
    %c0_97 = arith.constant 0 : index
    %c0_98 = arith.constant 0 : index
    %176 = vector.load %arg7[%c0_97, %c0_98] : memref<2x8xf32, #tpu.memory_space<vmem>>, vector<2x8xf32>
    %cst_99 = arith.constant dense<0.000000e+00> : vector<2x2xf32>
    %177 = tpu.matmul %176, %175, %cst_99 {dimension_numbers = #tpu.dot_dimension_numbers<[1], [0], [0], [1], [0, 0, 1, 1], [], []>} : vector<2x8xf32>, vector<8x2xf32>, vector<2x2xf32> -> vector<2x2xf32>
    %178 = vector.broadcast %12 : vector<2x1xf32> to vector<2x2xf32>
    %179 = arith.addf %177, %178 : vector<2x2xf32>
    %180 = arith.negf %179 : vector<2x2xf32>
    %181 = math.exp %180 : vector<2x2xf32>
    %cst_100 = arith.constant 1.000000e+00 : f32
    %182 = vector.broadcast %cst_100 : f32 to vector<2x2xf32>
    %183 = arith.addf %182, %181 : vector<2x2xf32>
    %184 = arith.divf %182, %183 : vector<2x2xf32>
    %185 = arith.mulf %179, %184 : vector<2x2xf32>
    %c0_101 = arith.constant 0 : index
    %c0_102 = arith.constant 0 : index
    %186 = vector.load %arg8[%c0_101, %c0_102] : memref<8x2xf32, #tpu.memory_space<vmem>>, vector<8x2xf32>
    %cst_103 = arith.constant dense<0.000000e+00> : vector<8x2xf32>
    %187 = tpu.matmul %186, %185, %cst_103 {dimension_numbers = #tpu.dot_dimension_numbers<[1], [0], [0], [1], [0, 0, 1, 1], [], []>} : vector<8x2xf32>, vector<2x2xf32>, vector<8x2xf32> -> vector<8x2xf32>
    %188 = vector.broadcast %11 : vector<8x1xf32> to vector<8x2xf32>
    %189 = arith.addf %187, %188 : vector<8x2xf32>
    %190 = arith.negf %189 : vector<8x2xf32>
    %191 = math.exp %190 : vector<8x2xf32>
    %cst_104 = arith.constant 1.000000e+00 : f32
    %192 = vector.broadcast %cst_104 : f32 to vector<8x2xf32>
    %193 = arith.addf %192, %191 : vector<8x2xf32>
    %194 = arith.divf %192, %193 : vector<8x2xf32>
    %195 = vector.extract_strided_slice %194 {offsets = [0, 0], sizes = [8, 1], strides = [1, 1]} : vector<8x2xf32> to vector<8x1xf32>
    %196 = vector.extract_strided_slice %4 {offsets = [0, 0], sizes = [1, 512], strides = [1, 1]} : vector<2x512xf32> to vector<1x512xf32>
    %197 = vector.broadcast %195 : vector<8x1xf32> to vector<8x512xf32>
    %198 = vector.broadcast %196 : vector<1x512xf32> to vector<8x512xf32>
    %199 = arith.mulf %197, %198 : vector<8x512xf32>
    %200 = vector.extract_strided_slice %194 {offsets = [0, 1], sizes = [8, 1], strides = [1, 1]} : vector<8x2xf32> to vector<8x1xf32>
    %201 = vector.extract_strided_slice %4 {offsets = [1, 0], sizes = [1, 512], strides = [1, 1]} : vector<2x512xf32> to vector<1x512xf32>
    %202 = vector.broadcast %200 : vector<8x1xf32> to vector<8x512xf32>
    %203 = vector.broadcast %201 : vector<1x512xf32> to vector<8x512xf32>
    %204 = arith.mulf %202, %203 : vector<8x512xf32>
    %205 = arith.addf %199, %204 : vector<8x512xf32>
    %206 = arith.mulf %173, %205 : vector<8x512xf32>
    %c0_105 = arith.constant 0 : index
    %c0_106 = arith.constant 0 : index
    %207 = vector.load %arg5[%c0_105, %c0_106] : memref<8x8xbf16, #tpu.memory_space<vmem>>, vector<8x8xbf16>
    %cst_107 = arith.constant dense<0.000000e+00> : vector<8x512xf32>
    %208 = tpu.matmul %207, %2, %cst_107 {dimension_numbers = #tpu.dot_dimension_numbers<[1], [0], [0], [1], [0, 0, 1, 1], [], []>} : vector<8x8xbf16>, vector<8x512xbf16>, vector<8x512xf32> -> vector<8x512xf32>
    %209 = vector.broadcast %9 : vector<8x1xf32> to vector<8x512xf32>
    %210 = arith.mulf %208, %209 : vector<8x512xf32>
    %211 = vector.broadcast %10 : vector<8x1xf32> to vector<8x512xf32>
    %212 = arith.addf %210, %211 : vector<8x512xf32>
    %213 = arith.addf %206, %212 : vector<8x512xf32>
    %cst_108 = arith.constant 0.000000e+00 : f32
    %214 = vector.broadcast %cst_108 : f32 to vector<8x512xf32>
    %215 = arith.maximumf %213, %214 : vector<8x512xf32>
    %216 = vector.shape_cast %215 : vector<8x512xf32> to vector<1x8x512xf32>
    %c0_109 = arith.constant 0 : index
    %c0_110 = arith.constant 0 : index
    %c0_111 = arith.constant 0 : index
    %217 = vector.load %arg11[%c0_109, %c0_110, %c0_111] : memref<1x8x512xf32, #tpu.memory_space<vmem>>, vector<1x8x512xf32>
    tpu.vector_store %arg11[%c0_109, %c0_110, %c0_111], %216 {strides = array<i32>} : memref<1x8x512xf32, #tpu.memory_space<vmem>>, vector<1x8x512xf32>,
    return
  }
  func.func @transform_0(%arg0: i32) -> (i32, i32, i32) {
    %c0_i32 = arith.constant 0 : i32
    %c0_i32_0 = arith.constant 0 : i32
    %c0_i32_1 = arith.constant 0 : i32
    return %arg0, %c0_i32, %c0_i32_0 : i32, i32, i32
  }
  func.func @transform_1(%arg0: i32) -> (i32, i32) {
    %c0_i32 = arith.constant 0 : i32
    %c0_i32_0 = arith.constant 0 : i32
    %c0_i32_1 = arith.constant 0 : i32
    return %c0_i32, %c0_i32_0 : i32, i32
  }
  func.func @transform_2(%arg0: i32) -> (i32, i32, i32) {
    %c0_i32 = arith.constant 0 : i32
    %c0_i32_0 = arith.constant 0 : i32
    %c0_i32_1 = arith.constant 0 : i32
    %c0_i32_2 = arith.constant 0 : i32
    return %c0_i32, %c0_i32_0, %c0_i32_1 : i32, i32, i32
  }
  func.func @transform_3(%arg0: i32) -> (i32, i32, i32) {
    %c0_i32 = arith.constant 0 : i32
    %c0_i32_0 = arith.constant 0 : i32
    %c0_i32_1 = arith.constant 0 : i32
    %c0_i32_2 = arith.constant 0 : i32
    return %c0_i32, %c0_i32_0, %c0_i32_1 : i32, i32, i32
  }
  func.func @transform_4(%arg0: i32) -> (i32, i32) {
    %c0_i32 = arith.constant 0 : i32
    %c0_i32_0 = arith.constant 0 : i32
    %c0_i32_1 = arith.constant 0 : i32
    return %c0_i32, %c0_i32_0 : i32, i32
  }
  func.func @transform_5(%arg0: i32) -> (i32, i32) {
    %c0_i32 = arith.constant 0 : i32
    %c0_i32_0 = arith.constant 0 : i32
    %c0_i32_1 = arith.constant 0 : i32
    return %c0_i32, %c0_i32_0 : i32, i32
  }
  func.func @transform_6(%arg0: i32) -> (i32, i32) {
    %c0_i32 = arith.constant 0 : i32
    %c0_i32_0 = arith.constant 0 : i32
    %c0_i32_1 = arith.constant 0 : i32
    return %c0_i32, %c0_i32_0 : i32, i32
  }
  func.func @transform_7(%arg0: i32) -> (i32, i32) {
    %c0_i32 = arith.constant 0 : i32
    %c0_i32_0 = arith.constant 0 : i32
    %c0_i32_1 = arith.constant 0 : i32
    return %c0_i32, %c0_i32_0 : i32, i32
  }
  func.func @transform_8(%arg0: i32) -> (i32, i32) {
    %c0_i32 = arith.constant 0 : i32
    %c0_i32_0 = arith.constant 0 : i32
    %c0_i32_1 = arith.constant 0 : i32
    return %c0_i32, %c0_i32_0 : i32, i32
  }
  func.func @transform_9(%arg0: i32) -> (i32, i32) {
    %c0_i32 = arith.constant 0 : i32
    %c0_i32_0 = arith.constant 0 : i32
    %c0_i32_1 = arith.constant 0 : i32
    return %c0_i32, %c0_i32_0 : i32, i32
  }
  func.func @transform_10(%arg0: i32) -> (i32, i32, i32) {
    %c0_i32 = arith.constant 0 : i32
    %c0_i32_0 = arith.constant 0 : i32
    %c0_i32_1 = arith.constant 0 : i32
    return %arg0, %c0_i32, %c0_i32_0 : i32, i32, i32
  }
}

</mosaic_0001>

<llo_original>
// kernel: tpu_custom_call.1
$region0: #{tpu_custom_call.1}
  #allocation0 [shape = 'u32[]', space=smem, size = 0x4, offset = 0x4, fixed_abs, tag = 'smem constant byte address 0x4 - core index']
  #allocation1 [shape = 'u32[144,128]{1,0:T(1,128)}', space=vmem, size = 0x12000, scoped, tag = 'internal scratch']
  %s0 = inlined_call_operand.vmem [shape: f32[1,8,512], index: 0, kind: input, shape index: {}]
  %s1 = inlined_call_operand.vmem [shape: f32[8,512], index: 1, kind: input, shape index: {}]
  %s2 = inlined_call_operand.vmem [shape: bf16[9,8,8], index: 2, kind: input, shape index: {}]
  %s3 = inlined_call_operand.vmem [shape: bf16[9,8,8], index: 3, kind: input, shape index: {}]
  %s4 = inlined_call_operand.vmem [shape: bf16[8,8], index: 4, kind: input, shape index: {}]
  %s5 = inlined_call_operand.vmem [shape: f32[8,8], index: 5, kind: input, shape index: {}]
  %s6 = inlined_call_operand.vmem [shape: f32[2,8], index: 6, kind: input, shape index: {}]
  %s7 = inlined_call_operand.vmem [shape: f32[8,2], index: 7, kind: input, shape index: {}]
  %s8 = inlined_call_operand.vmem [shape: f32[512,2], index: 8, kind: input, shape index: {}]
  %s9 = inlined_call_operand.vmem [shape: f32[2,512], index: 9, kind: input, shape index: {}]
  %s10 = inlined_call_operand.hbm [shape: f32[1,8,512], index: 10, kind: output, shape index: {}]
  %s11 = sld [smem:[#allocation0]]
  $region50: #{tpu_custom_call.1} parent=0
    _
  %s13 = ssub.s32 1, %s11
  %s14 = scalar_select 0, %s13, %s11
  $region1: #{tpu_custom_call.1} parent=0
    #allocation2 [shape = 'u8[16384]{0}', space=vmem, size = 0x4000, scoped, tag = 'output window, operand 0, single buffered']
    #allocation3 [shape = 's32[1]{0}', space=sflag, size = 0x4, scoped, tag = 'scoped memory for tpu_custom_call.1']
    %15 = vsyncpa [#allocation3], 0
    // Predicated region
    $region2: #{tpu_custom_call.1} parent=1 // pred_check
      _
    $region3: #{tpu_custom_call.1} parent=1 // pred_check_branch
      %17 = sbr.rel (0) target = $region5
    $region4: #{tpu_custom_call.1} parent=1 // pred_region
      _
    $region5: #{tpu_custom_call.1} parent=1 // pred_fallthru
      _
    // Predicated region
    $region6: #{tpu_custom_call.1} parent=1 // pred_check
      _
    $region7: #{tpu_custom_call.1} parent=1 // pred_check_branch
      %19 = sbr.rel (0) target = $region9
    $region8: #{tpu_custom_call.1} parent=1 // pred_region
      _
    $region9: #{tpu_custom_call.1} parent=1 // pred_fallthru
      _
    // Predicated region
    $region10: #{tpu_custom_call.1} parent=1 // pred_check
      _
    $region11: #{tpu_custom_call.1} parent=1 // pred_check_branch
      %21 = sbr.rel (0) target = $region13
    $region12: #{tpu_custom_call.1} parent=1 // pred_region
      _
    $region13: #{tpu_custom_call.1} parent=1 // pred_fallthru
      _
    // Predicated region
    $region14: #{tpu_custom_call.1} parent=1 // pred_check
      _
    $region15: #{tpu_custom_call.1} parent=1 // pred_check_branch
      %23 = sbr.rel (0) target = $region17
    $region16: #{tpu_custom_call.1} parent=1 // pred_region
      _
    $region17: #{tpu_custom_call.1} parent=1 // pred_fallthru
      _
    // Predicated region
    $region18: #{tpu_custom_call.1} parent=1 // pred_check
      _
    $region19: #{tpu_custom_call.1} parent=1 // pred_check_branch
      %25 = sbr.rel (0) target = $region21
    $region20: #{tpu_custom_call.1} parent=1 // pred_region
      _
    $region21: #{tpu_custom_call.1} parent=1 // pred_fallthru
      _
    // Predicated region
    $region22: #{tpu_custom_call.1} parent=1 // pred_check
      _
    $region23: #{tpu_custom_call.1} parent=1 // pred_check_branch
      %27 = sbr.rel (0) target = $region25
    $region24: #{tpu_custom_call.1} parent=1 // pred_region
      _
    $region25: #{tpu_custom_call.1} parent=1 // pred_fallthru
      _
    // Predicated region
    $region26: #{tpu_custom_call.1} parent=1 // pred_check
      _
    $region27: #{tpu_custom_call.1} parent=1 // pred_check_branch
      %29 = sbr.rel (0) target = $region29
    $region28: #{tpu_custom_call.1} parent=1 // pred_region
      _
    $region29: #{tpu_custom_call.1} parent=1 // pred_fallthru
      _
    // Predicated region
    $region30: #{tpu_custom_call.1} parent=1 // pred_check
      _
    $region31: #{tpu_custom_call.1} parent=1 // pred_check_branch
      %31 = sbr.rel (0) target = $region33
    $region32: #{tpu_custom_call.1} parent=1 // pred_region
      _
    $region33: #{tpu_custom_call.1} parent=1 // pred_fallthru
      _
    // Predicated region
    $region34: #{tpu_custom_call.1} parent=1 // pred_check
      _
    $region35: #{tpu_custom_call.1} parent=1 // pred_check_branch
      %33 = sbr.rel (0) target = $region37
    $region36: #{tpu_custom_call.1} parent=1 // pred_region
      _
    $region37: #{tpu_custom_call.1} parent=1 // pred_fallthru
      _
    // Predicated region
    $region38: #{tpu_custom_call.1} parent=1 // pred_check
      _
    $region39: #{tpu_custom_call.1} parent=1 // pred_check_branch
      %35 = sbr.rel (0) target = $region41
    $region40: #{tpu_custom_call.1} parent=1 // pred_region
      _
    $region41: #{tpu_custom_call.1} parent=1 // pred_fallthru
      _
    %v37 = vld [vmem:[%s0] sm:$0xff]
    %v38 = vld [vmem:[%s0 + $0x8] sm:$0xff]
    %v39 = vld [vmem:[%s0 + $0x10] sm:$0xff]
    %v40 = vld [vmem:[%s0 + $0x18] sm:$0xff]
    %v41 = vpack.c.bf16 %v37, %v37
    %v42 = vpack.c.bf16 %v38, %v38
    %v43 = vpack.c.bf16 %v39, %v39
    %v44 = vpack.c.bf16 %v40, %v40
    %v45 = vld [vmem:[%s1] sm:$0xff]
    %v46 = vld [vmem:[%s1 + $0x8] sm:$0xff]
    %v47 = vld [vmem:[%s1 + $0x10] sm:$0xff]
    %v48 = vld [vmem:[%s1 + $0x18] sm:$0xff]
    %v49 = vld [vmem:[%s9] sm:$0xff]
    %v50 = vld [vmem:[%s5] sm:$0xff]
    %v51 = vld [vmem:[%s5] sm:$0x3]
    %52 = vrot.lane.b32.xlu0 %v37, 17
    %v53 = vpop.permute.xlu0 %52
    %54 = vrot.lane.b32.xlu0 %v38, 17
    %v55 = vpop.permute.xlu0 %54
    %56 = vrot.lane.b32.xlu0 %v39, 17
    %v57 = vpop.permute.xlu0 %56
    %58 = vrot.lane.b32.xlu0 %v40, 17
    %v59 = vpop.permute.xlu0 %58
    %v60 = vlaneseq
    %v61 = vand.u32 %v60, 127
    %vm62 = vcmp.lt.s32.totalorder %v61, 17
    %v63 = vsel %vm62, %v57, %v59
    %v64 = vsel %vm62, %v55, %v57
    %v65 = vsel %vm62, %v53, %v55
    %v66 = vsel %vm62, %v59, %v53
    %v67 = vlaneseq
    %v68 = vshrl.u32 %v67, 7
    %v69 = vsub.s32 0, %v68
    %v70 = vrot.slane %v45, %v69
    %v71 = vlaneseq
    %v72 = vshrl.u32 %v71, 7
    %v73 = vsub.s32 0, %v72
    %v74 = vrot.slane %v46, %v73
    %v75 = vlaneseq
    %v76 = vshrl.u32 %v75, 7
    %v77 = vsub.s32 0, %v76
    %v78 = vrot.slane %v47, %v77
    %v79 = vlaneseq
    %v80 = vshrl.u32 %v79, 7
    %v81 = vsub.s32 0, %v80
    %v82 = vrot.slane %v48, %v81
    %v83 = vmul.f32 %v66, %v70
    %v84 = vmul.f32 %v65, %v74
    %v85 = vmul.f32 %v64, %v78
    %v86 = vmul.f32 %v63, %v82
    %v87 = vpack.c.bf16 %v83, %v83
    %v88 = vpack.c.bf16 %v84, %v84
    %v89 = vpack.c.bf16 %v85, %v85
    %v90 = vpack.c.bf16 %v86, %v86
    %v91 = vld [vmem:[%s2] sm:$0xf]
    %92 = vrot.lane.b32.xlu0 %v37, 16
    %v93 = vpop.permute.xlu0 %92
    %94 = vrot.lane.b32.xlu0 %v38, 16
    %v95 = vpop.permute.xlu0 %94
    %96 = vrot.lane.b32.xlu0 %v39, 16
    %v97 = vpop.permute.xlu0 %96
    %98 = vrot.lane.b32.xlu0 %v40, 16
    %v99 = vpop.permute.xlu0 %98
    %vm100 = vcmp.lt.s32.totalorder %v61, 16
    %v101 = vsel %vm100, %v97, %v99
    %v102 = vsel %vm100, %v95, %v97
    %v103 = vsel %vm100, %v93, %v95
    %v104 = vsel %vm100, %v99, %v93
    %v105 = vlaneseq
    %v106 = vshrl.u32 %v105, 7
    %v107 = vsub.s32 1, %v106
    %v108 = vrot.slane %v45, %v107
    %v109 = vlaneseq
    %v110 = vshrl.u32 %v109, 7
    %v111 = vsub.s32 1, %v110
    %v112 = vrot.slane %v46, %v111
    %v113 = vlaneseq
    %v114 = vshrl.u32 %v113, 7
    %v115 = vsub.s32 1, %v114
    %v116 = vrot.slane %v47, %v115
    %v117 = vlaneseq
    %v118 = vshrl.u32 %v117, 7
    %v119 = vsub.s32 1, %v118
    %v120 = vrot.slane %v48, %v119
    %v121 = vmul.f32 %v104, %v108
    %v122 = vmul.f32 %v103, %v112
    %v123 = vmul.f32 %v102, %v116
    %v124 = vmul.f32 %v101, %v120
    %v125 = vpack.c.bf16 %v121, %v121
    %v126 = vpack.c.bf16 %v122, %v122
    %v127 = vpack.c.bf16 %v123, %v123
    %v128 = vpack.c.bf16 %v124, %v124
    %s129 = scalar_lea.vmem %s2, 4
    %v130 = vld [vmem:[%s129] sm:$0xf]
    %vm131 = vcmask 64512
    %v133 = vsel %vm131, %v130, 0
    %vm135 = vcmask 1043456
    %v137 = vsel %vm135, %v125, 0
    %v140 = vsel %vm135, %v126, 0
    %v143 = vsel %vm135, %v127, 0
    %v146 = vsel %vm135, %v128, 0
    %148 = vmatprep.subr.bf16.mxu0 0
    %149 = vmatpush1.bf16.msra.mxu0 0
    %150 = vmatprep.subr.bf16.mxu0 0
    %151 = vmatpush1.bf16.msra.mxu0 0
    %152 = vmatprep.subr.bf16.mxu0 0
    %153 = vmatpush1.bf16.msra.mxu0 0
    %154 = vmatprep.subr.bf16.mxu0 0
    %155 = vmatpush1.bf16.msra.mxu0 0
    %156 = vmatprep.subr.bf16.mxu0 0
    %157 = vmatpush1.bf16.msra.mxu0 0
    %158 = vmatprep.subr.bf16.mxu0 0
    %159 = vmatpush1.bf16.msra.mxu0 0
    %160 = vmatprep.subr.bf16.mxu0 0
    %161 = vmatpush1.bf16.msra.mxu0 0
    %162 = vmatprep.subr.bf16.mxu0 %v140
    %163 = vmatpush1.bf16.msra.mxu0 %v137
    %164 = vmatprep.subr.bf16.mxu0 0
    %165 = vmatpush2.bf16.msra.mxu0 0
    %166 = vmatprep.subr.bf16.mxu0 0
    %167 = vmatpush2.bf16.msra.mxu0 0
    %168 = vmatprep.subr.bf16.mxu0 0
    %169 = vmatpush2.bf16.msra.mxu0 0
    %170 = vmatprep.subr.bf16.mxu0 0
    %171 = vmatpush2.bf16.msra.mxu0 0
    %172 = vmatprep.subr.bf16.mxu0 0
    %173 = vmatpush2.bf16.msra.mxu0 0
    %174 = vmatprep.subr.bf16.mxu0 0
    %175 = vmatpush2.bf16.msra.mxu0 0
    %176 = vmatprep.subr.bf16.mxu0 0
    %177 = vmatpush2.bf16.msra.mxu0 0
    %178 = vmatprep.subr.bf16.mxu0 0
    %179 = vmatpush2.bf16.msra.mxu0 0
    %180 = vmatprep.mubr.bf16.mxu0 0
    %181 = vmatmul.mubr.bf16.gmra.mxu0 %v133
    %v182 = vpop.f32.mrf.mxu0
    %v183 = vadd.f32 0.0, %v182
    %v184 = vpop.f32.mrf.mxu0
    %v185 = vadd.f32 0.0, %v184
    %v186 = vpop.f32.mrf.mxu0
    %v187 = vpop.f32.mrf.mxu0
    %188 = vdwg.mxu0
    %189 = vmatprep.subr.bf16.mxu0 0
    %190 = vmatpush1.bf16.msra.mxu0 0
    %191 = vmatprep.subr.bf16.mxu0 0
    %192 = vmatpush1.bf16.msra.mxu0 0
    %193 = vmatprep.subr.bf16.mxu0 0
    %194 = vmatpush1.bf16.msra.mxu0 0
    %195 = vmatprep.subr.bf16.mxu0 0
    %196 = vmatpush1.bf16.msra.mxu0 0
    %197 = vmatprep.subr.bf16.mxu0 0
    %198 = vmatpush1.bf16.msra.mxu0 0
    %199 = vmatprep.subr.bf16.mxu0 0
    %200 = vmatpush1.bf16.msra.mxu0 0
    %201 = vmatprep.subr.bf16.mxu0 0
    %202 = vmatpush1.bf16.msra.mxu0 0
    %203 = vmatprep.subr.bf16.mxu0 %v146
    %204 = vmatpush1.bf16.msra.mxu0 %v143
    %205 = vmatprep.subr.bf16.mxu0 0
    %206 = vmatpush2.bf16.msra.mxu0 0
    %207 = vmatprep.subr.bf16.mxu0 0
    %208 = vmatpush2.bf16.msra.mxu0 0
    %209 = vmatprep.subr.bf16.mxu0 0
    %210 = vmatpush2.bf16.msra.mxu0 0
    %211 = vmatprep.subr.bf16.mxu0 0
    %212 = vmatpush2.bf16.msra.mxu0 0
    %213 = vmatprep.subr.bf16.mxu0 0
    %214 = vmatpush2.bf16.msra.mxu0 0
    %215 = vmatprep.subr.bf16.mxu0 0
    %216 = vmatpush2.bf16.msra.mxu0 0
    %217 = vmatprep.subr.bf16.mxu0 0
    %218 = vmatpush2.bf16.msra.mxu0 0
    %219 = vmatprep.subr.bf16.mxu0 0
    %220 = vmatpush2.bf16.msra.mxu0 0
    %221 = vmatprep.mubr.bf16.mxu0 0
    %222 = vmatmul.mubr.bf16.gmra.mxu0 %v133
    %v223 = vpop.f32.mrf.mxu0
    %v224 = vadd.f32 0.0, %v223
    %v225 = vpop.f32.mrf.mxu0
    %v226 = vadd.f32 0.0, %v225
    %v227 = vpop.f32.mrf.mxu0
    %v228 = vpop.f32.mrf.mxu0
    %229 = vdwg.mxu0
    %v231 = vsel %vm131, %v91, 0
    %v234 = vsel %vm135, %v87, 0
    %v237 = vsel %vm135, %v88, 0
    %v240 = vsel %vm135, %v89, 0
    %v243 = vsel %vm135, %v90, 0
    %245 = vmatprep.subr.bf16.mxu0 0
    %246 = vmatpush1.bf16.msra.mxu0 0
    %247 = vmatprep.subr.bf16.mxu0 0
    %248 = vmatpush1.bf16.msra.mxu0 0
    %249 = vmatprep.subr.bf16.mxu0 0
    %250 = vmatpush1.bf16.msra.mxu0 0
    %251 = vmatprep.subr.bf16.mxu0 0
    %252 = vmatpush1.bf16.msra.mxu0 0
    %253 = vmatprep.subr.bf16.mxu0 0
    %254 = vmatpush1.bf16.msra.mxu0 0
    %255 = vmatprep.subr.bf16.mxu0 0
    %256 = vmatpush1.bf16.msra.mxu0 0
    %257 = vmatprep.subr.bf16.mxu0 0
    %258 = vmatpush1.bf16.msra.mxu0 0
    %259 = vmatprep.subr.bf16.mxu0 %v237
    %260 = vmatpush1.bf16.msra.mxu0 %v234
    %261 = vmatprep.subr.bf16.mxu0 0
    %262 = vmatpush2.bf16.msra.mxu0 0
    %263 = vmatprep.subr.bf16.mxu0 0
    %264 = vmatpush2.bf16.msra.mxu0 0
    %265 = vmatprep.subr.bf16.mxu0 0
    %266 = vmatpush2.bf16.msra.mxu0 0
    %267 = vmatprep.subr.bf16.mxu0 0
    %268 = vmatpush2.bf16.msra.mxu0 0
    %269 = vmatprep.subr.bf16.mxu0 0
    %270 = vmatpush2.bf16.msra.mxu0 0
    %271 = vmatprep.subr.bf16.mxu0 0
    %272 = vmatpush2.bf16.msra.mxu0 0
    %273 = vmatprep.subr.bf16.mxu0 0
    %274 = vmatpush2.bf16.msra.mxu0 0
    %275 = vmatprep.subr.bf16.mxu0 0
    %276 = vmatpush2.bf16.msra.mxu0 0
    %277 = vmatprep.mubr.bf16.mxu0 0
    %278 = vmatmul.mubr.bf16.gmra.mxu0 %v231
    %v279 = vpop.f32.mrf.mxu0
    %v280 = vadd.f32 %v183, %v279
    %v281 = vpop.f32.mrf.mxu0
    %v282 = vadd.f32 %v185, %v281
    %v283 = vpop.f32.mrf.mxu0
    %v284 = vpop.f32.mrf.mxu0
    %285 = vdwg.mxu0
    %286 = vmatprep.subr.bf16.mxu0 0
    %287 = vmatpush1.bf16.msra.mxu0 0
    %288 = vmatprep.subr.bf16.mxu0 0
    %289 = vmatpush1.bf16.msra.mxu0 0
    %290 = vmatprep.subr.bf16.mxu0 0
    %291 = vmatpush1.bf16.msra.mxu0 0
    %292 = vmatprep.subr.bf16.mxu0 0
    %293 = vmatpush1.bf16.msra.mxu0 0
    %294 = vmatprep.subr.bf16.mxu0 0
    %295 = vmatpush1.bf16.msra.mxu0 0
    %296 = vmatprep.subr.bf16.mxu0 0
    %297 = vmatpush1.bf16.msra.mxu0 0
    %298 = vmatprep.subr.bf16.mxu0 0
    %299 = vmatpush1.bf16.msra.mxu0 0
    %300 = vmatprep.subr.bf16.mxu0 %v243
    %301 = vmatpush1.bf16.msra.mxu0 %v240
    %302 = vmatprep.subr.bf16.mxu0 0
    %303 = vmatpush2.bf16.msra.mxu0 0
    %304 = vmatprep.subr.bf16.mxu0 0
    %305 = vmatpush2.bf16.msra.mxu0 0
    %306 = vmatprep.subr.bf16.mxu0 0
    %307 = vmatpush2.bf16.msra.mxu0 0
    %308 = vmatprep.subr.bf16.mxu0 0
    %309 = vmatpush2.bf16.msra.mxu0 0
    %310 = vmatprep.subr.bf16.mxu0 0
    %311 = vmatpush2.bf16.msra.mxu0 0
    %312 = vmatprep.subr.bf16.mxu0 0
    %313 = vmatpush2.bf16.msra.mxu0 0
    %314 = vmatprep.subr.bf16.mxu0 0
    %315 = vmatpush2.bf16.msra.mxu0 0
    %316 = vmatprep.subr.bf16.mxu0 0
    %317 = vmatpush2.bf16.msra.mxu0 0
    %318 = vmatprep.mubr.bf16.mxu0 0
    %319 = vmatmul.mubr.bf16.gmra.mxu0 %v231
    %v320 = vpop.f32.mrf.mxu0
    %v321 = vadd.f32 %v224, %v320
    %v322 = vpop.f32.mrf.mxu0
    %v323 = vadd.f32 %v226, %v322
    %v324 = vpop.f32.mrf.mxu0
    %v325 = vpop.f32.mrf.mxu0
    %326 = vdwg.mxu0
    %327 = vrot.lane.b32.xlu0 %v37, 15
    %v328 = vpop.permute.xlu0 %327
    %329 = vrot.lane.b32.xlu0 %v38, 15
    %v330 = vpop.permute.xlu0 %329
    %331 = vrot.lane.b32.xlu0 %v39, 15
    %v332 = vpop.permute.xlu0 %331
    %333 = vrot.lane.b32.xlu0 %v40, 15
    %v334 = vpop.permute.xlu0 %333
    %vm335 = vcmp.lt.s32.totalorder %v61, 15
    %v336 = vsel %vm335, %v332, %v334
    %v337 = vsel %vm335, %v330, %v332
    %v338 = vsel %vm335, %v328, %v330
    %v339 = vsel %vm335, %v334, %v328
    %v340 = vlaneseq
    %v341 = vshrl.u32 %v340, 7
    %v342 = vsub.s32 2, %v341
    %v343 = vrot.slane %v45, %v342
    %v344 = vlaneseq
    %v345 = vshrl.u32 %v344, 7
    %v346 = vsub.s32 2, %v345
    %v347 = vrot.slane %v46, %v346
    %v348 = vlaneseq
    %v349 = vshrl.u32 %v348, 7
    %v350 = vsub.s32 2, %v349
    %v351 = vrot.slane %v47, %v350
    %v352 = vlaneseq
    %v353 = vshrl.u32 %v352, 7
    %v354 = vsub.s32 2, %v353
    %v355 = vrot.slane %v48, %v354
    %v356 = vmul.f32 %v339, %v343
    %v357 = vmul.f32 %v338, %v347
    %v358 = vmul.f32 %v337, %v351
    %v359 = vmul.f32 %v336, %v355
    %v360 = vpack.c.bf16 %v356, %v356
    %v361 = vpack.c.bf16 %v357, %v357
    %v362 = vpack.c.bf16 %v358, %v358
    %v363 = vpack.c.bf16 %v359, %v359
    %s364 = scalar_lea.vmem %s2, 8
    %v365 = vld [vmem:[%s364] sm:$0xf]
    %v367 = vsel %vm131, %v365, 0
    %v370 = vsel %vm135, %v360, 0
    %v373 = vsel %vm135, %v361, 0
    %v376 = vsel %vm135, %v362, 0
    %v379 = vsel %vm135, %v363, 0
    %381 = vmatprep.subr.bf16.mxu0 0
    %382 = vmatpush1.bf16.msra.mxu0 0
    %383 = vmatprep.subr.bf16.mxu0 0
    %384 = vmatpush1.bf16.msra.mxu0 0
    %385 = vmatprep.subr.bf16.mxu0 0
    %386 = vmatpush1.bf16.msra.mxu0 0
    %387 = vmatprep.subr.bf16.mxu0 0
    %388 = vmatpush1.bf16.msra.mxu0 0
    %389 = vmatprep.subr.bf16.mxu0 0
    %390 = vmatpush1.bf16.msra.mxu0 0
    %391 = vmatprep.subr.bf16.mxu0 0
    %392 = vmatpush1.bf16.msra.mxu0 0
    %393 = vmatprep.subr.bf16.mxu0 0
    %394 = vmatpush1.bf16.msra.mxu0 0
    %395 = vmatprep.subr.bf16.mxu0 %v373
    %396 = vmatpush1.bf16.msra.mxu0 %v370
    %397 = vmatprep.subr.bf16.mxu0 0
    %398 = vmatpush2.bf16.msra.mxu0 0
    %399 = vmatprep.subr.bf16.mxu0 0
    %400 = vmatpush2.bf16.msra.mxu0 0
    %401 = vmatprep.subr.bf16.mxu0 0
    %402 = vmatpush2.bf16.msra.mxu0 0
    %403 = vmatprep.subr.bf16.mxu0 0
    %404 = vmatpush2.bf16.msra.mxu0 0
    %405 = vmatprep.subr.bf16.mxu0 0
    %406 = vmatpush2.bf16.msra.mxu0 0
    %407 = vmatprep.subr.bf16.mxu0 0
    %408 = vmatpush2.bf16.msra.mxu0 0
    %409 = vmatprep.subr.bf16.mxu0 0
    %410 = vmatpush2.bf16.msra.mxu0 0
    %411 = vmatprep.subr.bf16.mxu0 0
    %412 = vmatpush2.bf16.msra.mxu0 0
    %413 = vmatprep.mubr.bf16.mxu0 0
    %414 = vmatmul.mubr.bf16.gmra.mxu0 %v367
    %v415 = vpop.f32.mrf.mxu0
    %v416 = vadd.f32 0.0, %v415
    %v417 = vpop.f32.mrf.mxu0
    %v418 = vadd.f32 0.0, %v417
    %v419 = vpop.f32.mrf.mxu0
    %v420 = vpop.f32.mrf.mxu0
    %421 = vdwg.mxu0
    %422 = vmatprep.subr.bf16.mxu0 0
    %423 = vmatpush1.bf16.msra.mxu0 0
    %424 = vmatprep.subr.bf16.mxu0 0
    %425 = vmatpush1.bf16.msra.mxu0 0
    %426 = vmatprep.subr.bf16.mxu0 0
    %427 = vmatpush1.bf16.msra.mxu0 0
    %428 = vmatprep.subr.bf16.mxu0 0
    %429 = vmatpush1.bf16.msra.mxu0 0
    %430 = vmatprep.subr.bf16.mxu0 0
    %431 = vmatpush1.bf16.msra.mxu0 0
    %432 = vmatprep.subr.bf16.mxu0 0
    %433 = vmatpush1.bf16.msra.mxu0 0
    %434 = vmatprep.subr.bf16.mxu0 0
    %435 = vmatpush1.bf16.msra.mxu0 0
    %436 = vmatprep.subr.bf16.mxu0 %v379
    %437 = vmatpush1.bf16.msra.mxu0 %v376
    %438 = vmatprep.subr.bf16.mxu0 0
    %439 = vmatpush2.bf16.msra.mxu0 0
    %440 = vmatprep.subr.bf16.mxu0 0
    %441 = vmatpush2.bf16.msra.mxu0 0
    %442 = vmatprep.subr.bf16.mxu0 0
    %443 = vmatpush2.bf16.msra.mxu0 0
    %444 = vmatprep.subr.bf16.mxu0 0
    %445 = vmatpush2.bf16.msra.mxu0 0
    %446 = vmatprep.subr.bf16.mxu0 0
    %447 = vmatpush2.bf16.msra.mxu0 0
    %448 = vmatprep.subr.bf16.mxu0 0
    %449 = vmatpush2.bf16.msra.mxu0 0
    %450 = vmatprep.subr.bf16.mxu0 0
    %451 = vmatpush2.bf16.msra.mxu0 0
    %452 = vmatprep.subr.bf16.mxu0 0
    %453 = vmatpush2.bf16.msra.mxu0 0
    %454 = vmatprep.mubr.bf16.mxu0 0
    %455 = vmatmul.mubr.bf16.gmra.mxu0 %v367
    %v456 = vpop.f32.mrf.mxu0
    %v457 = vadd.f32 0.0, %v456
    %v458 = vpop.f32.mrf.mxu0
    %v459 = vadd.f32 0.0, %v458
    %v460 = vpop.f32.mrf.mxu0
    %v461 = vpop.f32.mrf.mxu0
    %462 = vdwg.mxu0
    %v463 = vadd.f32 %v280, %v416
    %v464 = vadd.f32 %v282, %v418
    %v465 = vadd.f32 %v321, %v457
    %v466 = vadd.f32 %v323, %v459
    %467 = vrot.lane.b32.xlu0 %v37, 1
    %v468 = vpop.permute.xlu0 %467
    %469 = vrot.lane.b32.xlu0 %v38, 1
    %v470 = vpop.permute.xlu0 %469
    %471 = vrot.lane.b32.xlu0 %v39, 1
    %v472 = vpop.permute.xlu0 %471
    %473 = vrot.lane.b32.xlu0 %v40, 1
    %v474 = vpop.permute.xlu0 %473
    %vm475 = vcmp.lt.s32.totalorder %v61, 1
    %v476 = vsel %vm475, %v472, %v474
    %v477 = vsel %vm475, %v470, %v472
    %v478 = vsel %vm475, %v468, %v470
    %v479 = vsel %vm475, %v474, %v468
    %v480 = vlaneseq
    %v481 = vshrl.u32 %v480, 7
    %v482 = vsub.s32 3, %v481
    %v483 = vrot.slane %v45, %v482
    %v484 = vlaneseq
    %v485 = vshrl.u32 %v484, 7
    %v486 = vsub.s32 3, %v485
    %v487 = vrot.slane %v46, %v486
    %v488 = vlaneseq
    %v489 = vshrl.u32 %v488, 7
    %v490 = vsub.s32 3, %v489
    %v491 = vrot.slane %v47, %v490
    %v492 = vlaneseq
    %v493 = vshrl.u32 %v492, 7
    %v494 = vsub.s32 3, %v493
    %v495 = vrot.slane %v48, %v494
    %v496 = vmul.f32 %v479, %v483
    %v497 = vmul.f32 %v478, %v487
    %v498 = vmul.f32 %v477, %v491
    %v499 = vmul.f32 %v476, %v495
    %v500 = vpack.c.bf16 %v496, %v496
    %v501 = vpack.c.bf16 %v497, %v497
    %v502 = vpack.c.bf16 %v498, %v498
    %v503 = vpack.c.bf16 %v499, %v499
    %s504 = scalar_lea.vmem %s2, 12
    %v505 = vld [vmem:[%s504] sm:$0xf]
    %v507 = vsel %vm131, %v505, 0
    %v510 = vsel %vm135, %v500, 0
    %v513 = vsel %vm135, %v501, 0
    %v516 = vsel %vm135, %v502, 0
    %v519 = vsel %vm135, %v503, 0
    %521 = vmatprep.subr.bf16.mxu0 0
    %522 = vmatpush1.bf16.msra.mxu0 0
    %523 = vmatprep.subr.bf16.mxu0 0
    %524 = vmatpush1.bf16.msra.mxu0 0
    %525 = vmatprep.subr.bf16.mxu0 0
    %526 = vmatpush1.bf16.msra.mxu0 0
    %527 = vmatprep.subr.bf16.mxu0 0
    %528 = vmatpush1.bf16.msra.mxu0 0
    %529 = vmatprep.subr.bf16.mxu0 0
    %530 = vmatpush1.bf16.msra.mxu0 0
    %531 = vmatprep.subr.bf16.mxu0 0
    %532 = vmatpush1.bf16.msra.mxu0 0
    %533 = vmatprep.subr.bf16.mxu0 0
    %534 = vmatpush1.bf16.msra.mxu0 0
    %535 = vmatprep.subr.bf16.mxu0 %v513
    %536 = vmatpush1.bf16.msra.mxu0 %v510
    %537 = vmatprep.subr.bf16.mxu0 0
    %538 = vmatpush2.bf16.msra.mxu0 0
    %539 = vmatprep.subr.bf16.mxu0 0
    %540 = vmatpush2.bf16.msra.mxu0 0
    %541 = vmatprep.subr.bf16.mxu0 0
    %542 = vmatpush2.bf16.msra.mxu0 0
    %543 = vmatprep.subr.bf16.mxu0 0
    %544 = vmatpush2.bf16.msra.mxu0 0
    %545 = vmatprep.subr.bf16.mxu0 0
    %546 = vmatpush2.bf16.msra.mxu0 0
    %547 = vmatprep.subr.bf16.mxu0 0
    %548 = vmatpush2.bf16.msra.mxu0 0
    %549 = vmatprep.subr.bf16.mxu0 0
    %550 = vmatpush2.bf16.msra.mxu0 0
    %551 = vmatprep.subr.bf16.mxu0 0
    %552 = vmatpush2.bf16.msra.mxu0 0
    %553 = vmatprep.mubr.bf16.mxu0 0
    %554 = vmatmul.mubr.bf16.gmra.mxu0 %v507
    %v555 = vpop.f32.mrf.mxu0
    %v556 = vadd.f32 0.0, %v555
    %v557 = vpop.f32.mrf.mxu0
    %v558 = vadd.f32 0.0, %v557
    %v559 = vpop.f32.mrf.mxu0
    %v560 = vpop.f32.mrf.mxu0
    %561 = vdwg.mxu0
    %562 = vmatprep.subr.bf16.mxu0 0
    %563 = vmatpush1.bf16.msra.mxu0 0
    %564 = vmatprep.subr.bf16.mxu0 0
    %565 = vmatpush1.bf16.msra.mxu0 0
    %566 = vmatprep.subr.bf16.mxu0 0
    %567 = vmatpush1.bf16.msra.mxu0 0
    %568 = vmatprep.subr.bf16.mxu0 0
    %569 = vmatpush1.bf16.msra.mxu0 0
    %570 = vmatprep.subr.bf16.mxu0 0
    %571 = vmatpush1.bf16.msra.mxu0 0
    %572 = vmatprep.subr.bf16.mxu0 0
    %573 = vmatpush1.bf16.msra.mxu0 0
    %574 = vmatprep.subr.bf16.mxu0 0
    %575 = vmatpush1.bf16.msra.mxu0 0
    %576 = vmatprep.subr.bf16.mxu0 %v519
    %577 = vmatpush1.bf16.msra.mxu0 %v516
    %578 = vmatprep.subr.bf16.mxu0 0
    %579 = vmatpush2.bf16.msra.mxu0 0
    %580 = vmatprep.subr.bf16.mxu0 0
    %581 = vmatpush2.bf16.msra.mxu0 0
    %582 = vmatprep.subr.bf16.mxu0 0
    %583 = vmatpush2.bf16.msra.mxu0 0
    %584 = vmatprep.subr.bf16.mxu0 0
    %585 = vmatpush2.bf16.msra.mxu0 0
    %586 = vmatprep.subr.bf16.mxu0 0
    %587 = vmatpush2.bf16.msra.mxu0 0
    %588 = vmatprep.subr.bf16.mxu0 0
    %589 = vmatpush2.bf16.msra.mxu0 0
    %590 = vmatprep.subr.bf16.mxu0 0
    %591 = vmatpush2.bf16.msra.mxu0 0
    %592 = vmatprep.subr.bf16.mxu0 0
    %593 = vmatpush2.bf16.msra.mxu0 0
    %594 = vmatprep.mubr.bf16.mxu0 0
    %595 = vmatmul.mubr.bf16.gmra.mxu0 %v507
    %v596 = vpop.f32.mrf.mxu0
    %v597 = vadd.f32 0.0, %v596
    %v598 = vpop.f32.mrf.mxu0
    %v599 = vadd.f32 0.0, %v598
    %v600 = vpop.f32.mrf.mxu0
    %v601 = vpop.f32.mrf.mxu0
    %602 = vdwg.mxu0
    %v603 = vadd.f32 %v463, %v556
    %v604 = vadd.f32 %v464, %v558
    %v605 = vadd.f32 %v465, %v597
    %v606 = vadd.f32 %v466, %v599
    %s607 = scalar_lea.vmem %s2, 16
    %v608 = vld [vmem:[%s607] sm:$0xf]
    %v610 = vsel %vm131, %v608, 0
    %v613 = vsel %vm135, %v41, 0
    %v616 = vsel %vm135, %v42, 0
    %v619 = vsel %vm135, %v43, 0
    %v622 = vsel %vm135, %v44, 0
    %624 = vmatprep.subr.bf16.mxu0 0
    %625 = vmatpush1.bf16.msra.mxu0 0
    %626 = vmatprep.subr.bf16.mxu0 0
    %627 = vmatpush1.bf16.msra.mxu0 0
    %628 = vmatprep.subr.bf16.mxu0 0
    %629 = vmatpush1.bf16.msra.mxu0 0
    %630 = vmatprep.subr.bf16.mxu0 0
    %631 = vmatpush1.bf16.msra.mxu0 0
    %632 = vmatprep.subr.bf16.mxu0 0
    %633 = vmatpush1.bf16.msra.mxu0 0
    %634 = vmatprep.subr.bf16.mxu0 0
    %635 = vmatpush1.bf16.msra.mxu0 0
    %636 = vmatprep.subr.bf16.mxu0 0
    %637 = vmatpush1.bf16.msra.mxu0 0
    %638 = vmatprep.subr.bf16.mxu0 %v616
    %639 = vmatpush1.bf16.msra.mxu0 %v613
    %640 = vmatprep.subr.bf16.mxu0 0
    %641 = vmatpush2.bf16.msra.mxu0 0
    %642 = vmatprep.subr.bf16.mxu0 0
    %643 = vmatpush2.bf16.msra.mxu0 0
    %644 = vmatprep.subr.bf16.mxu0 0
    %645 = vmatpush2.bf16.msra.mxu0 0
    %646 = vmatprep.subr.bf16.mxu0 0
    %647 = vmatpush2.bf16.msra.mxu0 0
    %648 = vmatprep.subr.bf16.mxu0 0
    %649 = vmatpush2.bf16.msra.mxu0 0
    %650 = vmatprep.subr.bf16.mxu0 0
    %651 = vmatpush2.bf16.msra.mxu0 0
    %652 = vmatprep.subr.bf16.mxu0 0
    %653 = vmatpush2.bf16.msra.mxu0 0
    %654 = vmatprep.subr.bf16.mxu0 0
    %655 = vmatpush2.bf16.msra.mxu0 0
    %656 = vmatprep.mubr.bf16.mxu0 0
    %657 = vmatmul.mubr.bf16.gmra.mxu0 %v610
    %v658 = vpop.f32.mrf.mxu0
    %v659 = vadd.f32 0.0, %v658
    %v660 = vpop.f32.mrf.mxu0
    %v661 = vadd.f32 0.0, %v660
    %v662 = vpop.f32.mrf.mxu0
    %v663 = vpop.f32.mrf.mxu0
    %664 = vdwg.mxu0
    %665 = vmatprep.subr.bf16.mxu0 0
    %666 = vmatpush1.bf16.msra.mxu0 0
    %667 = vmatprep.subr.bf16.mxu0 0
    %668 = vmatpush1.bf16.msra.mxu0 0
    %669 = vmatprep.subr.bf16.mxu0 0
    %670 = vmatpush1.bf16.msra.mxu0 0
    %671 = vmatprep.subr.bf16.mxu0 0
    %672 = vmatpush1.bf16.msra.mxu0 0
    %673 = vmatprep.subr.bf16.mxu0 0
    %674 = vmatpush1.bf16.msra.mxu0 0
    %675 = vmatprep.subr.bf16.mxu0 0
    %676 = vmatpush1.bf16.msra.mxu0 0
    %677 = vmatprep.subr.bf16.mxu0 0
    %678 = vmatpush1.bf16.msra.mxu0 0
    %679 = vmatprep.subr.bf16.mxu0 %v622
    %680 = vmatpush1.bf16.msra.mxu0 %v619
    %681 = vmatprep.subr.bf16.mxu0 0
    %682 = vmatpush2.bf16.msra.mxu0 0
    %683 = vmatprep.subr.bf16.mxu0 0
    %684 = vmatpush2.bf16.msra.mxu0 0
    %685 = vmatprep.subr.bf16.mxu0 0
    %686 = vmatpush2.bf16.msra.mxu0 0
    %687 = vmatprep.subr.bf16.mxu0 0
    %688 = vmatpush2.bf16.msra.mxu0 0
    %689 = vmatprep.subr.bf16.mxu0 0
    %690 = vmatpush2.bf16.msra.mxu0 0
    %691 = vmatprep.subr.bf16.mxu0 0
    %692 = vmatpush2.bf16.msra.mxu0 0
    %693 = vmatprep.subr.bf16.mxu0 0
    %694 = vmatpush2.bf16.msra.mxu0 0
    %695 = vmatprep.subr.bf16.mxu0 0
    %696 = vmatpush2.bf16.msra.mxu0 0
    %697 = vmatprep.mubr.bf16.mxu0 0
    %698 = vmatmul.mubr.bf16.gmra.mxu0 %v610
    %v699 = vpop.f32.mrf.mxu0
    %v700 = vadd.f32 0.0, %v699
    %v701 = vpop.f32.mrf.mxu0
    %v702 = vadd.f32 0.0, %v701
    %v703 = vpop.f32.mrf.mxu0
    %v704 = vpop.f32.mrf.mxu0
    %705 = vdwg.mxu0
    %v706 = vadd.f32 %v603, %v659
    %v707 = vadd.f32 %v604, %v661
    %v708 = vadd.f32 %v605, %v700
    %v709 = vadd.f32 %v606, %v702
    %710 = vrot.lane.b32.xlu0 %v37, 127
    %v711 = vpop.permute.xlu0 %710
    %712 = vrot.lane.b32.xlu0 %v38, 127
    %v713 = vpop.permute.xlu0 %712
    %714 = vrot.lane.b32.xlu0 %v39, 127
    %v715 = vpop.permute.xlu0 %714
    %716 = vrot.lane.b32.xlu0 %v40, 127
    %v717 = vpop.permute.xlu0 %716
    %vm718 = vcmp.lt.s32.totalorder %v61, 127
    %v719 = vsel %vm718, %v715, %v717
    %v720 = vsel %vm718, %v713, %v715
    %v721 = vsel %vm718, %v711, %v713
    %v722 = vsel %vm718, %v717, %v711
    %v723 = vlaneseq
    %v724 = vshrl.u32 %v723, 7
    %v725 = vsub.s32 4, %v724
    %v726 = vrot.slane %v45, %v725
    %v727 = vlaneseq
    %v728 = vshrl.u32 %v727, 7
    %v729 = vsub.s32 4, %v728
    %v730 = vrot.slane %v46, %v729
    %v731 = vlaneseq
    %v732 = vshrl.u32 %v731, 7
    %v733 = vsub.s32 4, %v732
    %v734 = vrot.slane %v47, %v733
    %v735 = vlaneseq
    %v736 = vshrl.u32 %v735, 7
    %v737 = vsub.s32 4, %v736
    %v738 = vrot.slane %v48, %v737
    %v739 = vmul.f32 %v721, %v726
    %v740 = vmul.f32 %v720, %v730
    %v741 = vmul.f32 %v719, %v734
    %v742 = vmul.f32 %v722, %v738
    %v743 = vpack.c.bf16 %v739, %v739
    %v744 = vpack.c.bf16 %v740, %v740
    %v745 = vpack.c.bf16 %v741, %v741
    %v746 = vpack.c.bf16 %v742, %v742
    %s747 = scalar_lea.vmem %s2, 20
    %v748 = vld [vmem:[%s747] sm:$0xf]
    %v750 = vsel %vm131, %v748, 0
    %v753 = vsel %vm135, %v743, 0
    %v756 = vsel %vm135, %v744, 0
    %v759 = vsel %vm135, %v745, 0
    %v762 = vsel %vm135, %v746, 0
    %764 = vmatprep.subr.bf16.mxu0 0
    %765 = vmatpush1.bf16.msra.mxu0 0
    %766 = vmatprep.subr.bf16.mxu0 0
    %767 = vmatpush1.bf16.msra.mxu0 0
    %768 = vmatprep.subr.bf16.mxu0 0
    %769 = vmatpush1.bf16.msra.mxu0 0
    %770 = vmatprep.subr.bf16.mxu0 0
    %771 = vmatpush1.bf16.msra.mxu0 0
    %772 = vmatprep.subr.bf16.mxu0 0
    %773 = vmatpush1.bf16.msra.mxu0 0
    %774 = vmatprep.subr.bf16.mxu0 0
    %775 = vmatpush1.bf16.msra.mxu0 0
    %776 = vmatprep.subr.bf16.mxu0 0
    %777 = vmatpush1.bf16.msra.mxu0 0
    %778 = vmatprep.subr.bf16.mxu0 %v756
    %779 = vmatpush1.bf16.msra.mxu0 %v753
    %780 = vmatprep.subr.bf16.mxu0 0
    %781 = vmatpush2.bf16.msra.mxu0 0
    %782 = vmatprep.subr.bf16.mxu0 0
    %783 = vmatpush2.bf16.msra.mxu0 0
    %784 = vmatprep.subr.bf16.mxu0 0
    %785 = vmatpush2.bf16.msra.mxu0 0
    %786 = vmatprep.subr.bf16.mxu0 0
    %787 = vmatpush2.bf16.msra.mxu0 0
    %788 = vmatprep.subr.bf16.mxu0 0
    %789 = vmatpush2.bf16.msra.mxu0 0
    %790 = vmatprep.subr.bf16.mxu0 0
    %791 = vmatpush2.bf16.msra.mxu0 0
    %792 = vmatprep.subr.bf16.mxu0 0
    %793 = vmatpush2.bf16.msra.mxu0 0
    %794 = vmatprep.subr.bf16.mxu0 0
    %795 = vmatpush2.bf16.msra.mxu0 0
    %796 = vmatprep.mubr.bf16.mxu0 0
    %797 = vmatmul.mubr.bf16.gmra.mxu0 %v750
    %v798 = vpop.f32.mrf.mxu0
    %v799 = vadd.f32 0.0, %v798
    %v800 = vpop.f32.mrf.mxu0
    %v801 = vadd.f32 0.0, %v800
    %v802 = vpop.f32.mrf.mxu0
    %v803 = vpop.f32.mrf.mxu0
    %804 = vdwg.mxu0
    %805 = vmatprep.subr.bf16.mxu0 0
    %806 = vmatpush1.bf16.msra.mxu0 0
    %807 = vmatprep.subr.bf16.mxu0 0
    %808 = vmatpush1.bf16.msra.mxu0 0
    %809 = vmatprep.subr.bf16.mxu0 0
    %810 = vmatpush1.bf16.msra.mxu0 0
    %811 = vmatprep.subr.bf16.mxu0 0
    %812 = vmatpush1.bf16.msra.mxu0 0
    %813 = vmatprep.subr.bf16.mxu0 0
    %814 = vmatpush1.bf16.msra.mxu0 0
    %815 = vmatprep.subr.bf16.mxu0 0
    %816 = vmatpush1.bf16.msra.mxu0 0
    %817 = vmatprep.subr.bf16.mxu0 0
    %818 = vmatpush1.bf16.msra.mxu0 0
    %819 = vmatprep.subr.bf16.mxu0 %v762
    %820 = vmatpush1.bf16.msra.mxu0 %v759
    %821 = vmatprep.subr.bf16.mxu0 0
    %822 = vmatpush2.bf16.msra.mxu0 0
    %823 = vmatprep.subr.bf16.mxu0 0
    %824 = vmatpush2.bf16.msra.mxu0 0
    %825 = vmatprep.subr.bf16.mxu0 0
    %826 = vmatpush2.bf16.msra.mxu0 0
    %827 = vmatprep.subr.bf16.mxu0 0
    %828 = vmatpush2.bf16.msra.mxu0 0
    %829 = vmatprep.subr.bf16.mxu0 0
    %830 = vmatpush2.bf16.msra.mxu0 0
    %831 = vmatprep.subr.bf16.mxu0 0
    %832 = vmatpush2.bf16.msra.mxu0 0
    %833 = vmatprep.subr.bf16.mxu0 0
    %834 = vmatpush2.bf16.msra.mxu0 0
    %835 = vmatprep.subr.bf16.mxu0 0
    %836 = vmatpush2.bf16.msra.mxu0 0
    %837 = vmatprep.mubr.bf16.mxu0 0
    %838 = vmatmul.mubr.bf16.gmra.mxu0 %v750
    %v839 = vpop.f32.mrf.mxu0
    %v840 = vadd.f32 0.0, %v839
    %v841 = vpop.f32.mrf.mxu0
    %v842 = vadd.f32 0.0, %v841
    %v843 = vpop.f32.mrf.mxu0
    %v844 = vpop.f32.mrf.mxu0
    %845 = vdwg.mxu0
    %v846 = vadd.f32 %v706, %v799
    %v847 = vadd.f32 %v707, %v801
    %v848 = vadd.f32 %v708, %v840
    %v849 = vadd.f32 %v709, %v842
    %850 = vrot.lane.b32.xlu0 %v37, 113
    %v851 = vpop.permute.xlu0 %850
    %852 = vrot.lane.b32.xlu0 %v38, 113
    %v853 = vpop.permute.xlu0 %852
    %854 = vrot.lane.b32.xlu0 %v39, 113
    %v855 = vpop.permute.xlu0 %854
    %856 = vrot.lane.b32.xlu0 %v40, 113
    %v857 = vpop.permute.xlu0 %856
    %vm858 = vcmp.lt.s32.totalorder %v61, 113
    %v859 = vsel %vm858, %v855, %v857
    %v860 = vsel %vm858, %v853, %v855
    %v861 = vsel %vm858, %v851, %v853
    %v862 = vsel %vm858, %v857, %v851
    %v863 = vlaneseq
    %v864 = vshrl.u32 %v863, 7
    %v865 = vsub.s32 5, %v864
    %v866 = vrot.slane %v45, %v865
    %v867 = vlaneseq
    %v868 = vshrl.u32 %v867, 7
    %v869 = vsub.s32 5, %v868
    %v870 = vrot.slane %v46, %v869
    %v871 = vlaneseq
    %v872 = vshrl.u32 %v871, 7
    %v873 = vsub.s32 5, %v872
    %v874 = vrot.slane %v47, %v873
    %v875 = vlaneseq
    %v876 = vshrl.u32 %v875, 7
    %v877 = vsub.s32 5, %v876
    %v878 = vrot.slane %v48, %v877
    %v879 = vmul.f32 %v861, %v866
    %v880 = vmul.f32 %v860, %v870
    %v881 = vmul.f32 %v859, %v874
    %v882 = vmul.f32 %v862, %v878
    %v883 = vpack.c.bf16 %v879, %v879
    %v884 = vpack.c.bf16 %v880, %v880
    %v885 = vpack.c.bf16 %v881, %v881
    %v886 = vpack.c.bf16 %v882, %v882
    %s887 = scalar_lea.vmem %s2, 24
    %v888 = vld [vmem:[%s887] sm:$0xf]
    %v890 = vsel %vm131, %v888, 0
    %v893 = vsel %vm135, %v883, 0
    %v896 = vsel %vm135, %v884, 0
    %v899 = vsel %vm135, %v885, 0
    %v902 = vsel %vm135, %v886, 0
    %904 = vmatprep.subr.bf16.mxu0 0
    %905 = vmatpush1.bf16.msra.mxu0 0
    %906 = vmatprep.subr.bf16.mxu0 0
    %907 = vmatpush1.bf16.msra.mxu0 0
    %908 = vmatprep.subr.bf16.mxu0 0
    %909 = vmatpush1.bf16.msra.mxu0 0
    %910 = vmatprep.subr.bf16.mxu0 0
    %911 = vmatpush1.bf16.msra.mxu0 0
    %912 = vmatprep.subr.bf16.mxu0 0
    %913 = vmatpush1.bf16.msra.mxu0 0
    %914 = vmatprep.subr.bf16.mxu0 0
    %915 = vmatpush1.bf16.msra.mxu0 0
    %916 = vmatprep.subr.bf16.mxu0 0
    %917 = vmatpush1.bf16.msra.mxu0 0
    %918 = vmatprep.subr.bf16.mxu0 %v896
    %919 = vmatpush1.bf16.msra.mxu0 %v893
    %920 = vmatprep.subr.bf16.mxu0 0
    %921 = vmatpush2.bf16.msra.mxu0 0
    %922 = vmatprep.subr.bf16.mxu0 0
    %923 = vmatpush2.bf16.msra.mxu0 0
    %924 = vmatprep.subr.bf16.mxu0 0
    %925 = vmatpush2.bf16.msra.mxu0 0
    %926 = vmatprep.subr.bf16.mxu0 0
    %927 = vmatpush2.bf16.msra.mxu0 0
    %928 = vmatprep.subr.bf16.mxu0 0
    %929 = vmatpush2.bf16.msra.mxu0 0
    %930 = vmatprep.subr.bf16.mxu0 0
    %931 = vmatpush2.bf16.msra.mxu0 0
    %932 = vmatprep.subr.bf16.mxu0 0
    %933 = vmatpush2.bf16.msra.mxu0 0
    %934 = vmatprep.subr.bf16.mxu0 0
    %935 = vmatpush2.bf16.msra.mxu0 0
    %936 = vmatprep.mubr.bf16.mxu0 0
    %937 = vmatmul.mubr.bf16.gmra.mxu0 %v890
    %v938 = vpop.f32.mrf.mxu0
    %v939 = vadd.f32 0.0, %v938
    %v940 = vpop.f32.mrf.mxu0
    %v941 = vadd.f32 0.0, %v940
    %v942 = vpop.f32.mrf.mxu0
    %v943 = vpop.f32.mrf.mxu0
    %944 = vdwg.mxu0
    %945 = vmatprep.subr.bf16.mxu0 0
    %946 = vmatpush1.bf16.msra.mxu0 0
    %947 = vmatprep.subr.bf16.mxu0 0
    %948 = vmatpush1.bf16.msra.mxu0 0
    %949 = vmatprep.subr.bf16.mxu0 0
    %950 = vmatpush1.bf16.msra.mxu0 0
    %951 = vmatprep.subr.bf16.mxu0 0
    %952 = vmatpush1.bf16.msra.mxu0 0
    %953 = vmatprep.subr.bf16.mxu0 0
    %954 = vmatpush1.bf16.msra.mxu0 0
    %955 = vmatprep.subr.bf16.mxu0 0
    %956 = vmatpush1.bf16.msra.mxu0 0
    %957 = vmatprep.subr.bf16.mxu0 0
    %958 = vmatpush1.bf16.msra.mxu0 0
    %959 = vmatprep.subr.bf16.mxu0 %v902
    %960 = vmatpush1.bf16.msra.mxu0 %v899
    %961 = vmatprep.subr.bf16.mxu0 0
    %962 = vmatpush2.bf16.msra.mxu0 0
    %963 = vmatprep.subr.bf16.mxu0 0
    %964 = vmatpush2.bf16.msra.mxu0 0
    %965 = vmatprep.subr.bf16.mxu0 0
    %966 = vmatpush2.bf16.msra.mxu0 0
    %967 = vmatprep.subr.bf16.mxu0 0
    %968 = vmatpush2.bf16.msra.mxu0 0
    %969 = vmatprep.subr.bf16.mxu0 0
    %970 = vmatpush2.bf16.msra.mxu0 0
    %971 = vmatprep.subr.bf16.mxu0 0
    %972 = vmatpush2.bf16.msra.mxu0 0
    %973 = vmatprep.subr.bf16.mxu0 0
    %974 = vmatpush2.bf16.msra.mxu0 0
    %975 = vmatprep.subr.bf16.mxu0 0
    %976 = vmatpush2.bf16.msra.mxu0 0
    %977 = vmatprep.mubr.bf16.mxu0 0
    %978 = vmatmul.mubr.bf16.gmra.mxu0 %v890
    %v979 = vpop.f32.mrf.mxu0
    %v980 = vadd.f32 0.0, %v979
    %v981 = vpop.f32.mrf.mxu0
    %v982 = vadd.f32 0.0, %v981
    %v983 = vpop.f32.mrf.mxu0
    %v984 = vpop.f32.mrf.mxu0
    %985 = vdwg.mxu0
    %v986 = vadd.f32 %v846, %v939
    %v987 = vadd.f32 %v847, %v941
    %v988 = vadd.f32 %v848, %v980
    %v989 = vadd.f32 %v849, %v982
    %990 = vrot.lane.b32.xlu0 %v37, 112
    %v991 = vpop.permute.xlu0 %990
    %992 = vrot.lane.b32.xlu0 %v38, 112
    %v993 = vpop.permute.xlu0 %992
    %994 = vrot.lane.b32.xlu0 %v39, 112
    %v995 = vpop.permute.xlu0 %994
    %996 = vrot.lane.b32.xlu0 %v40, 112
    %v997 = vpop.permute.xlu0 %996
    %vm998 = vcmp.lt.s32.totalorder %v61, 112
    %v999 = vsel %vm998, %v995, %v997
    %v1000 = vsel %vm998, %v993, %v995
    %v1001 = vsel %vm998, %v991, %v993
    %v1002 = vsel %vm998, %v997, %v991
    %v1003 = vlaneseq
    %v1004 = vshrl.u32 %v1003, 7
    %v1005 = vsub.s32 6, %v1004
    %v1006 = vrot.slane %v45, %v1005
    %v1007 = vlaneseq
    %v1008 = vshrl.u32 %v1007, 7
    %v1009 = vsub.s32 6, %v1008
    %v1010 = vrot.slane %v46, %v1009
    %v1011 = vlaneseq
    %v1012 = vshrl.u32 %v1011, 7
    %v1013 = vsub.s32 6, %v1012
    %v1014 = vrot.slane %v47, %v1013
    %v1015 = vlaneseq
    %v1016 = vshrl.u32 %v1015, 7
    %v1017 = vsub.s32 6, %v1016
    %v1018 = vrot.slane %v48, %v1017
    %v1019 = vmul.f32 %v1001, %v1006
    %v1020 = vmul.f32 %v1000, %v1010
    %v1021 = vmul.f32 %v999, %v1014
    %v1022 = vmul.f32 %v1002, %v1018
    %v1023 = vpack.c.bf16 %v1019, %v1019
    %v1024 = vpack.c.bf16 %v1020, %v1020
    %v1025 = vpack.c.bf16 %v1021, %v1021
    %v1026 = vpack.c.bf16 %v1022, %v1022
    %s1027 = scalar_lea.vmem %s2, 28
    %v1028 = vld [vmem:[%s1027] sm:$0xf]
    %v1030 = vsel %vm131, %v1028, 0
    %v1033 = vsel %vm135, %v1023, 0
    %v1036 = vsel %vm135, %v1024, 0
    %v1039 = vsel %vm135, %v1025, 0
    %v1042 = vsel %vm135, %v1026, 0
    %1044 = vmatprep.subr.bf16.mxu0 0
    %1045 = vmatpush1.bf16.msra.mxu0 0
    %1046 = vmatprep.subr.bf16.mxu0 0
    %1047 = vmatpush1.bf16.msra.mxu0 0
    %1048 = vmatprep.subr.bf16.mxu0 0
    %1049 = vmatpush1.bf16.msra.mxu0 0
    %1050 = vmatprep.subr.bf16.mxu0 0
    %1051 = vmatpush1.bf16.msra.mxu0 0
    %1052 = vmatprep.subr.bf16.mxu0 0
    %1053 = vmatpush1.bf16.msra.mxu0 0
    %1054 = vmatprep.subr.bf16.mxu0 0
    %1055 = vmatpush1.bf16.msra.mxu0 0
    %1056 = vmatprep.subr.bf16.mxu0 0
    %1057 = vmatpush1.bf16.msra.mxu0 0
    %1058 = vmatprep.subr.bf16.mxu0 %v1036
    %1059 = vmatpush1.bf16.msra.mxu0 %v1033
    %1060 = vmatprep.subr.bf16.mxu0 0
    %1061 = vmatpush2.bf16.msra.mxu0 0
    %1062 = vmatprep.subr.bf16.mxu0 0
    %1063 = vmatpush2.bf16.msra.mxu0 0
    %1064 = vmatprep.subr.bf16.mxu0 0
    %1065 = vmatpush2.bf16.msra.mxu0 0
    %1066 = vmatprep.subr.bf16.mxu0 0
    %1067 = vmatpush2.bf16.msra.mxu0 0
    %1068 = vmatprep.subr.bf16.mxu0 0
    %1069 = vmatpush2.bf16.msra.mxu0 0
    %1070 = vmatprep.subr.bf16.mxu0 0
    %1071 = vmatpush2.bf16.msra.mxu0 0
    %1072 = vmatprep.subr.bf16.mxu0 0
    %1073 = vmatpush2.bf16.msra.mxu0 0
    %1074 = vmatprep.subr.bf16.mxu0 0
    %1075 = vmatpush2.bf16.msra.mxu0 0
    %1076 = vmatprep.mubr.bf16.mxu0 0
    %1077 = vmatmul.mubr.bf16.gmra.mxu0 %v1030
    %v1078 = vpop.f32.mrf.mxu0
    %v1079 = vadd.f32 0.0, %v1078
    %v1080 = vpop.f32.mrf.mxu0
    %v1081 = vadd.f32 0.0, %v1080
    %v1082 = vpop.f32.mrf.mxu0
    %v1083 = vpop.f32.mrf.mxu0
    %1084 = vdwg.mxu0
    %1085 = vmatprep.subr.bf16.mxu0 0
    %1086 = vmatpush1.bf16.msra.mxu0 0
    %1087 = vmatprep.subr.bf16.mxu0 0
    %1088 = vmatpush1.bf16.msra.mxu0 0
    %1089 = vmatprep.subr.bf16.mxu0 0
    %1090 = vmatpush1.bf16.msra.mxu0 0
    %1091 = vmatprep.subr.bf16.mxu0 0
    %1092 = vmatpush1.bf16.msra.mxu0 0
    %1093 = vmatprep.subr.bf16.mxu0 0
    %1094 = vmatpush1.bf16.msra.mxu0 0
    %1095 = vmatprep.subr.bf16.mxu0 0
    %1096 = vmatpush1.bf16.msra.mxu0 0
    %1097 = vmatprep.subr.bf16.mxu0 0
    %1098 = vmatpush1.bf16.msra.mxu0 0
    %1099 = vmatprep.subr.bf16.mxu0 %v1042
    %1100 = vmatpush1.bf16.msra.mxu0 %v1039
    %1101 = vmatprep.subr.bf16.mxu0 0
    %1102 = vmatpush2.bf16.msra.mxu0 0
    %1103 = vmatprep.subr.bf16.mxu0 0
    %1104 = vmatpush2.bf16.msra.mxu0 0
    %1105 = vmatprep.subr.bf16.mxu0 0
    %1106 = vmatpush2.bf16.msra.mxu0 0
    %1107 = vmatprep.subr.bf16.mxu0 0
    %1108 = vmatpush2.bf16.msra.mxu0 0
    %1109 = vmatprep.subr.bf16.mxu0 0
    %1110 = vmatpush2.bf16.msra.mxu0 0
    %1111 = vmatprep.subr.bf16.mxu0 0
    %1112 = vmatpush2.bf16.msra.mxu0 0
    %1113 = vmatprep.subr.bf16.mxu0 0
    %1114 = vmatpush2.bf16.msra.mxu0 0
    %1115 = vmatprep.subr.bf16.mxu0 0
    %1116 = vmatpush2.bf16.msra.mxu0 0
    %1117 = vmatprep.mubr.bf16.mxu0 0
    %1118 = vmatmul.mubr.bf16.gmra.mxu0 %v1030
    %v1119 = vpop.f32.mrf.mxu0
    %v1120 = vadd.f32 0.0, %v1119
    %v1121 = vpop.f32.mrf.mxu0
    %v1122 = vadd.f32 0.0, %v1121
    %v1123 = vpop.f32.mrf.mxu0
    %v1124 = vpop.f32.mrf.mxu0
    %1125 = vdwg.mxu0
    %v1126 = vadd.f32 %v986, %v1079
    %v1127 = vadd.f32 %v987, %v1081
    %v1128 = vadd.f32 %v988, %v1120
    %v1129 = vadd.f32 %v989, %v1122
    %1130 = vrot.lane.b32.xlu0 %v37, 111
    %v1131 = vpop.permute.xlu0 %1130
    %1132 = vrot.lane.b32.xlu0 %v38, 111
    %v1133 = vpop.permute.xlu0 %1132
    %1134 = vrot.lane.b32.xlu0 %v39, 111
    %v1135 = vpop.permute.xlu0 %1134
    %1136 = vrot.lane.b32.xlu0 %v40, 111
    %v1137 = vpop.permute.xlu0 %1136
    %vm1138 = vcmp.lt.s32.totalorder %v61, 111
    %v1139 = vsel %vm1138, %v1135, %v1137
    %v1140 = vsel %vm1138, %v1133, %v1135
    %v1141 = vsel %vm1138, %v1131, %v1133
    %v1142 = vsel %vm1138, %v1137, %v1131
    %v1143 = vlaneseq
    %v1144 = vshrl.u32 %v1143, 7
    %v1145 = vsub.s32 7, %v1144
    %v1146 = vrot.slane %v45, %v1145
    %v1147 = vlaneseq
    %v1148 = vshrl.u32 %v1147, 7
    %v1149 = vsub.s32 7, %v1148
    %v1150 = vrot.slane %v46, %v1149
    %v1151 = vlaneseq
    %v1152 = vshrl.u32 %v1151, 7
    %v1153 = vsub.s32 7, %v1152
    %v1154 = vrot.slane %v47, %v1153
    %v1155 = vlaneseq
    %v1156 = vshrl.u32 %v1155, 7
    %v1157 = vsub.s32 7, %v1156
    %v1158 = vrot.slane %v48, %v1157
    %v1159 = vmul.f32 %v1141, %v1146
    %v1160 = vmul.f32 %v1140, %v1150
    %v1161 = vmul.f32 %v1139, %v1154
    %v1162 = vmul.f32 %v1142, %v1158
    %v1163 = vpack.c.bf16 %v1159, %v1159
    %v1164 = vpack.c.bf16 %v1160, %v1160
    %v1165 = vpack.c.bf16 %v1161, %v1161
    %v1166 = vpack.c.bf16 %v1162, %v1162
    %s1167 = scalar_lea.vmem %s2, 32
    %v1168 = vld [vmem:[%s1167] sm:$0xf]
    %v1170 = vsel %vm131, %v1168, 0
    %v1173 = vsel %vm135, %v1163, 0
    %v1176 = vsel %vm135, %v1164, 0
    %v1179 = vsel %vm135, %v1165, 0
    %v1182 = vsel %vm135, %v1166, 0
    %1184 = vmatprep.subr.bf16.mxu0 0
    %1185 = vmatpush1.bf16.msra.mxu0 0
    %1186 = vmatprep.subr.bf16.mxu0 0
    %1187 = vmatpush1.bf16.msra.mxu0 0
    %1188 = vmatprep.subr.bf16.mxu0 0
    %1189 = vmatpush1.bf16.msra.mxu0 0
    %1190 = vmatprep.subr.bf16.mxu0 0
    %1191 = vmatpush1.bf16.msra.mxu0 0
    %1192 = vmatprep.subr.bf16.mxu0 0
    %1193 = vmatpush1.bf16.msra.mxu0 0
    %1194 = vmatprep.subr.bf16.mxu0 0
    %1195 = vmatpush1.bf16.msra.mxu0 0
    %1196 = vmatprep.subr.bf16.mxu0 0
    %1197 = vmatpush1.bf16.msra.mxu0 0
    %1198 = vmatprep.subr.bf16.mxu0 %v1176
    %1199 = vmatpush1.bf16.msra.mxu0 %v1173
    %1200 = vmatprep.subr.bf16.mxu0 0
    %1201 = vmatpush2.bf16.msra.mxu0 0
    %1202 = vmatprep.subr.bf16.mxu0 0
    %1203 = vmatpush2.bf16.msra.mxu0 0
    %1204 = vmatprep.subr.bf16.mxu0 0
    %1205 = vmatpush2.bf16.msra.mxu0 0
    %1206 = vmatprep.subr.bf16.mxu0 0
    %1207 = vmatpush2.bf16.msra.mxu0 0
    %1208 = vmatprep.subr.bf16.mxu0 0
    %1209 = vmatpush2.bf16.msra.mxu0 0
    %1210 = vmatprep.subr.bf16.mxu0 0
    %1211 = vmatpush2.bf16.msra.mxu0 0
    %1212 = vmatprep.subr.bf16.mxu0 0
    %1213 = vmatpush2.bf16.msra.mxu0 0
    %1214 = vmatprep.subr.bf16.mxu0 0
    %1215 = vmatpush2.bf16.msra.mxu0 0
    %1216 = vmatprep.mubr.bf16.mxu0 0
    %1217 = vmatmul.mubr.bf16.gmra.mxu0 %v1170
    %v1218 = vpop.f32.mrf.mxu0
    %v1219 = vadd.f32 0.0, %v1218
    %v1220 = vpop.f32.mrf.mxu0
    %v1221 = vadd.f32 0.0, %v1220
    %v1222 = vpop.f32.mrf.mxu0
    %v1223 = vpop.f32.mrf.mxu0
    %1224 = vdwg.mxu0
    %1225 = vmatprep.subr.bf16.mxu0 0
    %1226 = vmatpush1.bf16.msra.mxu0 0
    %1227 = vmatprep.subr.bf16.mxu0 0
    %1228 = vmatpush1.bf16.msra.mxu0 0
    %1229 = vmatprep.subr.bf16.mxu0 0
    %1230 = vmatpush1.bf16.msra.mxu0 0
    %1231 = vmatprep.subr.bf16.mxu0 0
    %1232 = vmatpush1.bf16.msra.mxu0 0
    %1233 = vmatprep.subr.bf16.mxu0 0
    %1234 = vmatpush1.bf16.msra.mxu0 0
    %1235 = vmatprep.subr.bf16.mxu0 0
    %1236 = vmatpush1.bf16.msra.mxu0 0
    %1237 = vmatprep.subr.bf16.mxu0 0
    %1238 = vmatpush1.bf16.msra.mxu0 0
    %1239 = vmatprep.subr.bf16.mxu0 %v1182
    %1240 = vmatpush1.bf16.msra.mxu0 %v1179
    %1241 = vmatprep.subr.bf16.mxu0 0
    %1242 = vmatpush2.bf16.msra.mxu0 0
    %1243 = vmatprep.subr.bf16.mxu0 0
    %1244 = vmatpush2.bf16.msra.mxu0 0
    %1245 = vmatprep.subr.bf16.mxu0 0
    %1246 = vmatpush2.bf16.msra.mxu0 0
    %1247 = vmatprep.subr.bf16.mxu0 0
    %1248 = vmatpush2.bf16.msra.mxu0 0
    %1249 = vmatprep.subr.bf16.mxu0 0
    %1250 = vmatpush2.bf16.msra.mxu0 0
    %1251 = vmatprep.subr.bf16.mxu0 0
    %1252 = vmatpush2.bf16.msra.mxu0 0
    %1253 = vmatprep.subr.bf16.mxu0 0
    %1254 = vmatpush2.bf16.msra.mxu0 0
    %1255 = vmatprep.subr.bf16.mxu0 0
    %1256 = vmatpush2.bf16.msra.mxu0 0
    %1257 = vmatprep.mubr.bf16.mxu0 0
    %1258 = vmatmul.mubr.bf16.gmra.mxu0 %v1170
    %v1259 = vpop.f32.mrf.mxu0
    %v1260 = vadd.f32 0.0, %v1259
    %v1261 = vpop.f32.mrf.mxu0
    %v1262 = vadd.f32 0.0, %v1261
    %v1263 = vpop.f32.mrf.mxu0
    %v1264 = vpop.f32.mrf.mxu0
    %1265 = vdwg.mxu0
    %v1266 = vadd.f32 %v1126, %v1219
    %v1267 = vadd.f32 %v1127, %v1221
    %v1268 = vadd.f32 %v1128, %v1260
    %v1269 = vadd.f32 %v1129, %v1262
    %1271 = vset.pattern.permute.xlu0 0
    %1272 = vperm.xlu0 %1271, %v50
    %v1273 = vpop.permute.xlu0 %1272
    %v1275 = vmul.f32 %v1266, %v1273
    %v1276 = vmul.f32 %v1267, %v1273
    %v1277 = vmul.f32 %v1268, %v1273
    %v1278 = vmul.f32 %v1269, %v1273
    %1279 = vset.pattern.permute.xlu0 1
    %1280 = vperm.xlu0 %1279, %v50
    %v1281 = vpop.permute.xlu0 %1280
    %v1283 = vadd.f32 %v1275, %v1281
    %v1284 = vadd.f32 %v1276, %v1281
    %v1285 = vadd.f32 %v1277, %v1281
    %v1286 = vadd.f32 %v1278, %v1281
    %v1287 = vmax.f32 %v1283, 0.0
    %v1288 = vmax.f32 %v1284, 0.0
    %v1289 = vmax.f32 %v1285, 0.0
    %v1290 = vmax.f32 %v1286, 0.0
    %v1291 = vpack.c.bf16 %v1287, %v1287
    %v1292 = vpack.c.bf16 %v1288, %v1288
    %v1293 = vpack.c.bf16 %v1289, %v1289
    %v1294 = vpack.c.bf16 %v1290, %v1290
    %1295 = vrot.lane.b32.xlu0 %v1287, 17
    %v1296 = vpop.permute.xlu0 %1295
    %1297 = vrot.lane.b32.xlu0 %v1288, 17
    %v1298 = vpop.permute.xlu0 %1297
    %1299 = vrot.lane.b32.xlu0 %v1289, 17
    %v1300 = vpop.permute.xlu0 %1299
    %1301 = vrot.lane.b32.xlu0 %v1290, 17
    %v1302 = vpop.permute.xlu0 %1301
    %v1303 = vsel %vm62, %v1300, %v1302
    %v1304 = vsel %vm62, %v1298, %v1300
    %v1305 = vsel %vm62, %v1296, %v1298
    %v1306 = vsel %vm62, %v1302, %v1296
    %v1307 = vmul.f32 %v1306, %v70
    %v1308 = vmul.f32 %v1305, %v74
    %v1309 = vmul.f32 %v1304, %v78
    %v1310 = vmul.f32 %v1303, %v82
    %v1311 = vpack.c.bf16 %v1307, %v1307
    %v1312 = vpack.c.bf16 %v1308, %v1308
    %v1313 = vpack.c.bf16 %v1309, %v1309
    %v1314 = vpack.c.bf16 %v1310, %v1310
    %v1315 = vld [vmem:[%s3] sm:$0xf]
    %1316 = vrot.lane.b32.xlu0 %v1287, 16
    %v1317 = vpop.permute.xlu0 %1316
    %1318 = vrot.lane.b32.xlu0 %v1288, 16
    %v1319 = vpop.permute.xlu0 %1318
    %1320 = vrot.lane.b32.xlu0 %v1289, 16
    %v1321 = vpop.permute.xlu0 %1320
    %1322 = vrot.lane.b32.xlu0 %v1290, 16
    %v1323 = vpop.permute.xlu0 %1322
    %v1324 = vsel %vm100, %v1321, %v1323
    %v1325 = vsel %vm100, %v1319, %v1321
    %v1326 = vsel %vm100, %v1317, %v1319
    %v1327 = vsel %vm100, %v1323, %v1317
    %v1328 = vmul.f32 %v1327, %v108
    %v1329 = vmul.f32 %v1326, %v112
    %v1330 = vmul.f32 %v1325, %v116
    %v1331 = vmul.f32 %v1324, %v120
    %v1332 = vpack.c.bf16 %v1328, %v1328
    %v1333 = vpack.c.bf16 %v1329, %v1329
    %v1334 = vpack.c.bf16 %v1330, %v1330
    %v1335 = vpack.c.bf16 %v1331, %v1331
    %s1336 = scalar_lea.vmem %s3, 4
    %v1337 = vld [vmem:[%s1336] sm:$0xf]
    %v1339 = vsel %vm131, %v1337, 0
    %v1342 = vsel %vm135, %v1332, 0
    %v1345 = vsel %vm135, %v1333, 0
    %v1348 = vsel %vm135, %v1334, 0
    %v1351 = vsel %vm135, %v1335, 0
    %1353 = vmatprep.subr.bf16.mxu0 0
    %1354 = vmatpush1.bf16.msra.mxu0 0
    %1355 = vmatprep.subr.bf16.mxu0 0
    %1356 = vmatpush1.bf16.msra.mxu0 0
    %1357 = vmatprep.subr.bf16.mxu0 0
    %1358 = vmatpush1.bf16.msra.mxu0 0
    %1359 = vmatprep.subr.bf16.mxu0 0
    %1360 = vmatpush1.bf16.msra.mxu0 0
    %1361 = vmatprep.subr.bf16.mxu0 0
    %1362 = vmatpush1.bf16.msra.mxu0 0
    %1363 = vmatprep.subr.bf16.mxu0 0
    %1364 = vmatpush1.bf16.msra.mxu0 0
    %1365 = vmatprep.subr.bf16.mxu0 0
    %1366 = vmatpush1.bf16.msra.mxu0 0
    %1367 = vmatprep.subr.bf16.mxu0 %v1345
    %1368 = vmatpush1.bf16.msra.mxu0 %v1342
    %1369 = vmatprep.subr.bf16.mxu0 0
    %1370 = vmatpush2.bf16.msra.mxu0 0
    %1371 = vmatprep.subr.bf16.mxu0 0
    %1372 = vmatpush2.bf16.msra.mxu0 0
    %1373 = vmatprep.subr.bf16.mxu0 0
    %1374 = vmatpush2.bf16.msra.mxu0 0
    %1375 = vmatprep.subr.bf16.mxu0 0
    %1376 = vmatpush2.bf16.msra.mxu0 0
    %1377 = vmatprep.subr.bf16.mxu0 0
    %1378 = vmatpush2.bf16.msra.mxu0 0
    %1379 = vmatprep.subr.bf16.mxu0 0
    %1380 = vmatpush2.bf16.msra.mxu0 0
    %1381 = vmatprep.subr.bf16.mxu0 0
    %1382 = vmatpush2.bf16.msra.mxu0 0
    %1383 = vmatprep.subr.bf16.mxu0 0
    %1384 = vmatpush2.bf16.msra.mxu0 0
    %1385 = vmatprep.mubr.bf16.mxu0 0
    %1386 = vmatmul.mubr.bf16.gmra.mxu0 %v1339
    %v1387 = vpop.f32.mrf.mxu0
    %v1388 = vadd.f32 0.0, %v1387
    %v1389 = vpop.f32.mrf.mxu0
    %v1390 = vadd.f32 0.0, %v1389
    %v1391 = vpop.f32.mrf.mxu0
    %v1392 = vpop.f32.mrf.mxu0
    %1393 = vdwg.mxu0
    %1394 = vmatprep.subr.bf16.mxu0 0
    %1395 = vmatpush1.bf16.msra.mxu0 0
    %1396 = vmatprep.subr.bf16.mxu0 0
    %1397 = vmatpush1.bf16.msra.mxu0 0
    %1398 = vmatprep.subr.bf16.mxu0 0
    %1399 = vmatpush1.bf16.msra.mxu0 0
    %1400 = vmatprep.subr.bf16.mxu0 0
    %1401 = vmatpush1.bf16.msra.mxu0 0
    %1402 = vmatprep.subr.bf16.mxu0 0
    %1403 = vmatpush1.bf16.msra.mxu0 0
    %1404 = vmatprep.subr.bf16.mxu0 0
    %1405 = vmatpush1.bf16.msra.mxu0 0
    %1406 = vmatprep.subr.bf16.mxu0 0
    %1407 = vmatpush1.bf16.msra.mxu0 0
    %1408 = vmatprep.subr.bf16.mxu0 %v1351
    %1409 = vmatpush1.bf16.msra.mxu0 %v1348
    %1410 = vmatprep.subr.bf16.mxu0 0
    %1411 = vmatpush2.bf16.msra.mxu0 0
    %1412 = vmatprep.subr.bf16.mxu0 0
    %1413 = vmatpush2.bf16.msra.mxu0 0
    %1414 = vmatprep.subr.bf16.mxu0 0
    %1415 = vmatpush2.bf16.msra.mxu0 0
    %1416 = vmatprep.subr.bf16.mxu0 0
    %1417 = vmatpush2.bf16.msra.mxu0 0
    %1418 = vmatprep.subr.bf16.mxu0 0
    %1419 = vmatpush2.bf16.msra.mxu0 0
    %1420 = vmatprep.subr.bf16.mxu0 0
    %1421 = vmatpush2.bf16.msra.mxu0 0
    %1422 = vmatprep.subr.bf16.mxu0 0
    %1423 = vmatpush2.bf16.msra.mxu0 0
    %1424 = vmatprep.subr.bf16.mxu0 0
    %1425 = vmatpush2.bf16.msra.mxu0 0
    %1426 = vmatprep.mubr.bf16.mxu0 0
    %1427 = vmatmul.mubr.bf16.gmra.mxu0 %v1339
    %v1428 = vpop.f32.mrf.mxu0
    %v1429 = vadd.f32 0.0, %v1428
    %v1430 = vpop.f32.mrf.mxu0
    %v1431 = vadd.f32 0.0, %v1430
    %v1432 = vpop.f32.mrf.mxu0
    %v1433 = vpop.f32.mrf.mxu0
    %1434 = vdwg.mxu0
    %v1436 = vsel %vm131, %v1315, 0
    %v1439 = vsel %vm135, %v1311, 0
    %v1442 = vsel %vm135, %v1312, 0
    %v1445 = vsel %vm135, %v1313, 0
    %v1448 = vsel %vm135, %v1314, 0
    %1450 = vmatprep.subr.bf16.mxu0 0
    %1451 = vmatpush1.bf16.msra.mxu0 0
    %1452 = vmatprep.subr.bf16.mxu0 0
    %1453 = vmatpush1.bf16.msra.mxu0 0
    %1454 = vmatprep.subr.bf16.mxu0 0
    %1455 = vmatpush1.bf16.msra.mxu0 0
    %1456 = vmatprep.subr.bf16.mxu0 0
    %1457 = vmatpush1.bf16.msra.mxu0 0
    %1458 = vmatprep.subr.bf16.mxu0 0
    %1459 = vmatpush1.bf16.msra.mxu0 0
    %1460 = vmatprep.subr.bf16.mxu0 0
    %1461 = vmatpush1.bf16.msra.mxu0 0
    %1462 = vmatprep.subr.bf16.mxu0 0
    %1463 = vmatpush1.bf16.msra.mxu0 0
    %1464 = vmatprep.subr.bf16.mxu0 %v1442
    %1465 = vmatpush1.bf16.msra.mxu0 %v1439
    %1466 = vmatprep.subr.bf16.mxu0 0
    %1467 = vmatpush2.bf16.msra.mxu0 0
    %1468 = vmatprep.subr.bf16.mxu0 0
    %1469 = vmatpush2.bf16.msra.mxu0 0
    %1470 = vmatprep.subr.bf16.mxu0 0
    %1471 = vmatpush2.bf16.msra.mxu0 0
    %1472 = vmatprep.subr.bf16.mxu0 0
    %1473 = vmatpush2.bf16.msra.mxu0 0
    %1474 = vmatprep.subr.bf16.mxu0 0
    %1475 = vmatpush2.bf16.msra.mxu0 0
    %1476 = vmatprep.subr.bf16.mxu0 0
    %1477 = vmatpush2.bf16.msra.mxu0 0
    %1478 = vmatprep.subr.bf16.mxu0 0
    %1479 = vmatpush2.bf16.msra.mxu0 0
    %1480 = vmatprep.subr.bf16.mxu0 0
    %1481 = vmatpush2.bf16.msra.mxu0 0
    %1482 = vmatprep.mubr.bf16.mxu0 0
    %1483 = vmatmul.mubr.bf16.gmra.mxu0 %v1436
    %v1484 = vpop.f32.mrf.mxu0
    %v1485 = vadd.f32 %v1388, %v1484
    %v1486 = vpop.f32.mrf.mxu0
    %v1487 = vadd.f32 %v1390, %v1486
    %v1488 = vpop.f32.mrf.mxu0
    %v1489 = vpop.f32.mrf.mxu0
    %1490 = vdwg.mxu0
    %1491 = vmatprep.subr.bf16.mxu0 0
    %1492 = vmatpush1.bf16.msra.mxu0 0
    %1493 = vmatprep.subr.bf16.mxu0 0
    %1494 = vmatpush1.bf16.msra.mxu0 0
    %1495 = vmatprep.subr.bf16.mxu0 0
    %1496 = vmatpush1.bf16.msra.mxu0 0
    %1497 = vmatprep.subr.bf16.mxu0 0
    %1498 = vmatpush1.bf16.msra.mxu0 0
    %1499 = vmatprep.subr.bf16.mxu0 0
    %1500 = vmatpush1.bf16.msra.mxu0 0
    %1501 = vmatprep.subr.bf16.mxu0 0
    %1502 = vmatpush1.bf16.msra.mxu0 0
    %1503 = vmatprep.subr.bf16.mxu0 0
    %1504 = vmatpush1.bf16.msra.mxu0 0
    %1505 = vmatprep.subr.bf16.mxu0 %v1448
    %1506 = vmatpush1.bf16.msra.mxu0 %v1445
    %1507 = vmatprep.subr.bf16.mxu0 0
    %1508 = vmatpush2.bf16.msra.mxu0 0
    %1509 = vmatprep.subr.bf16.mxu0 0
    %1510 = vmatpush2.bf16.msra.mxu0 0
    %1511 = vmatprep.subr.bf16.mxu0 0
    %1512 = vmatpush2.bf16.msra.mxu0 0
    %1513 = vmatprep.subr.bf16.mxu0 0
    %1514 = vmatpush2.bf16.msra.mxu0 0
    %1515 = vmatprep.subr.bf16.mxu0 0
    %1516 = vmatpush2.bf16.msra.mxu0 0
    %1517 = vmatprep.subr.bf16.mxu0 0
    %1518 = vmatpush2.bf16.msra.mxu0 0
    %1519 = vmatprep.subr.bf16.mxu0 0
    %1520 = vmatpush2.bf16.msra.mxu0 0
    %1521 = vmatprep.subr.bf16.mxu0 0
    %1522 = vmatpush2.bf16.msra.mxu0 0
    %1523 = vmatprep.mubr.bf16.mxu0 0
    %1524 = vmatmul.mubr.bf16.gmra.mxu0 %v1436
    %v1525 = vpop.f32.mrf.mxu0
    %v1526 = vadd.f32 %v1429, %v1525
    %v1527 = vpop.f32.mrf.mxu0
    %v1528 = vadd.f32 %v1431, %v1527
    %v1529 = vpop.f32.mrf.mxu0
    %v1530 = vpop.f32.mrf.mxu0
    %1531 = vdwg.mxu0
    %1532 = vrot.lane.b32.xlu0 %v1287, 15
    %v1533 = vpop.permute.xlu0 %1532
    %1534 = vrot.lane.b32.xlu0 %v1288, 15
    %v1535 = vpop.permute.xlu0 %1534
    %1536 = vrot.lane.b32.xlu0 %v1289, 15
    %v1537 = vpop.permute.xlu0 %1536
    %1538 = vrot.lane.b32.xlu0 %v1290, 15
    %v1539 = vpop.permute.xlu0 %1538
    %v1540 = vsel %vm335, %v1537, %v1539
    %v1541 = vsel %vm335, %v1535, %v1537
    %v1542 = vsel %vm335, %v1533, %v1535
    %v1543 = vsel %vm335, %v1539, %v1533
    %v1544 = vmul.f32 %v1543, %v343
    %v1545 = vmul.f32 %v1542, %v347
    %v1546 = vmul.f32 %v1541, %v351
    %v1547 = vmul.f32 %v1540, %v355
    %v1548 = vpack.c.bf16 %v1544, %v1544
    %v1549 = vpack.c.bf16 %v1545, %v1545
    %v1550 = vpack.c.bf16 %v1546, %v1546
    %v1551 = vpack.c.bf16 %v1547, %v1547
    %s1552 = scalar_lea.vmem %s3, 8
    %v1553 = vld [vmem:[%s1552] sm:$0xf]
    %v1555 = vsel %vm131, %v1553, 0
    %v1558 = vsel %vm135, %v1548, 0
    %v1561 = vsel %vm135, %v1549, 0
    %v1564 = vsel %vm135, %v1550, 0
    %v1567 = vsel %vm135, %v1551, 0
    %1569 = vmatprep.subr.bf16.mxu0 0
    %1570 = vmatpush1.bf16.msra.mxu0 0
    %1571 = vmatprep.subr.bf16.mxu0 0
    %1572 = vmatpush1.bf16.msra.mxu0 0
    %1573 = vmatprep.subr.bf16.mxu0 0
    %1574 = vmatpush1.bf16.msra.mxu0 0
    %1575 = vmatprep.subr.bf16.mxu0 0
    %1576 = vmatpush1.bf16.msra.mxu0 0
    %1577 = vmatprep.subr.bf16.mxu0 0
    %1578 = vmatpush1.bf16.msra.mxu0 0
    %1579 = vmatprep.subr.bf16.mxu0 0
    %1580 = vmatpush1.bf16.msra.mxu0 0
    %1581 = vmatprep.subr.bf16.mxu0 0
    %1582 = vmatpush1.bf16.msra.mxu0 0
    %1583 = vmatprep.subr.bf16.mxu0 %v1561
    %1584 = vmatpush1.bf16.msra.mxu0 %v1558
    %1585 = vmatprep.subr.bf16.mxu0 0
    %1586 = vmatpush2.bf16.msra.mxu0 0
    %1587 = vmatprep.subr.bf16.mxu0 0
    %1588 = vmatpush2.bf16.msra.mxu0 0
    %1589 = vmatprep.subr.bf16.mxu0 0
    %1590 = vmatpush2.bf16.msra.mxu0 0
    %1591 = vmatprep.subr.bf16.mxu0 0
    %1592 = vmatpush2.bf16.msra.mxu0 0
    %1593 = vmatprep.subr.bf16.mxu0 0
    %1594 = vmatpush2.bf16.msra.mxu0 0
    %1595 = vmatprep.subr.bf16.mxu0 0
    %1596 = vmatpush2.bf16.msra.mxu0 0
    %1597 = vmatprep.subr.bf16.mxu0 0
    %1598 = vmatpush2.bf16.msra.mxu0 0
    %1599 = vmatprep.subr.bf16.mxu0 0
    %1600 = vmatpush2.bf16.msra.mxu0 0
    %1601 = vmatprep.mubr.bf16.mxu0 0
    %1602 = vmatmul.mubr.bf16.gmra.mxu0 %v1555
    %v1603 = vpop.f32.mrf.mxu0
    %v1604 = vadd.f32 0.0, %v1603
    %v1605 = vpop.f32.mrf.mxu0
    %v1606 = vadd.f32 0.0, %v1605
    %v1607 = vpop.f32.mrf.mxu0
    %v1608 = vpop.f32.mrf.mxu0
    %1609 = vdwg.mxu0
    %1610 = vmatprep.subr.bf16.mxu0 0
    %1611 = vmatpush1.bf16.msra.mxu0 0
    %1612 = vmatprep.subr.bf16.mxu0 0
    %1613 = vmatpush1.bf16.msra.mxu0 0
    %1614 = vmatprep.subr.bf16.mxu0 0
    %1615 = vmatpush1.bf16.msra.mxu0 0
    %1616 = vmatprep.subr.bf16.mxu0 0
    %1617 = vmatpush1.bf16.msra.mxu0 0
    %1618 = vmatprep.subr.bf16.mxu0 0
    %1619 = vmatpush1.bf16.msra.mxu0 0
    %1620 = vmatprep.subr.bf16.mxu0 0
    %1621 = vmatpush1.bf16.msra.mxu0 0
    %1622 = vmatprep.subr.bf16.mxu0 0
    %1623 = vmatpush1.bf16.msra.mxu0 0
    %1624 = vmatprep.subr.bf16.mxu0 %v1567
    %1625 = vmatpush1.bf16.msra.mxu0 %v1564
    %1626 = vmatprep.subr.bf16.mxu0 0
    %1627 = vmatpush2.bf16.msra.mxu0 0
    %1628 = vmatprep.subr.bf16.mxu0 0
    %1629 = vmatpush2.bf16.msra.mxu0 0
    %1630 = vmatprep.subr.bf16.mxu0 0
    %1631 = vmatpush2.bf16.msra.mxu0 0
    %1632 = vmatprep.subr.bf16.mxu0 0
    %1633 = vmatpush2.bf16.msra.mxu0 0
    %1634 = vmatprep.subr.bf16.mxu0 0
    %1635 = vmatpush2.bf16.msra.mxu0 0
    %1636 = vmatprep.subr.bf16.mxu0 0
    %1637 = vmatpush2.bf16.msra.mxu0 0
    %1638 = vmatprep.subr.bf16.mxu0 0
    %1639 = vmatpush2.bf16.msra.mxu0 0
    %1640 = vmatprep.subr.bf16.mxu0 0
    %1641 = vmatpush2.bf16.msra.mxu0 0
    %1642 = vmatprep.mubr.bf16.mxu0 0
    %1643 = vmatmul.mubr.bf16.gmra.mxu0 %v1555
    %v1644 = vpop.f32.mrf.mxu0
    %v1645 = vadd.f32 0.0, %v1644
    %v1646 = vpop.f32.mrf.mxu0
    %v1647 = vadd.f32 0.0, %v1646
    %v1648 = vpop.f32.mrf.mxu0
    %v1649 = vpop.f32.mrf.mxu0
    %1650 = vdwg.mxu0
    %v1651 = vadd.f32 %v1485, %v1604
    %v1652 = vadd.f32 %v1487, %v1606
    %v1653 = vadd.f32 %v1526, %v1645
    %v1654 = vadd.f32 %v1528, %v1647
    %1655 = vrot.lane.b32.xlu0 %v1287, 1
    %v1656 = vpop.permute.xlu0 %1655
    %1657 = vrot.lane.b32.xlu0 %v1288, 1
    %v1658 = vpop.permute.xlu0 %1657
    %1659 = vrot.lane.b32.xlu0 %v1289, 1
    %v1660 = vpop.permute.xlu0 %1659
    %1661 = vrot.lane.b32.xlu0 %v1290, 1
    %v1662 = vpop.permute.xlu0 %1661
    %v1663 = vsel %vm475, %v1660, %v1662
    %v1664 = vsel %vm475, %v1658, %v1660
    %v1665 = vsel %vm475, %v1656, %v1658
    %v1666 = vsel %vm475, %v1662, %v1656
    %v1667 = vmul.f32 %v1666, %v483
    %v1668 = vmul.f32 %v1665, %v487
    %v1669 = vmul.f32 %v1664, %v491
    %v1670 = vmul.f32 %v1663, %v495
    %v1671 = vpack.c.bf16 %v1667, %v1667
    %v1672 = vpack.c.bf16 %v1668, %v1668
    %v1673 = vpack.c.bf16 %v1669, %v1669
    %v1674 = vpack.c.bf16 %v1670, %v1670
    %s1675 = scalar_lea.vmem %s3, 12
    %v1676 = vld [vmem:[%s1675] sm:$0xf]
    %v1678 = vsel %vm131, %v1676, 0
    %v1681 = vsel %vm135, %v1671, 0
    %v1684 = vsel %vm135, %v1672, 0
    %v1687 = vsel %vm135, %v1673, 0
    %v1690 = vsel %vm135, %v1674, 0
    %1692 = vmatprep.subr.bf16.mxu0 0
    %1693 = vmatpush1.bf16.msra.mxu0 0
    %1694 = vmatprep.subr.bf16.mxu0 0
    %1695 = vmatpush1.bf16.msra.mxu0 0
    %1696 = vmatprep.subr.bf16.mxu0 0
    %1697 = vmatpush1.bf16.msra.mxu0 0
    %1698 = vmatprep.subr.bf16.mxu0 0
    %1699 = vmatpush1.bf16.msra.mxu0 0
    %1700 = vmatprep.subr.bf16.mxu0 0
    %1701 = vmatpush1.bf16.msra.mxu0 0
    %1702 = vmatprep.subr.bf16.mxu0 0
    %1703 = vmatpush1.bf16.msra.mxu0 0
    %1704 = vmatprep.subr.bf16.mxu0 0
    %1705 = vmatpush1.bf16.msra.mxu0 0
    %1706 = vmatprep.subr.bf16.mxu0 %v1684
    %1707 = vmatpush1.bf16.msra.mxu0 %v1681
    %1708 = vmatprep.subr.bf16.mxu0 0
    %1709 = vmatpush2.bf16.msra.mxu0 0
    %1710 = vmatprep.subr.bf16.mxu0 0
    %1711 = vmatpush2.bf16.msra.mxu0 0
    %1712 = vmatprep.subr.bf16.mxu0 0
    %1713 = vmatpush2.bf16.msra.mxu0 0
    %1714 = vmatprep.subr.bf16.mxu0 0
    %1715 = vmatpush2.bf16.msra.mxu0 0
    %1716 = vmatprep.subr.bf16.mxu0 0
    %1717 = vmatpush2.bf16.msra.mxu0 0
    %1718 = vmatprep.subr.bf16.mxu0 0
    %1719 = vmatpush2.bf16.msra.mxu0 0
    %1720 = vmatprep.subr.bf16.mxu0 0
    %1721 = vmatpush2.bf16.msra.mxu0 0
    %1722 = vmatprep.subr.bf16.mxu0 0
    %1723 = vmatpush2.bf16.msra.mxu0 0
    %1724 = vmatprep.mubr.bf16.mxu0 0
    %1725 = vmatmul.mubr.bf16.gmra.mxu0 %v1678
    %v1726 = vpop.f32.mrf.mxu0
    %v1727 = vadd.f32 0.0, %v1726
    %v1728 = vpop.f32.mrf.mxu0
    %v1729 = vadd.f32 0.0, %v1728
    %v1730 = vpop.f32.mrf.mxu0
    %v1731 = vpop.f32.mrf.mxu0
    %1732 = vdwg.mxu0
    %1733 = vmatprep.subr.bf16.mxu0 0
    %1734 = vmatpush1.bf16.msra.mxu0 0
    %1735 = vmatprep.subr.bf16.mxu0 0
    %1736 = vmatpush1.bf16.msra.mxu0 0
    %1737 = vmatprep.subr.bf16.mxu0 0
    %1738 = vmatpush1.bf16.msra.mxu0 0
    %1739 = vmatprep.subr.bf16.mxu0 0
    %1740 = vmatpush1.bf16.msra.mxu0 0
    %1741 = vmatprep.subr.bf16.mxu0 0
    %1742 = vmatpush1.bf16.msra.mxu0 0
    %1743 = vmatprep.subr.bf16.mxu0 0
    %1744 = vmatpush1.bf16.msra.mxu0 0
    %1745 = vmatprep.subr.bf16.mxu0 0
    %1746 = vmatpush1.bf16.msra.mxu0 0
    %1747 = vmatprep.subr.bf16.mxu0 %v1690
    %1748 = vmatpush1.bf16.msra.mxu0 %v1687
    %1749 = vmatprep.subr.bf16.mxu0 0
    %1750 = vmatpush2.bf16.msra.mxu0 0
    %1751 = vmatprep.subr.bf16.mxu0 0
    %1752 = vmatpush2.bf16.msra.mxu0 0
    %1753 = vmatprep.subr.bf16.mxu0 0
    %1754 = vmatpush2.bf16.msra.mxu0 0
    %1755 = vmatprep.subr.bf16.mxu0 0
    %1756 = vmatpush2.bf16.msra.mxu0 0
    %1757 = vmatprep.subr.bf16.mxu0 0
    %1758 = vmatpush2.bf16.msra.mxu0 0
    %1759 = vmatprep.subr.bf16.mxu0 0
    %1760 = vmatpush2.bf16.msra.mxu0 0
    %1761 = vmatprep.subr.bf16.mxu0 0
    %1762 = vmatpush2.bf16.msra.mxu0 0
    %1763 = vmatprep.subr.bf16.mxu0 0
    %1764 = vmatpush2.bf16.msra.mxu0 0
    %1765 = vmatprep.mubr.bf16.mxu0 0
    %1766 = vmatmul.mubr.bf16.gmra.mxu0 %v1678
    %v1767 = vpop.f32.mrf.mxu0
    %v1768 = vadd.f32 0.0, %v1767
    %v1769 = vpop.f32.mrf.mxu0
    %v1770 = vadd.f32 0.0, %v1769
    %v1771 = vpop.f32.mrf.mxu0
    %v1772 = vpop.f32.mrf.mxu0
    %1773 = vdwg.mxu0
    %v1774 = vadd.f32 %v1651, %v1727
    %v1775 = vadd.f32 %v1652, %v1729
    %v1776 = vadd.f32 %v1653, %v1768
    %v1777 = vadd.f32 %v1654, %v1770
    %s1778 = scalar_lea.vmem %s3, 16
    %v1779 = vld [vmem:[%s1778] sm:$0xf]
    %v1781 = vsel %vm131, %v1779, 0
    %v1784 = vsel %vm135, %v1291, 0
    %v1787 = vsel %vm135, %v1292, 0
    %v1790 = vsel %vm135, %v1293, 0
    %v1793 = vsel %vm135, %v1294, 0
    %1795 = vmatprep.subr.bf16.mxu0 0
    %1796 = vmatpush1.bf16.msra.mxu0 0
    %1797 = vmatprep.subr.bf16.mxu0 0
    %1798 = vmatpush1.bf16.msra.mxu0 0
    %1799 = vmatprep.subr.bf16.mxu0 0
    %1800 = vmatpush1.bf16.msra.mxu0 0
    %1801 = vmatprep.subr.bf16.mxu0 0
    %1802 = vmatpush1.bf16.msra.mxu0 0
    %1803 = vmatprep.subr.bf16.mxu0 0
    %1804 = vmatpush1.bf16.msra.mxu0 0
    %1805 = vmatprep.subr.bf16.mxu0 0
    %1806 = vmatpush1.bf16.msra.mxu0 0
    %1807 = vmatprep.subr.bf16.mxu0 0
    %1808 = vmatpush1.bf16.msra.mxu0 0
    %1809 = vmatprep.subr.bf16.mxu0 %v1787
    %1810 = vmatpush1.bf16.msra.mxu0 %v1784
    %1811 = vmatprep.subr.bf16.mxu0 0
    %1812 = vmatpush2.bf16.msra.mxu0 0
    %1813 = vmatprep.subr.bf16.mxu0 0
    %1814 = vmatpush2.bf16.msra.mxu0 0
    %1815 = vmatprep.subr.bf16.mxu0 0
    %1816 = vmatpush2.bf16.msra.mxu0 0
    %1817 = vmatprep.subr.bf16.mxu0 0
    %1818 = vmatpush2.bf16.msra.mxu0 0
    %1819 = vmatprep.subr.bf16.mxu0 0
    %1820 = vmatpush2.bf16.msra.mxu0 0
    %1821 = vmatprep.subr.bf16.mxu0 0
    %1822 = vmatpush2.bf16.msra.mxu0 0
    %1823 = vmatprep.subr.bf16.mxu0 0
    %1824 = vmatpush2.bf16.msra.mxu0 0
    %1825 = vmatprep.subr.bf16.mxu0 0
    %1826 = vmatpush2.bf16.msra.mxu0 0
    %1827 = vmatprep.mubr.bf16.mxu0 0
    %1828 = vmatmul.mubr.bf16.gmra.mxu0 %v1781
    %v1829 = vpop.f32.mrf.mxu0
    %v1830 = vadd.f32 0.0, %v1829
    %v1831 = vpop.f32.mrf.mxu0
    %v1832 = vadd.f32 0.0, %v1831
    %v1833 = vpop.f32.mrf.mxu0
    %v1834 = vpop.f32.mrf.mxu0
    %1835 = vdwg.mxu0
    %1836 = vmatprep.subr.bf16.mxu0 0
    %1837 = vmatpush1.bf16.msra.mxu0 0
    %1838 = vmatprep.subr.bf16.mxu0 0
    %1839 = vmatpush1.bf16.msra.mxu0 0
    %1840 = vmatprep.subr.bf16.mxu0 0
    %1841 = vmatpush1.bf16.msra.mxu0 0
    %1842 = vmatprep.subr.bf16.mxu0 0
    %1843 = vmatpush1.bf16.msra.mxu0 0
    %1844 = vmatprep.subr.bf16.mxu0 0
    %1845 = vmatpush1.bf16.msra.mxu0 0
    %1846 = vmatprep.subr.bf16.mxu0 0
    %1847 = vmatpush1.bf16.msra.mxu0 0
    %1848 = vmatprep.subr.bf16.mxu0 0
    %1849 = vmatpush1.bf16.msra.mxu0 0
    %1850 = vmatprep.subr.bf16.mxu0 %v1793
    %1851 = vmatpush1.bf16.msra.mxu0 %v1790
    %1852 = vmatprep.subr.bf16.mxu0 0
    %1853 = vmatpush2.bf16.msra.mxu0 0
    %1854 = vmatprep.subr.bf16.mxu0 0
    %1855 = vmatpush2.bf16.msra.mxu0 0
    %1856 = vmatprep.subr.bf16.mxu0 0
    %1857 = vmatpush2.bf16.msra.mxu0 0
    %1858 = vmatprep.subr.bf16.mxu0 0
    %1859 = vmatpush2.bf16.msra.mxu0 0
    %1860 = vmatprep.subr.bf16.mxu0 0
    %1861 = vmatpush2.bf16.msra.mxu0 0
    %1862 = vmatprep.subr.bf16.mxu0 0
    %1863 = vmatpush2.bf16.msra.mxu0 0
    %1864 = vmatprep.subr.bf16.mxu0 0
    %1865 = vmatpush2.bf16.msra.mxu0 0
    %1866 = vmatprep.subr.bf16.mxu0 0
    %1867 = vmatpush2.bf16.msra.mxu0 0
    %1868 = vmatprep.mubr.bf16.mxu0 0
    %1869 = vmatmul.mubr.bf16.gmra.mxu0 %v1781
    %v1870 = vpop.f32.mrf.mxu0
    %v1871 = vadd.f32 0.0, %v1870
    %v1872 = vpop.f32.mrf.mxu0
    %v1873 = vadd.f32 0.0, %v1872
    %v1874 = vpop.f32.mrf.mxu0
    %v1875 = vpop.f32.mrf.mxu0
    %1876 = vdwg.mxu0
    %v1877 = vadd.f32 %v1774, %v1830
    %v1878 = vadd.f32 %v1775, %v1832
    %v1879 = vadd.f32 %v1776, %v1871
    %v1880 = vadd.f32 %v1777, %v1873
    %1881 = vrot.lane.b32.xlu0 %v1287, 127
    %v1882 = vpop.permute.xlu0 %1881
    %1883 = vrot.lane.b32.xlu0 %v1288, 127
    %v1884 = vpop.permute.xlu0 %1883
    %1885 = vrot.lane.b32.xlu0 %v1289, 127
    %v1886 = vpop.permute.xlu0 %1885
    %1887 = vrot.lane.b32.xlu0 %v1290, 127
    %v1888 = vpop.permute.xlu0 %1887
    %v1889 = vsel %vm718, %v1886, %v1888
    %v1890 = vsel %vm718, %v1884, %v1886
    %v1891 = vsel %vm718, %v1882, %v1884
    %v1892 = vsel %vm718, %v1888, %v1882
    %v1893 = vmul.f32 %v1891, %v726
    %v1894 = vmul.f32 %v1890, %v730
    %v1895 = vmul.f32 %v1889, %v734
    %v1896 = vmul.f32 %v1892, %v738
    %v1897 = vpack.c.bf16 %v1893, %v1893
    %v1898 = vpack.c.bf16 %v1894, %v1894
    %v1899 = vpack.c.bf16 %v1895, %v1895
    %v1900 = vpack.c.bf16 %v1896, %v1896
    %s1901 = scalar_lea.vmem %s3, 20
    %v1902 = vld [vmem:[%s1901] sm:$0xf]
    %v1904 = vsel %vm131, %v1902, 0
    %v1907 = vsel %vm135, %v1897, 0
    %v1910 = vsel %vm135, %v1898, 0
    %v1913 = vsel %vm135, %v1899, 0
    %v1916 = vsel %vm135, %v1900, 0
    %1918 = vmatprep.subr.bf16.mxu0 0
    %1919 = vmatpush1.bf16.msra.mxu0 0
    %1920 = vmatprep.subr.bf16.mxu0 0
    %1921 = vmatpush1.bf16.msra.mxu0 0
    %1922 = vmatprep.subr.bf16.mxu0 0
    %1923 = vmatpush1.bf16.msra.mxu0 0
    %1924 = vmatprep.subr.bf16.mxu0 0
    %1925 = vmatpush1.bf16.msra.mxu0 0
    %1926 = vmatprep.subr.bf16.mxu0 0
    %1927 = vmatpush1.bf16.msra.mxu0 0
    %1928 = vmatprep.subr.bf16.mxu0 0
    %1929 = vmatpush1.bf16.msra.mxu0 0
    %1930 = vmatprep.subr.bf16.mxu0 0
    %1931 = vmatpush1.bf16.msra.mxu0 0
    %1932 = vmatprep.subr.bf16.mxu0 %v1910
    %1933 = vmatpush1.bf16.msra.mxu0 %v1907
    %1934 = vmatprep.subr.bf16.mxu0 0
    %1935 = vmatpush2.bf16.msra.mxu0 0
    %1936 = vmatprep.subr.bf16.mxu0 0
    %1937 = vmatpush2.bf16.msra.mxu0 0
    %1938 = vmatprep.subr.bf16.mxu0 0
    %1939 = vmatpush2.bf16.msra.mxu0 0
    %1940 = vmatprep.subr.bf16.mxu0 0
    %1941 = vmatpush2.bf16.msra.mxu0 0
    %1942 = vmatprep.subr.bf16.mxu0 0
    %1943 = vmatpush2.bf16.msra.mxu0 0
    %1944 = vmatprep.subr.bf16.mxu0 0
    %1945 = vmatpush2.bf16.msra.mxu0 0
    %1946 = vmatprep.subr.bf16.mxu0 0
    %1947 = vmatpush2.bf16.msra.mxu0 0
    %1948 = vmatprep.subr.bf16.mxu0 0
    %1949 = vmatpush2.bf16.msra.mxu0 0
    %1950 = vmatprep.mubr.bf16.mxu0 0
    %1951 = vmatmul.mubr.bf16.gmra.mxu0 %v1904
    %v1952 = vpop.f32.mrf.mxu0
    %v1953 = vadd.f32 0.0, %v1952
    %v1954 = vpop.f32.mrf.mxu0
    %v1955 = vadd.f32 0.0, %v1954
    %v1956 = vpop.f32.mrf.mxu0
    %v1957 = vpop.f32.mrf.mxu0
    %1958 = vdwg.mxu0
    %1959 = vmatprep.subr.bf16.mxu0 0
    %1960 = vmatpush1.bf16.msra.mxu0 0
    %1961 = vmatprep.subr.bf16.mxu0 0
    %1962 = vmatpush1.bf16.msra.mxu0 0
    %1963 = vmatprep.subr.bf16.mxu0 0
    %1964 = vmatpush1.bf16.msra.mxu0 0
    %1965 = vmatprep.subr.bf16.mxu0 0
    %1966 = vmatpush1.bf16.msra.mxu0 0
    %1967 = vmatprep.subr.bf16.mxu0 0
    %1968 = vmatpush1.bf16.msra.mxu0 0
    %1969 = vmatprep.subr.bf16.mxu0 0
    %1970 = vmatpush1.bf16.msra.mxu0 0
    %1971 = vmatprep.subr.bf16.mxu0 0
    %1972 = vmatpush1.bf16.msra.mxu0 0
    %1973 = vmatprep.subr.bf16.mxu0 %v1916
    %1974 = vmatpush1.bf16.msra.mxu0 %v1913
    %1975 = vmatprep.subr.bf16.mxu0 0
    %1976 = vmatpush2.bf16.msra.mxu0 0
    %1977 = vmatprep.subr.bf16.mxu0 0
    %1978 = vmatpush2.bf16.msra.mxu0 0
    %1979 = vmatprep.subr.bf16.mxu0 0
    %1980 = vmatpush2.bf16.msra.mxu0 0
    %1981 = vmatprep.subr.bf16.mxu0 0
    %1982 = vmatpush2.bf16.msra.mxu0 0
    %1983 = vmatprep.subr.bf16.mxu0 0
    %1984 = vmatpush2.bf16.msra.mxu0 0
    %1985 = vmatprep.subr.bf16.mxu0 0
    %1986 = vmatpush2.bf16.msra.mxu0 0
    %1987 = vmatprep.subr.bf16.mxu0 0
    %1988 = vmatpush2.bf16.msra.mxu0 0
    %1989 = vmatprep.subr.bf16.mxu0 0
    %1990 = vmatpush2.bf16.msra.mxu0 0
    %1991 = vmatprep.mubr.bf16.mxu0 0
    %1992 = vmatmul.mubr.bf16.gmra.mxu0 %v1904
    %v1993 = vpop.f32.mrf.mxu0
    %v1994 = vadd.f32 0.0, %v1993
    %v1995 = vpop.f32.mrf.mxu0
    %v1996 = vadd.f32 0.0, %v1995
    %v1997 = vpop.f32.mrf.mxu0
    %v1998 = vpop.f32.mrf.mxu0
    %1999 = vdwg.mxu0
    %v2000 = vadd.f32 %v1877, %v1953
    %v2001 = vadd.f32 %v1878, %v1955
    %v2002 = vadd.f32 %v1879, %v1994
    %v2003 = vadd.f32 %v1880, %v1996
    %2004 = vrot.lane.b32.xlu0 %v1287, 113
    %v2005 = vpop.permute.xlu0 %2004
    %2006 = vrot.lane.b32.xlu0 %v1288, 113
    %v2007 = vpop.permute.xlu0 %2006
    %2008 = vrot.lane.b32.xlu0 %v1289, 113
    %v2009 = vpop.permute.xlu0 %2008
    %2010 = vrot.lane.b32.xlu0 %v1290, 113
    %v2011 = vpop.permute.xlu0 %2010
    %v2012 = vsel %vm858, %v2009, %v2011
    %v2013 = vsel %vm858, %v2007, %v2009
    %v2014 = vsel %vm858, %v2005, %v2007
    %v2015 = vsel %vm858, %v2011, %v2005
    %v2016 = vmul.f32 %v2014, %v866
    %v2017 = vmul.f32 %v2013, %v870
    %v2018 = vmul.f32 %v2012, %v874
    %v2019 = vmul.f32 %v2015, %v878
    %v2020 = vpack.c.bf16 %v2016, %v2016
    %v2021 = vpack.c.bf16 %v2017, %v2017
    %v2022 = vpack.c.bf16 %v2018, %v2018
    %v2023 = vpack.c.bf16 %v2019, %v2019
    %s2024 = scalar_lea.vmem %s3, 24
    %v2025 = vld [vmem:[%s2024] sm:$0xf]
    %v2027 = vsel %vm131, %v2025, 0
    %v2030 = vsel %vm135, %v2020, 0
    %v2033 = vsel %vm135, %v2021, 0
    %v2036 = vsel %vm135, %v2022, 0
    %v2039 = vsel %vm135, %v2023, 0
    %2041 = vmatprep.subr.bf16.mxu0 0
    %2042 = vmatpush1.bf16.msra.mxu0 0
    %2043 = vmatprep.subr.bf16.mxu0 0
    %2044 = vmatpush1.bf16.msra.mxu0 0
    %2045 = vmatprep.subr.bf16.mxu0 0
    %2046 = vmatpush1.bf16.msra.mxu0 0
    %2047 = vmatprep.subr.bf16.mxu0 0
    %2048 = vmatpush1.bf16.msra.mxu0 0
    %2049 = vmatprep.subr.bf16.mxu0 0
    %2050 = vmatpush1.bf16.msra.mxu0 0
    %2051 = vmatprep.subr.bf16.mxu0 0
    %2052 = vmatpush1.bf16.msra.mxu0 0
    %2053 = vmatprep.subr.bf16.mxu0 0
    %2054 = vmatpush1.bf16.msra.mxu0 0
    %2055 = vmatprep.subr.bf16.mxu0 %v2033
    %2056 = vmatpush1.bf16.msra.mxu0 %v2030
    %2057 = vmatprep.subr.bf16.mxu0 0
    %2058 = vmatpush2.bf16.msra.mxu0 0
    %2059 = vmatprep.subr.bf16.mxu0 0
    %2060 = vmatpush2.bf16.msra.mxu0 0
    %2061 = vmatprep.subr.bf16.mxu0 0
    %2062 = vmatpush2.bf16.msra.mxu0 0
    %2063 = vmatprep.subr.bf16.mxu0 0
    %2064 = vmatpush2.bf16.msra.mxu0 0
    %2065 = vmatprep.subr.bf16.mxu0 0
    %2066 = vmatpush2.bf16.msra.mxu0 0
    %2067 = vmatprep.subr.bf16.mxu0 0
    %2068 = vmatpush2.bf16.msra.mxu0 0
    %2069 = vmatprep.subr.bf16.mxu0 0
    %2070 = vmatpush2.bf16.msra.mxu0 0
    %2071 = vmatprep.subr.bf16.mxu0 0
    %2072 = vmatpush2.bf16.msra.mxu0 0
    %2073 = vmatprep.mubr.bf16.mxu0 0
    %2074 = vmatmul.mubr.bf16.gmra.mxu0 %v2027
    %v2075 = vpop.f32.mrf.mxu0
    %v2076 = vadd.f32 0.0, %v2075
    %v2077 = vpop.f32.mrf.mxu0
    %v2078 = vadd.f32 0.0, %v2077
    %v2079 = vpop.f32.mrf.mxu0
    %v2080 = vpop.f32.mrf.mxu0
    %2081 = vdwg.mxu0
    %2082 = vmatprep.subr.bf16.mxu0 0
    %2083 = vmatpush1.bf16.msra.mxu0 0
    %2084 = vmatprep.subr.bf16.mxu0 0
    %2085 = vmatpush1.bf16.msra.mxu0 0
    %2086 = vmatprep.subr.bf16.mxu0 0
    %2087 = vmatpush1.bf16.msra.mxu0 0
    %2088 = vmatprep.subr.bf16.mxu0 0
    %2089 = vmatpush1.bf16.msra.mxu0 0
    %2090 = vmatprep.subr.bf16.mxu0 0
    %2091 = vmatpush1.bf16.msra.mxu0 0
    %2092 = vmatprep.subr.bf16.mxu0 0
    %2093 = vmatpush1.bf16.msra.mxu0 0
    %2094 = vmatprep.subr.bf16.mxu0 0
    %2095 = vmatpush1.bf16.msra.mxu0 0
    %2096 = vmatprep.subr.bf16.mxu0 %v2039
    %2097 = vmatpush1.bf16.msra.mxu0 %v2036
    %2098 = vmatprep.subr.bf16.mxu0 0
    %2099 = vmatpush2.bf16.msra.mxu0 0
    %2100 = vmatprep.subr.bf16.mxu0 0
    %2101 = vmatpush2.bf16.msra.mxu0 0
    %2102 = vmatprep.subr.bf16.mxu0 0
    %2103 = vmatpush2.bf16.msra.mxu0 0
    %2104 = vmatprep.subr.bf16.mxu0 0
    %2105 = vmatpush2.bf16.msra.mxu0 0
    %2106 = vmatprep.subr.bf16.mxu0 0
    %2107 = vmatpush2.bf16.msra.mxu0 0
    %2108 = vmatprep.subr.bf16.mxu0 0
    %2109 = vmatpush2.bf16.msra.mxu0 0
    %2110 = vmatprep.subr.bf16.mxu0 0
    %2111 = vmatpush2.bf16.msra.mxu0 0
    %2112 = vmatprep.subr.bf16.mxu0 0
    %2113 = vmatpush2.bf16.msra.mxu0 0
    %2114 = vmatprep.mubr.bf16.mxu0 0
    %2115 = vmatmul.mubr.bf16.gmra.mxu0 %v2027
    %v2116 = vpop.f32.mrf.mxu0
    %v2117 = vadd.f32 0.0, %v2116
    %v2118 = vpop.f32.mrf.mxu0
    %v2119 = vadd.f32 0.0, %v2118
    %v2120 = vpop.f32.mrf.mxu0
    %v2121 = vpop.f32.mrf.mxu0
    %2122 = vdwg.mxu0
    %v2123 = vadd.f32 %v2000, %v2076
    %v2124 = vadd.f32 %v2001, %v2078
    %v2125 = vadd.f32 %v2002, %v2117
    %v2126 = vadd.f32 %v2003, %v2119
    %2127 = vrot.lane.b32.xlu0 %v1287, 112
    %v2128 = vpop.permute.xlu0 %2127
    %2129 = vrot.lane.b32.xlu0 %v1288, 112
    %v2130 = vpop.permute.xlu0 %2129
    %2131 = vrot.lane.b32.xlu0 %v1289, 112
    %v2132 = vpop.permute.xlu0 %2131
    %2133 = vrot.lane.b32.xlu0 %v1290, 112
    %v2134 = vpop.permute.xlu0 %2133
    %v2135 = vsel %vm998, %v2132, %v2134
    %v2136 = vsel %vm998, %v2130, %v2132
    %v2137 = vsel %vm998, %v2128, %v2130
    %v2138 = vsel %vm998, %v2134, %v2128
    %v2139 = vmul.f32 %v2137, %v1006
    %v2140 = vmul.f32 %v2136, %v1010
    %v2141 = vmul.f32 %v2135, %v1014
    %v2142 = vmul.f32 %v2138, %v1018
    %v2143 = vpack.c.bf16 %v2139, %v2139
    %v2144 = vpack.c.bf16 %v2140, %v2140
    %v2145 = vpack.c.bf16 %v2141, %v2141
    %v2146 = vpack.c.bf16 %v2142, %v2142
    %s2147 = scalar_lea.vmem %s3, 28
    %v2148 = vld [vmem:[%s2147] sm:$0xf]
    %v2150 = vsel %vm131, %v2148, 0
    %v2153 = vsel %vm135, %v2143, 0
    %v2156 = vsel %vm135, %v2144, 0
    %v2159 = vsel %vm135, %v2145, 0
    %v2162 = vsel %vm135, %v2146, 0
    %2164 = vmatprep.subr.bf16.mxu0 0
    %2165 = vmatpush1.bf16.msra.mxu0 0
    %2166 = vmatprep.subr.bf16.mxu0 0
    %2167 = vmatpush1.bf16.msra.mxu0 0
    %2168 = vmatprep.subr.bf16.mxu0 0
    %2169 = vmatpush1.bf16.msra.mxu0 0
    %2170 = vmatprep.subr.bf16.mxu0 0
    %2171 = vmatpush1.bf16.msra.mxu0 0
    %2172 = vmatprep.subr.bf16.mxu0 0
    %2173 = vmatpush1.bf16.msra.mxu0 0
    %2174 = vmatprep.subr.bf16.mxu0 0
    %2175 = vmatpush1.bf16.msra.mxu0 0
    %2176 = vmatprep.subr.bf16.mxu0 0
    %2177 = vmatpush1.bf16.msra.mxu0 0
    %2178 = vmatprep.subr.bf16.mxu0 %v2156
    %2179 = vmatpush1.bf16.msra.mxu0 %v2153
    %2180 = vmatprep.subr.bf16.mxu0 0
    %2181 = vmatpush2.bf16.msra.mxu0 0
    %2182 = vmatprep.subr.bf16.mxu0 0
    %2183 = vmatpush2.bf16.msra.mxu0 0
    %2184 = vmatprep.subr.bf16.mxu0 0
    %2185 = vmatpush2.bf16.msra.mxu0 0
    %2186 = vmatprep.subr.bf16.mxu0 0
    %2187 = vmatpush2.bf16.msra.mxu0 0
    %2188 = vmatprep.subr.bf16.mxu0 0
    %2189 = vmatpush2.bf16.msra.mxu0 0
    %2190 = vmatprep.subr.bf16.mxu0 0
    %2191 = vmatpush2.bf16.msra.mxu0 0
    %2192 = vmatprep.subr.bf16.mxu0 0
    %2193 = vmatpush2.bf16.msra.mxu0 0
    %2194 = vmatprep.subr.bf16.mxu0 0
    %2195 = vmatpush2.bf16.msra.mxu0 0
    %2196 = vmatprep.mubr.bf16.mxu0 0
    %2197 = vmatmul.mubr.bf16.gmra.mxu0 %v2150
    %v2198 = vpop.f32.mrf.mxu0
    %v2199 = vadd.f32 0.0, %v2198
    %v2200 = vpop.f32.mrf.mxu0
    %v2201 = vadd.f32 0.0, %v2200
    %v2202 = vpop.f32.mrf.mxu0
    %v2203 = vpop.f32.mrf.mxu0
    %2204 = vdwg.mxu0
    %2205 = vmatprep.subr.bf16.mxu0 0
    %2206 = vmatpush1.bf16.msra.mxu0 0
    %2207 = vmatprep.subr.bf16.mxu0 0
    %2208 = vmatpush1.bf16.msra.mxu0 0
    %2209 = vmatprep.subr.bf16.mxu0 0
    %2210 = vmatpush1.bf16.msra.mxu0 0
    %2211 = vmatprep.subr.bf16.mxu0 0
    %2212 = vmatpush1.bf16.msra.mxu0 0
    %2213 = vmatprep.subr.bf16.mxu0 0
    %2214 = vmatpush1.bf16.msra.mxu0 0
    %2215 = vmatprep.subr.bf16.mxu0 0
    %2216 = vmatpush1.bf16.msra.mxu0 0
    %2217 = vmatprep.subr.bf16.mxu0 0
    %2218 = vmatpush1.bf16.msra.mxu0 0
    %2219 = vmatprep.subr.bf16.mxu0 %v2162
    %2220 = vmatpush1.bf16.msra.mxu0 %v2159
    %2221 = vmatprep.subr.bf16.mxu0 0
    %2222 = vmatpush2.bf16.msra.mxu0 0
    %2223 = vmatprep.subr.bf16.mxu0 0
    %2224 = vmatpush2.bf16.msra.mxu0 0
    %2225 = vmatprep.subr.bf16.mxu0 0
    %2226 = vmatpush2.bf16.msra.mxu0 0
    %2227 = vmatprep.subr.bf16.mxu0 0
    %2228 = vmatpush2.bf16.msra.mxu0 0
    %2229 = vmatprep.subr.bf16.mxu0 0
    %2230 = vmatpush2.bf16.msra.mxu0 0
    %2231 = vmatprep.subr.bf16.mxu0 0
    %2232 = vmatpush2.bf16.msra.mxu0 0
    %2233 = vmatprep.subr.bf16.mxu0 0
    %2234 = vmatpush2.bf16.msra.mxu0 0
    %2235 = vmatprep.subr.bf16.mxu0 0
    %2236 = vmatpush2.bf16.msra.mxu0 0
    %2237 = vmatprep.mubr.bf16.mxu0 0
    %2238 = vmatmul.mubr.bf16.gmra.mxu0 %v2150
    %v2239 = vpop.f32.mrf.mxu0
    %v2240 = vadd.f32 0.0, %v2239
    %v2241 = vpop.f32.mrf.mxu0
    %v2242 = vadd.f32 0.0, %v2241
    %v2243 = vpop.f32.mrf.mxu0
    %v2244 = vpop.f32.mrf.mxu0
    %2245 = vdwg.mxu0
    %v2246 = vadd.f32 %v2123, %v2199
    %v2247 = vadd.f32 %v2124, %v2201
    %v2248 = vadd.f32 %v2125, %v2240
    %v2249 = vadd.f32 %v2126, %v2242
    %2250 = vrot.lane.b32.xlu0 %v1287, 111
    %v2251 = vpop.permute.xlu0 %2250
    %2252 = vrot.lane.b32.xlu0 %v1288, 111
    %v2253 = vpop.permute.xlu0 %2252
    %2254 = vrot.lane.b32.xlu0 %v1289, 111
    %v2255 = vpop.permute.xlu0 %2254
    %2256 = vrot.lane.b32.xlu0 %v1290, 111
    %v2257 = vpop.permute.xlu0 %2256
    %v2258 = vsel %vm1138, %v2255, %v2257
    %v2259 = vsel %vm1138, %v2253, %v2255
    %v2260 = vsel %vm1138, %v2251, %v2253
    %v2261 = vsel %vm1138, %v2257, %v2251
    %v2262 = vmul.f32 %v2260, %v1146
    %v2263 = vmul.f32 %v2259, %v1150
    %v2264 = vmul.f32 %v2258, %v1154
    %v2265 = vmul.f32 %v2261, %v1158
    %v2266 = vpack.c.bf16 %v2262, %v2262
    %v2267 = vpack.c.bf16 %v2263, %v2263
    %v2268 = vpack.c.bf16 %v2264, %v2264
    %v2269 = vpack.c.bf16 %v2265, %v2265
    %s2270 = scalar_lea.vmem %s3, 32
    %v2271 = vld [vmem:[%s2270] sm:$0xf]
    %v2273 = vsel %vm131, %v2271, 0
    %v2276 = vsel %vm135, %v2266, 0
    %v2279 = vsel %vm135, %v2267, 0
    %v2282 = vsel %vm135, %v2268, 0
    %v2285 = vsel %vm135, %v2269, 0
    %2287 = vmatprep.subr.bf16.mxu0 0
    %2288 = vmatpush1.bf16.msra.mxu0 0
    %2289 = vmatprep.subr.bf16.mxu0 0
    %2290 = vmatpush1.bf16.msra.mxu0 0
    %2291 = vmatprep.subr.bf16.mxu0 0
    %2292 = vmatpush1.bf16.msra.mxu0 0
    %2293 = vmatprep.subr.bf16.mxu0 0
    %2294 = vmatpush1.bf16.msra.mxu0 0
    %2295 = vmatprep.subr.bf16.mxu0 0
    %2296 = vmatpush1.bf16.msra.mxu0 0
    %2297 = vmatprep.subr.bf16.mxu0 0
    %2298 = vmatpush1.bf16.msra.mxu0 0
    %2299 = vmatprep.subr.bf16.mxu0 0
    %2300 = vmatpush1.bf16.msra.mxu0 0
    %2301 = vmatprep.subr.bf16.mxu0 %v2279
    %2302 = vmatpush1.bf16.msra.mxu0 %v2276
    %2303 = vmatprep.subr.bf16.mxu0 0
    %2304 = vmatpush2.bf16.msra.mxu0 0
    %2305 = vmatprep.subr.bf16.mxu0 0
    %2306 = vmatpush2.bf16.msra.mxu0 0
    %2307 = vmatprep.subr.bf16.mxu0 0
    %2308 = vmatpush2.bf16.msra.mxu0 0
    %2309 = vmatprep.subr.bf16.mxu0 0
    %2310 = vmatpush2.bf16.msra.mxu0 0
    %2311 = vmatprep.subr.bf16.mxu0 0
    %2312 = vmatpush2.bf16.msra.mxu0 0
    %2313 = vmatprep.subr.bf16.mxu0 0
    %2314 = vmatpush2.bf16.msra.mxu0 0
    %2315 = vmatprep.subr.bf16.mxu0 0
    %2316 = vmatpush2.bf16.msra.mxu0 0
    %2317 = vmatprep.subr.bf16.mxu0 0
    %2318 = vmatpush2.bf16.msra.mxu0 0
    %2319 = vmatprep.mubr.bf16.mxu0 0
    %2320 = vmatmul.mubr.bf16.gmra.mxu0 %v2273
    %v2321 = vpop.f32.mrf.mxu0
    %v2322 = vadd.f32 0.0, %v2321
    %v2323 = vpop.f32.mrf.mxu0
    %v2324 = vadd.f32 0.0, %v2323
    %v2325 = vpop.f32.mrf.mxu0
    %v2326 = vpop.f32.mrf.mxu0
    %2327 = vdwg.mxu0
    %2328 = vmatprep.subr.bf16.mxu0 0
    %2329 = vmatpush1.bf16.msra.mxu0 0
    %2330 = vmatprep.subr.bf16.mxu0 0
    %2331 = vmatpush1.bf16.msra.mxu0 0
    %2332 = vmatprep.subr.bf16.mxu0 0
    %2333 = vmatpush1.bf16.msra.mxu0 0
    %2334 = vmatprep.subr.bf16.mxu0 0
    %2335 = vmatpush1.bf16.msra.mxu0 0
    %2336 = vmatprep.subr.bf16.mxu0 0
    %2337 = vmatpush1.bf16.msra.mxu0 0
    %2338 = vmatprep.subr.bf16.mxu0 0
    %2339 = vmatpush1.bf16.msra.mxu0 0
    %2340 = vmatprep.subr.bf16.mxu0 0
    %2341 = vmatpush1.bf16.msra.mxu0 0
    %2342 = vmatprep.subr.bf16.mxu0 %v2285
    %2343 = vmatpush1.bf16.msra.mxu0 %v2282
    %2344 = vmatprep.subr.bf16.mxu0 0
    %2345 = vmatpush2.bf16.msra.mxu0 0
    %2346 = vmatprep.subr.bf16.mxu0 0
    %2347 = vmatpush2.bf16.msra.mxu0 0
    %2348 = vmatprep.subr.bf16.mxu0 0
    %2349 = vmatpush2.bf16.msra.mxu0 0
    %2350 = vmatprep.subr.bf16.mxu0 0
    %2351 = vmatpush2.bf16.msra.mxu0 0
    %2352 = vmatprep.subr.bf16.mxu0 0
    %2353 = vmatpush2.bf16.msra.mxu0 0
    %2354 = vmatprep.subr.bf16.mxu0 0
    %2355 = vmatpush2.bf16.msra.mxu0 0
    %2356 = vmatprep.subr.bf16.mxu0 0
    %2357 = vmatpush2.bf16.msra.mxu0 0
    %2358 = vmatprep.subr.bf16.mxu0 0
    %2359 = vmatpush2.bf16.msra.mxu0 0
    %2360 = vmatprep.mubr.bf16.mxu0 0
    %2361 = vmatmul.mubr.bf16.gmra.mxu0 %v2273
    %v2362 = vpop.f32.mrf.mxu0
    %v2363 = vadd.f32 0.0, %v2362
    %v2364 = vpop.f32.mrf.mxu0
    %v2365 = vadd.f32 0.0, %v2364
    %v2366 = vpop.f32.mrf.mxu0
    %v2367 = vpop.f32.mrf.mxu0
    %2368 = vdwg.mxu0
    %v2369 = vadd.f32 %v2246, %v2322
    %v2370 = vadd.f32 %v2247, %v2324
    %v2371 = vadd.f32 %v2248, %v2363
    %v2372 = vadd.f32 %v2249, %v2365
    %2373 = vset.pattern.permute.xlu0 2
    %2374 = vperm.xlu0 %2373, %v50
    %v2375 = vpop.permute.xlu0 %2374
    %v2377 = vmul.f32 %v2369, %v2375
    %v2378 = vmul.f32 %v2370, %v2375
    %v2379 = vmul.f32 %v2371, %v2375
    %v2380 = vmul.f32 %v2372, %v2375
    %2381 = vset.pattern.permute.xlu0 3
    %2382 = vperm.xlu0 %2381, %v50
    %v2383 = vpop.permute.xlu0 %2382
    %v2385 = vadd.f32 %v2377, %v2383
    %v2386 = vadd.f32 %v2378, %v2383
    %v2387 = vadd.f32 %v2379, %v2383
    %v2388 = vadd.f32 %v2380, %v2383
    %v2389 = vld [vmem:[%s8] sm:$0xff]
    %v2390 = vld [vmem:[%s8 + $0x8] sm:$0xff]
    %v2391 = vld [vmem:[%s8 + $0x10] sm:$0xff]
    %v2392 = vld [vmem:[%s8 + $0x18] sm:$0xff]
    %v2393 = vld [vmem:[%s8 + $0x20] sm:$0xff]
    %v2394 = vld [vmem:[%s8 + $0x28] sm:$0xff]
    %v2395 = vld [vmem:[%s8 + $0x30] sm:$0xff]
    %v2396 = vld [vmem:[%s8 + $0x38] sm:$0xff]
    %v2397 = vld [vmem:[%s8 + $0x40] sm:$0xff]
    %v2398 = vld [vmem:[%s8 + $0x48] sm:$0xff]
    %v2399 = vld [vmem:[%s8 + $0x50] sm:$0xff]
    %v2400 = vld [vmem:[%s8 + $0x58] sm:$0xff]
    %v2401 = vld [vmem:[%s8 + $0x60] sm:$0xff]
    %v2402 = vld [vmem:[%s8 + $0x68] sm:$0xff]
    %v2403 = vld [vmem:[%s8 + $0x70] sm:$0xff]
    %v2404 = vld [vmem:[%s8 + $0x78] sm:$0xff]
    %v2405 = vld [vmem:[%s8 + $0x80] sm:$0xff]
    %v2406 = vld [vmem:[%s8 + $0x88] sm:$0xff]
    %v2407 = vld [vmem:[%s8 + $0x90] sm:$0xff]
    %v2408 = vld [vmem:[%s8 + $0x98] sm:$0xff]
    %v2409 = vld [vmem:[%s8 + $0xa0] sm:$0xff]
    %v2410 = vld [vmem:[%s8 + $0xa8] sm:$0xff]
    %v2411 = vld [vmem:[%s8 + $0xb0] sm:$0xff]
    %v2412 = vld [vmem:[%s8 + $0xb8] sm:$0xff]
    %v2413 = vld [vmem:[%s8 + $0xc0] sm:$0xff]
    %v2414 = vld [vmem:[%s8 + $0xc8] sm:$0xff]
    %v2415 = vld [vmem:[%s8 + $0xd0] sm:$0xff]
    %v2416 = vld [vmem:[%s8 + $0xd8] sm:$0xff]
    %v2417 = vld [vmem:[%s8 + $0xe0] sm:$0xff]
    %v2418 = vld [vmem:[%s8 + $0xe8] sm:$0xff]
    %v2419 = vld [vmem:[%s8 + $0xf0] sm:$0xff]
    %v2420 = vld [vmem:[%s8 + $0xf8] sm:$0xff]
    %v2421 = vld [vmem:[%s8 + $0x100] sm:$0xff]
    %v2422 = vld [vmem:[%s8 + $0x108] sm:$0xff]
    %v2423 = vld [vmem:[%s8 + $0x110] sm:$0xff]
    %v2424 = vld [vmem:[%s8 + $0x118] sm:$0xff]
    %v2425 = vld [vmem:[%s8 + $0x120] sm:$0xff]
    %v2426 = vld [vmem:[%s8 + $0x128] sm:$0xff]
    %v2427 = vld [vmem:[%s8 + $0x130] sm:$0xff]
    %v2428 = vld [vmem:[%s8 + $0x138] sm:$0xff]
    %v2429 = vld [vmem:[%s8 + $0x140] sm:$0xff]
    %v2430 = vld [vmem:[%s8 + $0x148] sm:$0xff]
    %v2431 = vld [vmem:[%s8 + $0x150] sm:$0xff]
    %v2432 = vld [vmem:[%s8 + $0x158] sm:$0xff]
    %v2433 = vld [vmem:[%s8 + $0x160] sm:$0xff]
    %v2434 = vld [vmem:[%s8 + $0x168] sm:$0xff]
    %v2435 = vld [vmem:[%s8 + $0x170] sm:$0xff]
    %v2436 = vld [vmem:[%s8 + $0x178] sm:$0xff]
    %v2437 = vld [vmem:[%s8 + $0x180] sm:$0xff]
    %v2438 = vld [vmem:[%s8 + $0x188] sm:$0xff]
    %v2439 = vld [vmem:[%s8 + $0x190] sm:$0xff]
    %v2440 = vld [vmem:[%s8 + $0x198] sm:$0xff]
    %v2441 = vld [vmem:[%s8 + $0x1a0] sm:$0xff]
    %v2442 = vld [vmem:[%s8 + $0x1a8] sm:$0xff]
    %v2443 = vld [vmem:[%s8 + $0x1b0] sm:$0xff]
    %v2444 = vld [vmem:[%s8 + $0x1b8] sm:$0xff]
    %v2445 = vld [vmem:[%s8 + $0x1c0] sm:$0xff]
    %v2446 = vld [vmem:[%s8 + $0x1c8] sm:$0xff]
    %v2447 = vld [vmem:[%s8 + $0x1d0] sm:$0xff]
    %v2448 = vld [vmem:[%s8 + $0x1d8] sm:$0xff]
    %v2449 = vld [vmem:[%s8 + $0x1e0] sm:$0xff]
    %v2450 = vld [vmem:[%s8 + $0x1e8] sm:$0xff]
    %v2451 = vld [vmem:[%s8 + $0x1f0] sm:$0xff]
    %v2452 = vld [vmem:[%s8 + $0x1f8] sm:$0xff]
    %2453 = vmatprep.subr.mxu0 0.0
    %2454 = vmatpush1.msra.mxu0 %v2404
    %2455 = vmatprep.subr.mxu0 0.0
    %2456 = vmatpush1.msra.mxu0 %v2403
    %2457 = vmatprep.subr.mxu0 0.0
    %2458 = vmatpush1.msra.mxu0 %v2402
    %2459 = vmatprep.subr.mxu0 0.0
    %2460 = vmatpush1.msra.mxu0 %v2401
    %2461 = vmatprep.subr.mxu0 0.0
    %2462 = vmatpush1.msra.mxu0 %v2400
    %2463 = vmatprep.subr.mxu0 0.0
    %2464 = vmatpush1.msra.mxu0 %v2399
    %2465 = vmatprep.subr.mxu0 0.0
    %2466 = vmatpush1.msra.mxu0 %v2398
    %2467 = vmatprep.subr.mxu0 0.0
    %2468 = vmatpush1.msra.mxu0 %v2397
    %2469 = vmatprep.subr.mxu0 0.0
    %2470 = vmatpush1.msra.mxu0 %v2396
    %2471 = vmatprep.subr.mxu0 0.0
    %2472 = vmatpush1.msra.mxu0 %v2395
    %2473 = vmatprep.subr.mxu0 0.0
    %2474 = vmatpush1.msra.mxu0 %v2394
    %2475 = vmatprep.subr.mxu0 0.0
    %2476 = vmatpush1.msra.mxu0 %v2393
    %2477 = vmatprep.subr.mxu0 0.0
    %2478 = vmatpush1.msra.mxu0 %v2392
    %2479 = vmatprep.subr.mxu0 0.0
    %2480 = vmatpush1.msra.mxu0 %v2391
    %2481 = vmatprep.subr.mxu0 0.0
    %2482 = vmatpush1.msra.mxu0 %v2390
    %2483 = vmatprep.subr.mxu0 0.0
    %2484 = vmatpush1.msra.mxu0 %v2389
    %2485 = vmatprep.subr.mxu0 0.0
    %2486 = vmatpush2.msra.mxu0 %v2420
    %2487 = vmatprep.subr.mxu0 0.0
    %2488 = vmatpush2.msra.mxu0 %v2419
    %2489 = vmatprep.subr.mxu0 0.0
    %2490 = vmatpush2.msra.mxu0 %v2418
    %2491 = vmatprep.subr.mxu0 0.0
    %2492 = vmatpush2.msra.mxu0 %v2417
    %2493 = vmatprep.subr.mxu0 0.0
    %2494 = vmatpush2.msra.mxu0 %v2416
    %2495 = vmatprep.subr.mxu0 0.0
    %2496 = vmatpush2.msra.mxu0 %v2415
    %2497 = vmatprep.subr.mxu0 0.0
    %2498 = vmatpush2.msra.mxu0 %v2414
    %2499 = vmatprep.subr.mxu0 0.0
    %2500 = vmatpush2.msra.mxu0 %v2413
    %2501 = vmatprep.subr.mxu0 0.0
    %2502 = vmatpush2.msra.mxu0 %v2412
    %2503 = vmatprep.subr.mxu0 0.0
    %2504 = vmatpush2.msra.mxu0 %v2411
    %2505 = vmatprep.subr.mxu0 0.0
    %2506 = vmatpush2.msra.mxu0 %v2410
    %2507 = vmatprep.subr.mxu0 0.0
    %2508 = vmatpush2.msra.mxu0 %v2409
    %2509 = vmatprep.subr.mxu0 0.0
    %2510 = vmatpush2.msra.mxu0 %v2408
    %2511 = vmatprep.subr.mxu0 0.0
    %2512 = vmatpush2.msra.mxu0 %v2407
    %2513 = vmatprep.subr.mxu0 0.0
    %2514 = vmatpush2.msra.mxu0 %v2406
    %2515 = vmatprep.subr.mxu0 0.0
    %2516 = vmatpush2.msra.mxu0 %v2405
    %2517 = vmatprep.mubr.f32.mxu0 %v2386
    %2518 = vmatmul.mubr.f32.gmra.mxu0 %v2385
    %v2519 = vpop.f32.mrf.mxu0
    %v2520 = vadd.f32 0.0, %v2519
    %v2521 = vpop.f32.mrf.mxu0
    %2522 = vdwg.mxu0
    %2523 = vmatprep.subr.mxu0 0.0
    %2524 = vmatpush1.msra.mxu0 %v2436
    %2525 = vmatprep.subr.mxu0 0.0
    %2526 = vmatpush1.msra.mxu0 %v2435
    %2527 = vmatprep.subr.mxu0 0.0
    %2528 = vmatpush1.msra.mxu0 %v2434
    %2529 = vmatprep.subr.mxu0 0.0
    %2530 = vmatpush1.msra.mxu0 %v2433
    %2531 = vmatprep.subr.mxu0 0.0
    %2532 = vmatpush1.msra.mxu0 %v2432
    %2533 = vmatprep.subr.mxu0 0.0
    %2534 = vmatpush1.msra.mxu0 %v2431
    %2535 = vmatprep.subr.mxu0 0.0
    %2536 = vmatpush1.msra.mxu0 %v2430
    %2537 = vmatprep.subr.mxu0 0.0
    %2538 = vmatpush1.msra.mxu0 %v2429
    %2539 = vmatprep.subr.mxu0 0.0
    %2540 = vmatpush1.msra.mxu0 %v2428
    %2541 = vmatprep.subr.mxu0 0.0
    %2542 = vmatpush1.msra.mxu0 %v2427
    %2543 = vmatprep.subr.mxu0 0.0
    %2544 = vmatpush1.msra.mxu0 %v2426
    %2545 = vmatprep.subr.mxu0 0.0
    %2546 = vmatpush1.msra.mxu0 %v2425
    %2547 = vmatprep.subr.mxu0 0.0
    %2548 = vmatpush1.msra.mxu0 %v2424
    %2549 = vmatprep.subr.mxu0 0.0
    %2550 = vmatpush1.msra.mxu0 %v2423
    %2551 = vmatprep.subr.mxu0 0.0
    %2552 = vmatpush1.msra.mxu0 %v2422
    %2553 = vmatprep.subr.mxu0 0.0
    %2554 = vmatpush1.msra.mxu0 %v2421
    %2555 = vmatprep.subr.mxu0 0.0
    %2556 = vmatpush2.msra.mxu0 %v2452
    %2557 = vmatprep.subr.mxu0 0.0
    %2558 = vmatpush2.msra.mxu0 %v2451
    %2559 = vmatprep.subr.mxu0 0.0
    %2560 = vmatpush2.msra.mxu0 %v2450
    %2561 = vmatprep.subr.mxu0 0.0
    %2562 = vmatpush2.msra.mxu0 %v2449
    %2563 = vmatprep.subr.mxu0 0.0
    %2564 = vmatpush2.msra.mxu0 %v2448
    %2565 = vmatprep.subr.mxu0 0.0
    %2566 = vmatpush2.msra.mxu0 %v2447
    %2567 = vmatprep.subr.mxu0 0.0
    %2568 = vmatpush2.msra.mxu0 %v2446
    %2569 = vmatprep.subr.mxu0 0.0
    %2570 = vmatpush2.msra.mxu0 %v2445
    %2571 = vmatprep.subr.mxu0 0.0
    %2572 = vmatpush2.msra.mxu0 %v2444
    %2573 = vmatprep.subr.mxu0 0.0
    %2574 = vmatpush2.msra.mxu0 %v2443
    %2575 = vmatprep.subr.mxu0 0.0
    %2576 = vmatpush2.msra.mxu0 %v2442
    %2577 = vmatprep.subr.mxu0 0.0
    %2578 = vmatpush2.msra.mxu0 %v2441
    %2579 = vmatprep.subr.mxu0 0.0
    %2580 = vmatpush2.msra.mxu0 %v2440
    %2581 = vmatprep.subr.mxu0 0.0
    %2582 = vmatpush2.msra.mxu0 %v2439
    %2583 = vmatprep.subr.mxu0 0.0
    %2584 = vmatpush2.msra.mxu0 %v2438
    %2585 = vmatprep.subr.mxu0 0.0
    %2586 = vmatpush2.msra.mxu0 %v2437
    %2587 = vmatprep.mubr.f32.mxu0 %v2388
    %2588 = vmatmul.mubr.f32.gmra.mxu0 %v2387
    %v2589 = vpop.f32.mrf.mxu0
    %v2590 = vadd.f32 %v2520, %v2589
    %v2591 = vpop.f32.mrf.mxu0
    %2592 = vdwg.mxu0
    %v2593 = vld [vmem:[%s6] sm:$0x3]
    %2595 = vset.pattern.permute.xlu0 7
    %2596 = vperm.xlu0 %2595, %v51
    %v2597 = vpop.permute.xlu0 %2596
    %v2600 = vsel %vm131, %v2593, 0
    %2602 = vmatprep.subr.mxu0 0.0
    %2603 = vmatpush1.msra.mxu0 0.0
    %2604 = vmatprep.subr.mxu0 0.0
    %2605 = vmatpush1.msra.mxu0 0.0
    %2606 = vmatprep.subr.mxu0 0.0
    %2607 = vmatpush1.msra.mxu0 0.0
    %2608 = vmatprep.subr.mxu0 0.0
    %2609 = vmatpush1.msra.mxu0 0.0
    %2610 = vmatprep.subr.mxu0 0.0
    %2611 = vmatpush1.msra.mxu0 0.0
    %2612 = vmatprep.subr.mxu0 0.0
    %2613 = vmatpush1.msra.mxu0 0.0
    %2614 = vmatprep.subr.mxu0 0.0
    %2615 = vmatpush1.msra.mxu0 0.0
    %2616 = vmatprep.subr.mxu0 0.0
    %2617 = vmatpush1.msra.mxu0 0.0
    %2618 = vmatprep.subr.mxu0 0.0
    %2619 = vmatpush1.msra.mxu0 0.0
    %2620 = vmatprep.subr.mxu0 0.0
    %2621 = vmatpush1.msra.mxu0 0.0
    %2622 = vmatprep.subr.mxu0 0.0
    %2623 = vmatpush1.msra.mxu0 0.0
    %2624 = vmatprep.subr.mxu0 0.0
    %2625 = vmatpush1.msra.mxu0 0.0
    %2626 = vmatprep.subr.mxu0 0.0
    %2627 = vmatpush1.msra.mxu0 0.0
    %2628 = vmatprep.subr.mxu0 0.0
    %2629 = vmatpush1.msra.mxu0 0.0
    %2630 = vmatprep.subr.mxu0 0.0
    %2631 = vmatpush1.msra.mxu0 0.0
    %2632 = vmatprep.subr.mxu0 0.0
    %2633 = vmatpush1.msra.mxu0 %v2590
    %2634 = vmatprep.subr.mxu0 0.0
    %2635 = vmatpush2.msra.mxu0 0.0
    %2636 = vmatprep.subr.mxu0 0.0
    %2637 = vmatpush2.msra.mxu0 0.0
    %2638 = vmatprep.subr.mxu0 0.0
    %2639 = vmatpush2.msra.mxu0 0.0
    %2640 = vmatprep.subr.mxu0 0.0
    %2641 = vmatpush2.msra.mxu0 0.0
    %2642 = vmatprep.subr.mxu0 0.0
    %2643 = vmatpush2.msra.mxu0 0.0
    %2644 = vmatprep.subr.mxu0 0.0
    %2645 = vmatpush2.msra.mxu0 0.0
    %2646 = vmatprep.subr.mxu0 0.0
    %2647 = vmatpush2.msra.mxu0 0.0
    %2648 = vmatprep.subr.mxu0 0.0
    %2649 = vmatpush2.msra.mxu0 0.0
    %2650 = vmatprep.subr.mxu0 0.0
    %2651 = vmatpush2.msra.mxu0 0.0
    %2652 = vmatprep.subr.mxu0 0.0
    %2653 = vmatpush2.msra.mxu0 0.0
    %2654 = vmatprep.subr.mxu0 0.0
    %2655 = vmatpush2.msra.mxu0 0.0
    %2656 = vmatprep.subr.mxu0 0.0
    %2657 = vmatpush2.msra.mxu0 0.0
    %2658 = vmatprep.subr.mxu0 0.0
    %2659 = vmatpush2.msra.mxu0 0.0
    %2660 = vmatprep.subr.mxu0 0.0
    %2661 = vmatpush2.msra.mxu0 0.0
    %2662 = vmatprep.subr.mxu0 0.0
    %2663 = vmatpush2.msra.mxu0 0.0
    %2664 = vmatprep.subr.mxu0 0.0
    %2665 = vmatpush2.msra.mxu0 0.0
    %2666 = vmatprep.mubr.f32.mxu0 0.0
    %2667 = vmatmul.mubr.f32.gmra.mxu0 %v2600
    %v2668 = vpop.f32.mrf.mxu0
    %v2669 = vadd.f32 %v2597, %v2668
    %v2670 = vpop.f32.mrf.mxu0
    %2671 = vdwg.mxu0
    %v2672 = vxor.u32 %v2669, 2147483648
    %v2673 = vmul.f32 %v2672, 1.442695
    %v2674 = vpow.pop %v2673
    %v2675 = vadd.f32 %v2674, 1.0
    %v2676 = vrcp.pop %v2675
    %v2677 = vmul.f32 1.0, %v2676
    %v2678 = vmul.f32 %v2669, %v2677
    %v2679 = vld [vmem:[%s7] sm:$0xff]
    %2680 = vset.pattern.permute.xlu0 6
    %2681 = vperm.xlu0 %2680, %v50
    %v2682 = vpop.permute.xlu0 %2681
    %vm2684 = vcmask 15360
    %v2686 = vsel %vm2684, %v2679, 0
    %vm2688 = vcmask 1041408
    %v2690 = vsel %vm2688, %v2678, 0
    %2692 = vmatprep.subr.mxu0 0.0
    %2693 = vmatpush1.msra.mxu0 0.0
    %2694 = vmatprep.subr.mxu0 0.0
    %2695 = vmatpush1.msra.mxu0 0.0
    %2696 = vmatprep.subr.mxu0 0.0
    %2697 = vmatpush1.msra.mxu0 0.0
    %2698 = vmatprep.subr.mxu0 0.0
    %2699 = vmatpush1.msra.mxu0 0.0
    %2700 = vmatprep.subr.mxu0 0.0
    %2701 = vmatpush1.msra.mxu0 0.0
    %2702 = vmatprep.subr.mxu0 0.0
    %2703 = vmatpush1.msra.mxu0 0.0
    %2704 = vmatprep.subr.mxu0 0.0
    %2705 = vmatpush1.msra.mxu0 0.0
    %2706 = vmatprep.subr.mxu0 0.0
    %2707 = vmatpush1.msra.mxu0 0.0
    %2708 = vmatprep.subr.mxu0 0.0
    %2709 = vmatpush1.msra.mxu0 0.0
    %2710 = vmatprep.subr.mxu0 0.0
    %2711 = vmatpush1.msra.mxu0 0.0
    %2712 = vmatprep.subr.mxu0 0.0
    %2713 = vmatpush1.msra.mxu0 0.0
    %2714 = vmatprep.subr.mxu0 0.0
    %2715 = vmatpush1.msra.mxu0 0.0
    %2716 = vmatprep.subr.mxu0 0.0
    %2717 = vmatpush1.msra.mxu0 0.0
    %2718 = vmatprep.subr.mxu0 0.0
    %2719 = vmatpush1.msra.mxu0 0.0
    %2720 = vmatprep.subr.mxu0 0.0
    %2721 = vmatpush1.msra.mxu0 0.0
    %2722 = vmatprep.subr.mxu0 0.0
    %2723 = vmatpush1.msra.mxu0 %v2690
    %2724 = vmatprep.subr.mxu0 0.0
    %2725 = vmatpush2.msra.mxu0 0.0
    %2726 = vmatprep.subr.mxu0 0.0
    %2727 = vmatpush2.msra.mxu0 0.0
    %2728 = vmatprep.subr.mxu0 0.0
    %2729 = vmatpush2.msra.mxu0 0.0
    %2730 = vmatprep.subr.mxu0 0.0
    %2731 = vmatpush2.msra.mxu0 0.0
    %2732 = vmatprep.subr.mxu0 0.0
    %2733 = vmatpush2.msra.mxu0 0.0
    %2734 = vmatprep.subr.mxu0 0.0
    %2735 = vmatpush2.msra.mxu0 0.0
    %2736 = vmatprep.subr.mxu0 0.0
    %2737 = vmatpush2.msra.mxu0 0.0
    %2738 = vmatprep.subr.mxu0 0.0
    %2739 = vmatpush2.msra.mxu0 0.0
    %2740 = vmatprep.subr.mxu0 0.0
    %2741 = vmatpush2.msra.mxu0 0.0
    %2742 = vmatprep.subr.mxu0 0.0
    %2743 = vmatpush2.msra.mxu0 0.0
    %2744 = vmatprep.subr.mxu0 0.0
    %2745 = vmatpush2.msra.mxu0 0.0
    %2746 = vmatprep.subr.mxu0 0.0
    %2747 = vmatpush2.msra.mxu0 0.0
    %2748 = vmatprep.subr.mxu0 0.0
    %2749 = vmatpush2.msra.mxu0 0.0
    %2750 = vmatprep.subr.mxu0 0.0
    %2751 = vmatpush2.msra.mxu0 0.0
    %2752 = vmatprep.subr.mxu0 0.0
    %2753 = vmatpush2.msra.mxu0 0.0
    %2754 = vmatprep.subr.mxu0 0.0
    %2755 = vmatpush2.msra.mxu0 0.0
    %2756 = vmatprep.mubr.f32.mxu0 0.0
    %2757 = vmatmul.mubr.f32.gmra.mxu0 %v2686
    %v2758 = vpop.f32.mrf.mxu0
    %v2759 = vadd.f32 %v2682, %v2758
    %v2760 = vpop.f32.mrf.mxu0
    %2761 = vdwg.mxu0
    %v2762 = vxor.u32 %v2759, 2147483648
    %v2763 = vmul.f32 %v2762, 1.442695
    %v2764 = vpow.pop %v2763
    %v2765 = vadd.f32 %v2764, 1.0
    %v2766 = vrcp.pop %v2765
    %v2767 = vmul.f32 1.0, %v2766
    %2769 = vset.pattern.permute.xlu0 0
    %2770 = vperm.xlu0 %2769, %v2767
    %v2771 = vpop.permute.xlu0 %2770
    %v2774 = vlaneseq
    %v2775 = vshrl.u32 %v2774, 7
    %v2776 = vsub.s32 0, %v2775
    %v2777 = vrot.slane %v49, %v2776
    %v2778 = vlaneseq
    %v2779 = vshrl.u32 %v2778, 7
    %v2780 = vsub.s32 2, %v2779
    %v2781 = vrot.slane %v49, %v2780
    %v2782 = vlaneseq
    %v2783 = vshrl.u32 %v2782, 7
    %v2784 = vsub.s32 4, %v2783
    %v2785 = vrot.slane %v49, %v2784
    %v2786 = vlaneseq
    %v2787 = vshrl.u32 %v2786, 7
    %v2788 = vsub.s32 6, %v2787
    %v2789 = vrot.slane %v49, %v2788
    %v2794 = vlaneseq
    %v2795 = vshrl.u32 %v2794, 7
    %v2796 = vsub.s32 0, %v2795
    %v2797 = vrot.slane %v2777, %v2796
    %v2798 = vlaneseq
    %v2799 = vshrl.u32 %v2798, 7
    %v2800 = vsub.s32 0, %v2799
    %v2801 = vrot.slane %v2781, %v2800
    %v2802 = vlaneseq
    %v2803 = vshrl.u32 %v2802, 7
    %v2804 = vsub.s32 0, %v2803
    %v2805 = vrot.slane %v2785, %v2804
    %v2806 = vlaneseq
    %v2807 = vshrl.u32 %v2806, 7
    %v2808 = vsub.s32 0, %v2807
    %v2809 = vrot.slane %v2789, %v2808
    %v2810 = vmul.f32 %v2771, %v2797
    %v2811 = vmul.f32 %v2771, %v2801
    %v2812 = vmul.f32 %v2771, %v2805
    %v2813 = vmul.f32 %v2771, %v2809
    %2814 = vset.pattern.permute.xlu0 1
    %2815 = vperm.xlu0 %2814, %v2767
    %v2816 = vpop.permute.xlu0 %2815
    %v2818 = vlaneseq
    %v2819 = vshrl.u32 %v2818, 7
    %v2820 = vsub.s32 1, %v2819
    %v2821 = vrot.slane %v49, %v2820
    %v2822 = vlaneseq
    %v2823 = vshrl.u32 %v2822, 7
    %v2824 = vsub.s32 3, %v2823
    %v2825 = vrot.slane %v49, %v2824
    %v2826 = vlaneseq
    %v2827 = vshrl.u32 %v2826, 7
    %v2828 = vsub.s32 5, %v2827
    %v2829 = vrot.slane %v49, %v2828
    %v2830 = vlaneseq
    %v2831 = vshrl.u32 %v2830, 7
    %v2832 = vsub.s32 7, %v2831
    %v2833 = vrot.slane %v49, %v2832
    %v2838 = vlaneseq
    %v2839 = vshrl.u32 %v2838, 7
    %v2840 = vsub.s32 1, %v2839
    %v2841 = vrot.slane %v2821, %v2840
    %v2842 = vlaneseq
    %v2843 = vshrl.u32 %v2842, 7
    %v2844 = vsub.s32 1, %v2843
    %v2845 = vrot.slane %v2825, %v2844
    %v2846 = vlaneseq
    %v2847 = vshrl.u32 %v2846, 7
    %v2848 = vsub.s32 1, %v2847
    %v2849 = vrot.slane %v2829, %v2848
    %v2850 = vlaneseq
    %v2851 = vshrl.u32 %v2850, 7
    %v2852 = vsub.s32 1, %v2851
    %v2853 = vrot.slane %v2833, %v2852
    %v2854 = vmul.f32 %v2816, %v2841
    %v2855 = vmul.f32 %v2816, %v2845
    %v2856 = vmul.f32 %v2816, %v2849
    %v2857 = vmul.f32 %v2816, %v2853
    %v2858 = vadd.f32 %v2810, %v2854
    %v2859 = vadd.f32 %v2811, %v2855
    %v2860 = vadd.f32 %v2812, %v2856
    %v2861 = vadd.f32 %v2813, %v2857
    %v2862 = vmul.f32 %v2385, %v2858
    %v2863 = vmul.f32 %v2386, %v2859
    %v2864 = vmul.f32 %v2387, %v2860
    %v2865 = vmul.f32 %v2388, %v2861
    %v2866 = vld [vmem:[%s4] sm:$0xf]
    %v2868 = vsel %vm131, %v2866, 0
    %2870 = vmatprep.subr.bf16.mxu0 0
    %2871 = vmatpush1.bf16.msra.mxu0 0
    %2872 = vmatprep.subr.bf16.mxu0 0
    %2873 = vmatpush1.bf16.msra.mxu0 0
    %2874 = vmatprep.subr.bf16.mxu0 0
    %2875 = vmatpush1.bf16.msra.mxu0 0
    %2876 = vmatprep.subr.bf16.mxu0 0
    %2877 = vmatpush1.bf16.msra.mxu0 0
    %2878 = vmatprep.subr.bf16.mxu0 0
    %2879 = vmatpush1.bf16.msra.mxu0 0
    %2880 = vmatprep.subr.bf16.mxu0 0
    %2881 = vmatpush1.bf16.msra.mxu0 0
    %2882 = vmatprep.subr.bf16.mxu0 0
    %2883 = vmatpush1.bf16.msra.mxu0 0
    %2884 = vmatprep.subr.bf16.mxu0 %v616
    %2885 = vmatpush1.bf16.msra.mxu0 %v613
    %2886 = vmatprep.subr.bf16.mxu0 0
    %2887 = vmatpush2.bf16.msra.mxu0 0
    %2888 = vmatprep.subr.bf16.mxu0 0
    %2889 = vmatpush2.bf16.msra.mxu0 0
    %2890 = vmatprep.subr.bf16.mxu0 0
    %2891 = vmatpush2.bf16.msra.mxu0 0
    %2892 = vmatprep.subr.bf16.mxu0 0
    %2893 = vmatpush2.bf16.msra.mxu0 0
    %2894 = vmatprep.subr.bf16.mxu0 0
    %2895 = vmatpush2.bf16.msra.mxu0 0
    %2896 = vmatprep.subr.bf16.mxu0 0
    %2897 = vmatpush2.bf16.msra.mxu0 0
    %2898 = vmatprep.subr.bf16.mxu0 0
    %2899 = vmatpush2.bf16.msra.mxu0 0
    %2900 = vmatprep.subr.bf16.mxu0 0
    %2901 = vmatpush2.bf16.msra.mxu0 0
    %2902 = vmatprep.mubr.bf16.mxu0 0
    %2903 = vmatmul.mubr.bf16.gmra.mxu0 %v2868
    %v2904 = vpop.f32.mrf.mxu0
    %v2905 = vadd.f32 0.0, %v2904
    %v2906 = vpop.f32.mrf.mxu0
    %v2907 = vadd.f32 0.0, %v2906
    %v2908 = vpop.f32.mrf.mxu0
    %v2909 = vpop.f32.mrf.mxu0
    %2910 = vdwg.mxu0
    %2911 = vmatprep.subr.bf16.mxu0 0
    %2912 = vmatpush1.bf16.msra.mxu0 0
    %2913 = vmatprep.subr.bf16.mxu0 0
    %2914 = vmatpush1.bf16.msra.mxu0 0
    %2915 = vmatprep.subr.bf16.mxu0 0
    %2916 = vmatpush1.bf16.msra.mxu0 0
    %2917 = vmatprep.subr.bf16.mxu0 0
    %2918 = vmatpush1.bf16.msra.mxu0 0
    %2919 = vmatprep.subr.bf16.mxu0 0
    %2920 = vmatpush1.bf16.msra.mxu0 0
    %2921 = vmatprep.subr.bf16.mxu0 0
    %2922 = vmatpush1.bf16.msra.mxu0 0
    %2923 = vmatprep.subr.bf16.mxu0 0
    %2924 = vmatpush1.bf16.msra.mxu0 0
    %2925 = vmatprep.subr.bf16.mxu0 %v622
    %2926 = vmatpush1.bf16.msra.mxu0 %v619
    %2927 = vmatprep.subr.bf16.mxu0 0
    %2928 = vmatpush2.bf16.msra.mxu0 0
    %2929 = vmatprep.subr.bf16.mxu0 0
    %2930 = vmatpush2.bf16.msra.mxu0 0
    %2931 = vmatprep.subr.bf16.mxu0 0
    %2932 = vmatpush2.bf16.msra.mxu0 0
    %2933 = vmatprep.subr.bf16.mxu0 0
    %2934 = vmatpush2.bf16.msra.mxu0 0
    %2935 = vmatprep.subr.bf16.mxu0 0
    %2936 = vmatpush2.bf16.msra.mxu0 0
    %2937 = vmatprep.subr.bf16.mxu0 0
    %2938 = vmatpush2.bf16.msra.mxu0 0
    %2939 = vmatprep.subr.bf16.mxu0 0
    %2940 = vmatpush2.bf16.msra.mxu0 0
    %2941 = vmatprep.subr.bf16.mxu0 0
    %2942 = vmatpush2.bf16.msra.mxu0 0
    %2943 = vmatprep.mubr.bf16.mxu0 0
    %2944 = vmatmul.mubr.bf16.gmra.mxu0 %v2868
    %v2945 = vpop.f32.mrf.mxu0
    %v2946 = vadd.f32 0.0, %v2945
    %v2947 = vpop.f32.mrf.mxu0
    %v2948 = vadd.f32 0.0, %v2947
    %v2949 = vpop.f32.mrf.mxu0
    %v2950 = vpop.f32.mrf.mxu0
    %2951 = vdwg.mxu0
    %2952 = vset.pattern.permute.xlu0 4
    %2953 = vperm.xlu0 %2952, %v50
    %v2954 = vpop.permute.xlu0 %2953
    %v2956 = vmul.f32 %v2905, %v2954
    %v2957 = vmul.f32 %v2907, %v2954
    %v2958 = vmul.f32 %v2946, %v2954
    %v2959 = vmul.f32 %v2948, %v2954
    %2960 = vset.pattern.permute.xlu0 5
    %2961 = vperm.xlu0 %2960, %v50
    %v2962 = vpop.permute.xlu0 %2961
    %v2964 = vadd.f32 %v2956, %v2962
    %v2965 = vadd.f32 %v2957, %v2962
    %v2966 = vadd.f32 %v2958, %v2962
    %v2967 = vadd.f32 %v2959, %v2962
    %v2968 = vadd.f32 %v2862, %v2964
    %v2969 = vadd.f32 %v2863, %v2965
    %v2970 = vadd.f32 %v2864, %v2966
    %v2971 = vadd.f32 %v2865, %v2967
    %v2972 = vmax.f32 %v2968, 0.0
    %v2973 = vmax.f32 %v2969, 0.0
    %v2974 = vmax.f32 %v2970, 0.0
    %v2975 = vmax.f32 %v2971, 0.0
    %2976 = vst [vmem:[#allocation2] sm:$0xff] %v2972
    %2977 = vst [vmem:[#allocation2 + $0x8] sm:$0xff] %v2973
    %2978 = vst [vmem:[#allocation2 + $0x10] sm:$0xff] %v2974
    %2979 = vst [vmem:[#allocation2 + $0x18] sm:$0xff] %v2975
    // Predicated region
    $region42: #{tpu_custom_call.1} parent=1 // pred_check
      _
    $region43: #{tpu_custom_call.1} parent=1 // pred_check_branch
      %2981 = sbr.rel (0) target = $region45
    $region44: #{tpu_custom_call.1} parent=1 // pred_region
      %s2983 = ssub.s32 512, 512
      %2984 = vsyncadd [#allocation3], %s2983
      %s2986 = sshll.u32 [#allocation2], 4
      %s2987 = int_to_ptr.vmem [resolvable:$true] %s2986
      %2989 = dma.vmem_to_hbm [thread:$0]  %s2987, 512, %s10, [#allocation3]
    $region45: #{tpu_custom_call.1} parent=1 // pred_fallthru
      _
    // Predicated region
    $region46: #{tpu_custom_call.1} parent=1 // pred_check
      _
    $region47: #{tpu_custom_call.1} parent=1 // pred_check_branch
      %2991 = sbr.rel (0) target = $region49
    $region48: #{tpu_custom_call.1} parent=1 // pred_region
      %2992 = dma.done [#allocation3], 512
    $region49: #{tpu_custom_call.1} parent=1 // pred_fallthru
      _
    %2993 = vsyncpa [#allocation3], 1

</llo_original>
